<compile_context>
chip_gen: v7x
topology: tpu7x:2x2x1
jax: 0.10.0
libtpu: 0.0.40
codegen_flags: <defaults>
</compile_context>

<pallas_src>
import jax
import jax.numpy as jnp
from jax.experimental import pallas as pl
from jax.experimental.pallas import tpu as pltpu

# ---------------------------------------------------------------------------
# model dimensions (small synthetic scale)
# ---------------------------------------------------------------------------
T = 8                    # frames in the batch (WORK_MEMORY_LENGTH at toy scale)
C_IN = 3                 # RGB
H = W = 16               # spatial
HW = H * W               # 256
C_STEM = 32              # conv stem channels
C_HEAD = 160             # backbone head feature dim (stand-in for 1280)
AVG_K = 33               # AvgPool1d kernel (stand-in for 257), stride 1
D = C_HEAD - AVG_K + 1   # = 128, transformer model dim
HEADS = 4
HEAD_DIM = D // HEADS    # 32
FFN = 256
NUM_CLASSES = 22
CLS_PAD = 128            # lane-dense classifier output, sliced to 22 outside
K_IM2COL = 9 * C_IN      # 27
K_PAD = 32               # sublane-aligned contraction dim for the stem matmul

# packed transformer weight slab column layout: [wq|wk|wv | wo | w_ff1 | w_cls]
QKV0, QKV1 = 0, 3 * D            # 0   .. 384
WO0, WO1 = 3 * D, 4 * D          # 384 .. 512
FF10, FF11 = 4 * D, 4 * D + FFN  # 512 .. 768
CLS0, CLS1 = FF11, FF11 + CLS_PAD  # 768 .. 896
W_TR_COLS = CLS1

# packed misc-vector slab row layout (width 384, f32)
M_BHEAD, M_BQKV, M_BO = 0, 1, 2
M_LN1G, M_LN1B = 3, 4
M_BFF1, M_BFF2 = 5, 6
M_LN2G, M_LN2B = 7, 8
M_BCLS = 9
MISC_ROWS, MISC_COLS = 10, 3 * D


# ---------------------------------------------------------------------------
# fused kernel: backbone + AvgPool1d + transformer block + classifier
# ---------------------------------------------------------------------------
def _layer_norm(y, g, b):
    mu = jnp.mean(y, axis=-1, keepdims=True)
    var = jnp.mean(jnp.square(y - mu), axis=-1, keepdims=True)
    return (y - mu) * jax.lax.rsqrt(var + 1e-5) * g + b


def _testra_kernel(cols_ref, wstem_ref, whead_ref, pool_ref, pband_ref,
                   wtr_ref, wff2_ref, misc_ref, bdmask_ref, out_ref):
    # ---------------- backbone ----------------
    # 3x3 stem conv as matmul; b_stem rides the MXU accumulation via the
    # constant-1 im2col column / b_stem weight row.  bf16 operands, f32 acc.
    hdn = jnp.dot(cols_ref[...], wstem_ref[...],
                  preferred_element_type=jnp.float32)
    hdn = jnp.maximum(hdn, 0.0)                                   # [T*HW, 32] f32

    # 1x1 head conv as matmul + bias + ReLU
    g = jnp.dot(hdn.astype(jnp.bfloat16), whead_ref[...],
                preferred_element_type=jnp.float32)
    g = jnp.maximum(g + misc_ref[M_BHEAD:M_BHEAD + 1, 0:C_HEAD], 0.0)  # [T*HW,160]

    # global average pool over H*W per frame as a matmul (MXU, bf16 operands)
    gap = jnp.dot(pool_ref[...], g.astype(jnp.bfloat16),
                  preferred_element_type=jnp.float32)             # [T, 160] f32

    # AvgPool1d(kernel=AVG_K, stride=1) over features as ONE banded matmul
    feat = jnp.dot(gap.astype(jnp.bfloat16), pband_ref[...],
                   preferred_element_type=jnp.float32)            # [T, 128] f32

    # ---------------- transformer block (q = k = v = feat) ----------------
    x16 = feat.astype(jnp.bfloat16)

    # fused q/k/v projection: one [T,128] x [128,384] matmul + one bias add
    qkv = jnp.dot(x16, wtr_ref[:, QKV0:QKV1],
                  preferred_element_type=jnp.float32) \
        + misc_ref[M_BQKV:M_BQKV + 1, 0:3 * D]                    # [T, 384]
    q = qkv[:, 0:D]
    k = qkv[:, D:2 * D]
    v = qkv[:, 2 * D:3 * D]

    # flattened-head block-diagonal attention (2-D, no per-head loop / 3-D ops)
    mask = bdmask_ref[...]                                        # [HEADS*T, D]
    q_bd = jnp.concatenate([q, q, q, q], axis=0) * mask           # [HEADS*T, D]
    s = jax.lax.dot_general(q_bd.astype(jnp.bfloat16), k.astype(jnp.bfloat16),
                            (((1,), (1,)), ((), ())),
                            preferred_element_type=jnp.float32)
    s = s * (1.0 / HEAD_DIM ** 0.5)                               # [HEADS*T, T]
    m = jnp.max(s, axis=-1, keepdims=True)
    p = jnp.exp(s - m)
    p = p * pl.reciprocal(jnp.sum(p, axis=-1, keepdims=True), approx=True)
    obd = jnp.dot(p.astype(jnp.bfloat16), v.astype(jnp.bfloat16),
                  preferred_element_type=jnp.float32) * mask      # [HEADS*T, D]
    # fold the HEADS row-blocks back to [T, D]: after the mask exactly one
    # block is nonzero per lane, so 3 vector adds are exact (no fold matmul).
    attn = obd[0:T] + obd[T:2 * T] + obd[2 * T:3 * T] + obd[3 * T:4 * T]

    o = jnp.dot(attn.astype(jnp.bfloat16), wtr_ref[:, WO0:WO1],
                preferred_element_type=jnp.float32) \
        + misc_ref[M_BO:M_BO + 1, 0:D]

    h1 = _layer_norm(feat + o,
                     misc_ref[M_LN1G:M_LN1G + 1, 0:D],
                     misc_ref[M_LN1B:M_LN1B + 1, 0:D])

    f = jnp.dot(h1.astype(jnp.bfloat16), wtr_ref[:, FF10:FF11],
                preferred_element_type=jnp.float32) \
        + misc_ref[M_BFF1:M_BFF1 + 1, 0:FFN]
    f = jnp.maximum(f, 0.0)
    f = jnp.dot(f.astype(jnp.bfloat16), wff2_ref[...],
                preferred_element_type=jnp.float32) \
        + misc_ref[M_BFF2:M_BFF2 + 1, 0:D]

    h2 = _layer_norm(h1 + f,
                     misc_ref[M_LN2G:M_LN2G + 1, 0:D],
                     misc_ref[M_LN2B:M_LN2B + 1, 0:D])

    # classifier with lane-dense (128-wide) padded output; sliced to 22 outside
    out_ref[...] = jnp.dot(h2.astype(jnp.bfloat16), wtr_ref[:, CLS0:CLS1],
                           preferred_element_type=jnp.float32) \
        + misc_ref[M_BCLS:M_BCLS + 1, 0:CLS_PAD]


# ---------------------------------------------------------------------------
# parameters (deterministic)
# ---------------------------------------------------------------------------
def init_params(key):
    ks = jax.random.split(key, 16)

    def w(k, shape, scale):
        return scale * jax.random.normal(k, shape, jnp.float32)

    return {
        "w_stem": w(ks[0], (3, 3, C_IN, C_STEM), 0.1),
        "b_stem": jnp.zeros((C_STEM,), jnp.float32),
        "w_head": w(ks[1], (C_STEM, C_HEAD), 0.1),
        "b_head": jnp.zeros((C_HEAD,), jnp.float32),
        "wq": w(ks[2], (D, D), 0.05), "bq": jnp.zeros((D,), jnp.float32),
        "wk": w(ks[3], (D, D), 0.05), "bk": jnp.zeros((D,), jnp.float32),
        "wv": w(ks[4], (D, D), 0.05), "bv": jnp.zeros((D,), jnp.float32),
        "wo": w(ks[5], (D, D), 0.05), "bo": jnp.zeros((D,), jnp.float32),
        "ln1_g": jnp.ones((D,), jnp.float32), "ln1_b": jnp.zeros((D,), jnp.float32),
        "w_ff1": w(ks[6], (D, FFN), 0.05), "b_ff1": jnp.zeros((FFN,), jnp.float32),
        "w_ff2": w(ks[7], (FFN, D), 0.05), "b_ff2": jnp.zeros((D,), jnp.float32),
        "ln2_g": jnp.ones((D,), jnp.float32), "ln2_b": jnp.zeros((D,), jnp.float32),
        "w_cls": w(ks[8], (D, NUM_CLASSES), 0.05),
        "b_cls": jnp.zeros((NUM_CLASSES,), jnp.float32),
    }


def pack_params(p):
    """Convert logical params into kernel-ready slabs (bf16 weights, padding)."""
    # stem weights: (3,3,Cin,Cstem) -> (27, Cstem); row 27 = b_stem (bias fold),
    # rows 28..31 zero so the contraction dim is 32.
    w_stem = p["w_stem"].reshape(K_IM2COL, C_STEM)
    w_stem = jnp.concatenate(
        [w_stem, p["b_stem"][None, :],
         jnp.zeros((K_PAD - K_IM2COL - 1, C_STEM), jnp.float32)], axis=0)

    # spatial-mean matrix: pool[t, n] = 1/HW iff n // HW == t   (1/256 exact bf16)
    pool = (jnp.arange(T)[:, None] == (jnp.arange(T * HW)[None, :] // HW))
    pool = pool.astype(jnp.float32) / HW

    # banded averaging matrix for AvgPool1d(kernel=AVG_K, stride=1)
    rows = jnp.arange(C_HEAD)[:, None]
    colj = jnp.arange(D)[None, :]
    p_band = ((rows >= colj) & (rows < colj + AVG_K)).astype(jnp.float32) / AVG_K

    # block-diagonal head mask: mask[h*T+t, d] = 1 iff d // HEAD_DIM == h
    bd_mask = ((jnp.arange(HEADS * T)[:, None] // T)
               == (jnp.arange(D)[None, :] // HEAD_DIM)).astype(jnp.float32)

    # transformer weight slab [D, 896] bf16: [wq|wk|wv | wo | w_ff1 | w_cls_pad]
    w_cls = jnp.pad(p["w_cls"], ((0, 0), (0, CLS_PAD - NUM_CLASSES)))
    w_tr = jnp.concatenate(
        [p["wq"], p["wk"], p["wv"], p["wo"], p["w_ff1"], w_cls], axis=1)

    # misc vector slab [10, 384] f32: biases / LayerNorm params packed by row
    def row(v):
        return jnp.pad(v, (0, MISC_COLS - v.shape[0]))[None, :]

    misc = jnp.concatenate([
        row(p["b_head"]),
        row(jnp.concatenate([p["bq"], p["bk"], p["bv"]])),
        row(p["bo"]), row(p["ln1_g"]), row(p["ln1_b"]),
        row(p["b_ff1"]), row(p["b_ff2"]), row(p["ln2_g"]), row(p["ln2_b"]),
        row(jnp.pad(p["b_cls"], (0, CLS_PAD - NUM_CLASSES))),
    ], axis=0)

    return {
        "w_stem": w_stem.astype(jnp.bfloat16),
        "w_head": p["w_head"].astype(jnp.bfloat16),
        "pool": pool.astype(jnp.bfloat16),
        "p_band": p_band.astype(jnp.bfloat16),
        "w_tr": w_tr.astype(jnp.bfloat16),
        "w_ff2": p["w_ff2"].astype(jnp.bfloat16),
        "misc": misc.astype(jnp.float32),
        "bd_mask": bd_mask,
    }


# ---------------------------------------------------------------------------
# forward pass
# ---------------------------------------------------------------------------
@jax.jit
def testra_forward(kp, x_nchw):
    t, _, h, w_ = x_nchw.shape
    x = jnp.transpose(x_nchw, (0, 2, 3, 1))                      # NCHW -> NHWC

    # im2col for the 3x3 stem conv (plain-JAX glue; fuses under jit).
    # Column 27 is a constant 1 so b_stem rides the stem matmul for free;
    # columns 28..31 are zero padding to K_PAD=32.
    xp = jnp.pad(x, ((0, 0), (1, 1), (1, 1), (0, 0)))
    patches = jnp.concatenate(
        [xp[:, di:di + h, dj:dj + w_, :] for di in range(3) for dj in range(3)],
        axis=-1).reshape(t * h * w_, K_IM2COL)
    cols = jnp.concatenate(
        [patches,
         jnp.ones((t * h * w_, 1), jnp.float32),
         jnp.zeros((t * h * w_, K_PAD - K_IM2COL - 1), jnp.float32)],
        axis=-1).astype(jnp.bfloat16)                             # [T*HW, 32]

    # single fused, grid-less pallas_call: everything lives in VMEM; `feat`
    # never round-trips to HBM and there is only one kernel dispatch.
    vmem = pl.BlockSpec(memory_space=pltpu.MemorySpace.VMEM)
    logits_pad = pl.pallas_call(
        _testra_kernel,
        out_shape=jax.ShapeDtypeStruct((t, CLS_PAD), jnp.float32),
        in_specs=[vmem] * 9,
        out_specs=vmem,
    )(cols, kp["w_stem"], kp["w_head"], kp["pool"], kp["p_band"],
      kp["w_tr"], kp["w_ff2"], kp["misc"], kp["bd_mask"])

    # slice padded 128-lane classifier output to 22 classes; unsqueeze(0)
    return logits_pad[:, :NUM_CLASSES][None]                      # [1, T, 22]


# ---------------------------------------------------------------------------
if __name__ == "__main__":
    key = jax.random.PRNGKey(0)
    k_param, k_data = jax.random.split(key)
    params = init_params(k_param)
    kparams = pack_params(params)
    x = jax.random.normal(k_data, (T, C_IN, H, W), jnp.float32)   # NCHW frames

    out = testra_forward(kparams, x)
    out = jax.block_until_ready(out)
    assert out.shape == (1, T, NUM_CLASSES), out.shape
    assert jnp.isfinite(out).all()
    print("KERNEL_OK")
</pallas_src>

<mosaic_0001>
module attributes {stable_mosaic.version = 11 : i64} {
  func.func @_testra_kernel(%arg0: memref<2048x32xbf16, #tpu.memory_space<vmem>>, %arg1: memref<32x32xbf16, #tpu.memory_space<vmem>>, %arg2: memref<32x160xbf16, #tpu.memory_space<vmem>>, %arg3: memref<8x2048xbf16, #tpu.memory_space<vmem>>, %arg4: memref<160x128xbf16, #tpu.memory_space<vmem>>, %arg5: memref<128x896xbf16, #tpu.memory_space<vmem>>, %arg6: memref<256x128xbf16, #tpu.memory_space<vmem>>, %arg7: memref<10x384xf32, #tpu.memory_space<vmem>>, %arg8: memref<32x128xf32, #tpu.memory_space<vmem>>, %arg9: memref<8x128xf32, #tpu.memory_space<vmem>>) attributes {dimension_semantics = [], scalar_prefetch = 0 : i64, scratch_operands = 0 : i64, tpu.core_type = #tpu.core_type<tc>} {
    %c0 = arith.constant 0 : index
    %c0_0 = arith.constant 0 : index
    %0 = vector.load %arg0[%c0, %c0_0] : memref<2048x32xbf16, #tpu.memory_space<vmem>>, vector<2048x32xbf16>
    %c0_1 = arith.constant 0 : index
    %c0_2 = arith.constant 0 : index
    %1 = vector.load %arg1[%c0_1, %c0_2] : memref<32x32xbf16, #tpu.memory_space<vmem>>, vector<32x32xbf16>
    %cst = arith.constant dense<0.000000e+00> : vector<2048x32xf32>
    %2 = tpu.matmul %0, %1, %cst {dimension_numbers = #tpu.dot_dimension_numbers<[1], [0], [0], [1], [0, 0, 1, 1], [], []>} : vector<2048x32xbf16>, vector<32x32xbf16>, vector<2048x32xf32> -> vector<2048x32xf32>
    %cst_3 = arith.constant 0.000000e+00 : f32
    %3 = vector.broadcast %cst_3 : f32 to vector<2048x32xf32>
    %4 = arith.maximumf %2, %3 : vector<2048x32xf32>
    %5 = arith.truncf %4 : vector<2048x32xf32> to vector<2048x32xbf16>
    %c0_4 = arith.constant 0 : index
    %c0_5 = arith.constant 0 : index
    %6 = vector.load %arg2[%c0_4, %c0_5] : memref<32x160xbf16, #tpu.memory_space<vmem>>, vector<32x160xbf16>
    %cst_6 = arith.constant dense<0.000000e+00> : vector<2048x160xf32>
    %7 = tpu.matmul %5, %6, %cst_6 {dimension_numbers = #tpu.dot_dimension_numbers<[1], [0], [0], [1], [0, 0, 1, 1], [], []>} : vector<2048x32xbf16>, vector<32x160xbf16>, vector<2048x160xf32> -> vector<2048x160xf32>
    %c0_7 = arith.constant 0 : index
    %c0_8 = arith.constant 0 : index
    %8 = vector.load %arg7[%c0_7, %c0_8] : memref<10x384xf32, #tpu.memory_space<vmem>>, vector<1x160xf32>
    %9 = vector.broadcast %8 : vector<1x160xf32> to vector<2048x160xf32>
    %10 = arith.addf %7, %9 : vector<2048x160xf32>
    %cst_9 = arith.constant 0.000000e+00 : f32
    %11 = vector.broadcast %cst_9 : f32 to vector<2048x160xf32>
    %12 = arith.maximumf %10, %11 : vector<2048x160xf32>
    %c0_10 = arith.constant 0 : index
    %c0_11 = arith.constant 0 : index
    %13 = vector.load %arg3[%c0_10, %c0_11] : memref<8x2048xbf16, #tpu.memory_space<vmem>>, vector<8x2048xbf16>
    %14 = arith.truncf %12 : vector<2048x160xf32> to vector<2048x160xbf16>
    %cst_12 = arith.constant dense<0.000000e+00> : vector<8x160xf32>
    %15 = tpu.matmul %13, %14, %cst_12 {dimension_numbers = #tpu.dot_dimension_numbers<[1], [0], [0], [1], [0, 0, 1, 1], [], []>} : vector<8x2048xbf16>, vector<2048x160xbf16>, vector<8x160xf32> -> vector<8x160xf32>
    %16 = arith.truncf %15 : vector<8x160xf32> to vector<8x160xbf16>
    %c0_13 = arith.constant 0 : index
    %c0_14 = arith.constant 0 : index
    %17 = vector.load %arg4[%c0_13, %c0_14] : memref<160x128xbf16, #tpu.memory_space<vmem>>, vector<160x128xbf16>
    %cst_15 = arith.constant dense<0.000000e+00> : vector<8x128xf32>
    %18 = tpu.matmul %16, %17, %cst_15 {dimension_numbers = #tpu.dot_dimension_numbers<[1], [0], [0], [1], [0, 0, 1, 1], [], []>} : vector<8x160xbf16>, vector<160x128xbf16>, vector<8x128xf32> -> vector<8x128xf32>
    %19 = arith.truncf %18 : vector<8x128xf32> to vector<8x128xbf16>
    %c0_16 = arith.constant 0 : index
    %c0_17 = arith.constant 0 : index
    %20 = vector.load %arg5[%c0_16, %c0_17] : memref<128x896xbf16, #tpu.memory_space<vmem>>, vector<128x384xbf16>
    %cst_18 = arith.constant dense<0.000000e+00> : vector<8x384xf32>
    %21 = tpu.matmul %19, %20, %cst_18 {dimension_numbers = #tpu.dot_dimension_numbers<[1], [0], [0], [1], [0, 0, 1, 1], [], []>} : vector<8x128xbf16>, vector<128x384xbf16>, vector<8x384xf32> -> vector<8x384xf32>
    %c1 = arith.constant 1 : index
    %c0_19 = arith.constant 0 : index
    %22 = vector.load %arg7[%c1, %c0_19] : memref<10x384xf32, #tpu.memory_space<vmem>>, vector<1x384xf32>
    %23 = vector.broadcast %22 : vector<1x384xf32> to vector<8x384xf32>
    %24 = arith.addf %21, %23 : vector<8x384xf32>
    %25 = vector.extract_strided_slice %24 {offsets = [0, 0], sizes = [8, 128], strides = [1, 1]} : vector<8x384xf32> to vector<8x128xf32>
    %26 = vector.extract_strided_slice %24 {offsets = [0, 128], sizes = [8, 128], strides = [1, 1]} : vector<8x384xf32> to vector<8x128xf32>
    %27 = vector.extract_strided_slice %24 {offsets = [0, 256], sizes = [8, 128], strides = [1, 1]} : vector<8x384xf32> to vector<8x128xf32>
    %c0_20 = arith.constant 0 : index
    %c0_21 = arith.constant 0 : index
    %28 = vector.load %arg8[%c0_20, %c0_21] : memref<32x128xf32, #tpu.memory_space<vmem>>, vector<32x128xf32>
    %29 = tpu.concatenate %25, %25, %25, %25 in 0 : vector<8x128xf32>, vector<8x128xf32>, vector<8x128xf32>, vector<8x128xf32> -> vector<32x128xf32>
    %30 = arith.mulf %29, %28 : vector<32x128xf32>
    %31 = arith.truncf %30 : vector<32x128xf32> to vector<32x128xbf16>
    %32 = arith.truncf %26 : vector<8x128xf32> to vector<8x128xbf16>
    %cst_22 = arith.constant dense<0.000000e+00> : vector<32x8xf32>
    %33 = tpu.matmul %31, %32, %cst_22 {dimension_numbers = #tpu.dot_dimension_numbers<[1], [1], [0], [0], [0, 0, 1, 0], [], []>} : vector<32x128xbf16>, vector<8x128xbf16>, vector<32x8xf32> -> vector<32x8xf32>
    %cst_23 = arith.constant 0.176776692 : f32
    %34 = vector.broadcast %cst_23 : f32 to vector<32x8xf32>
    %35 = arith.mulf %33, %34 : vector<32x8xf32>
    %cst_24 = arith.constant dense<0xFF800000> : vector<32xf32>
    %36 = vector.multi_reduction <maximumf>, %35, %cst_24 [1] : vector<32x8xf32> to vector<32xf32>
    %37 = vector.shape_cast %36 : vector<32xf32> to vector<32x1xf32>
    %38 = vector.broadcast %37 : vector<32x1xf32> to vector<32x8xf32>
    %39 = arith.subf %35, %38 : vector<32x8xf32>
    %40 = math.exp %39 : vector<32x8xf32>
    %cst_25 = arith.constant dense<0.000000e+00> : vector<32xf32>
    %41 = vector.multi_reduction <add>, %40, %cst_25 [1] : vector<32x8xf32> to vector<32xf32>
    %42 = vector.shape_cast %41 : vector<32xf32> to vector<32x1xf32>
    %43 = tpu.reciprocal %42 {approx = true} : vector<32x1xf32> -> vector<32x1xf32>
    %44 = vector.broadcast %43 : vector<32x1xf32> to vector<32x8xf32>
    %45 = arith.mulf %40, %44 : vector<32x8xf32>
    %46 = arith.truncf %45 : vector<32x8xf32> to vector<32x8xbf16>
    %47 = arith.truncf %27 : vector<8x128xf32> to vector<8x128xbf16>
    %cst_26 = arith.constant dense<0.000000e+00> : vector<32x128xf32>
    %48 = tpu.matmul %46, %47, %cst_26 {dimension_numbers = #tpu.dot_dimension_numbers<[1], [0], [0], [1], [0, 0, 1, 1], [], []>} : vector<32x8xbf16>, vector<8x128xbf16>, vector<32x128xf32> -> vector<32x128xf32>
    %49 = arith.mulf %48, %28 : vector<32x128xf32>
    %50 = vector.extract_strided_slice %49 {offsets = [0, 0], sizes = [8, 128], strides = [1, 1]} : vector<32x128xf32> to vector<8x128xf32>
    %51 = vector.extract_strided_slice %49 {offsets = [8, 0], sizes = [8, 128], strides = [1, 1]} : vector<32x128xf32> to vector<8x128xf32>
    %52 = arith.addf %50, %51 : vector<8x128xf32>
    %53 = vector.extract_strided_slice %49 {offsets = [16, 0], sizes = [8, 128], strides = [1, 1]} : vector<32x128xf32> to vector<8x128xf32>
    %54 = arith.addf %52, %53 : vector<8x128xf32>
    %55 = vector.extract_strided_slice %49 {offsets = [24, 0], sizes = [8, 128], strides = [1, 1]} : vector<32x128xf32> to vector<8x128xf32>
    %56 = arith.addf %54, %55 : vector<8x128xf32>
    %57 = arith.truncf %56 : vector<8x128xf32> to vector<8x128xbf16>
    %c0_27 = arith.constant 0 : index
    %c384 = arith.constant 384 : index
    %58 = vector.load %arg5[%c0_27, %c384] : memref<128x896xbf16, #tpu.memory_space<vmem>>, vector<128x128xbf16>
    %cst_28 = arith.constant dense<0.000000e+00> : vector<8x128xf32>
    %59 = tpu.matmul %57, %58, %cst_28 {dimension_numbers = #tpu.dot_dimension_numbers<[1], [0], [0], [1], [0, 0, 1, 1], [], []>} : vector<8x128xbf16>, vector<128x128xbf16>, vector<8x128xf32> -> vector<8x128xf32>
    %c2 = arith.constant 2 : index
    %c0_29 = arith.constant 0 : index
    %60 = vector.load %arg7[%c2, %c0_29] : memref<10x384xf32, #tpu.memory_space<vmem>>, vector<1x128xf32>
    %61 = vector.broadcast %60 : vector<1x128xf32> to vector<8x128xf32>
    %62 = arith.addf %59, %61 : vector<8x128xf32>
    %63 = arith.addf %18, %62 : vector<8x128xf32>
    %c3 = arith.constant 3 : index
    %c0_30 = arith.constant 0 : index
    %64 = vector.load %arg7[%c3, %c0_30] : memref<10x384xf32, #tpu.memory_space<vmem>>, vector<1x128xf32>
    %c4 = arith.constant 4 : index
    %c0_31 = arith.constant 0 : index
    %65 = vector.load %arg7[%c4, %c0_31] : memref<10x384xf32, #tpu.memory_space<vmem>>, vector<1x128xf32>
    %cst_32 = arith.constant dense<0.000000e+00> : vector<8xf32>
    %66 = vector.multi_reduction <add>, %63, %cst_32 [1] : vector<8x128xf32> to vector<8xf32>
    %67 = vector.shape_cast %66 : vector<8xf32> to vector<8x1xf32>
    %cst_33 = arith.constant 1.280000e+02 : f32
    %68 = vector.broadcast %cst_33 : f32 to vector<8x1xf32>
    %69 = arith.divf %67, %68 : vector<8x1xf32>
    %70 = vector.broadcast %69 : vector<8x1xf32> to vector<8x128xf32>
    %71 = arith.subf %63, %70 : vector<8x128xf32>
    %72 = arith.mulf %71, %71 : vector<8x128xf32>
    %cst_34 = arith.constant dense<0.000000e+00> : vector<8xf32>
    %73 = vector.multi_reduction <add>, %72, %cst_34 [1] : vector<8x128xf32> to vector<8xf32>
    %74 = vector.shape_cast %73 : vector<8xf32> to vector<8x1xf32>
    %cst_35 = arith.constant 1.280000e+02 : f32
    %75 = vector.broadcast %cst_35 : f32 to vector<8x1xf32>
    %76 = arith.divf %74, %75 : vector<8x1xf32>
    %77 = vector.broadcast %69 : vector<8x1xf32> to vector<8x128xf32>
    %78 = arith.subf %63, %77 : vector<8x128xf32>
    %cst_36 = arith.constant 9.99999974E-6 : f32
    %79 = vector.broadcast %cst_36 : f32 to vector<8x1xf32>
    %80 = arith.addf %76, %79 : vector<8x1xf32>
    %81 = math.rsqrt %80 : vector<8x1xf32>
    %82 = vector.broadcast %81 : vector<8x1xf32> to vector<8x128xf32>
    %83 = arith.mulf %78, %82 : vector<8x128xf32>
    %84 = vector.broadcast %64 : vector<1x128xf32> to vector<8x128xf32>
    %85 = arith.mulf %83, %84 : vector<8x128xf32>
    %86 = vector.broadcast %65 : vector<1x128xf32> to vector<8x128xf32>
    %87 = arith.addf %85, %86 : vector<8x128xf32>
    %88 = arith.truncf %87 : vector<8x128xf32> to vector<8x128xbf16>
    %c0_37 = arith.constant 0 : index
    %c512 = arith.constant 512 : index
    %89 = vector.load %arg5[%c0_37, %c512] : memref<128x896xbf16, #tpu.memory_space<vmem>>, vector<128x256xbf16>
    %cst_38 = arith.constant dense<0.000000e+00> : vector<8x256xf32>
    %90 = tpu.matmul %88, %89, %cst_38 {dimension_numbers = #tpu.dot_dimension_numbers<[1], [0], [0], [1], [0, 0, 1, 1], [], []>} : vector<8x128xbf16>, vector<128x256xbf16>, vector<8x256xf32> -> vector<8x256xf32>
    %c5 = arith.constant 5 : index
    %c0_39 = arith.constant 0 : index
    %91 = vector.load %arg7[%c5, %c0_39] : memref<10x384xf32, #tpu.memory_space<vmem>>, vector<1x256xf32>
    %92 = vector.broadcast %91 : vector<1x256xf32> to vector<8x256xf32>
    %93 = arith.addf %90, %92 : vector<8x256xf32>
    %cst_40 = arith.constant 0.000000e+00 : f32
    %94 = vector.broadcast %cst_40 : f32 to vector<8x256xf32>
    %95 = arith.maximumf %93, %94 : vector<8x256xf32>
    %96 = arith.truncf %95 : vector<8x256xf32> to vector<8x256xbf16>
    %c0_41 = arith.constant 0 : index
    %c0_42 = arith.constant 0 : index
    %97 = vector.load %arg6[%c0_41, %c0_42] : memref<256x128xbf16, #tpu.memory_space<vmem>>, vector<256x128xbf16>
    %cst_43 = arith.constant dense<0.000000e+00> : vector<8x128xf32>
    %98 = tpu.matmul %96, %97, %cst_43 {dimension_numbers = #tpu.dot_dimension_numbers<[1], [0], [0], [1], [0, 0, 1, 1], [], []>} : vector<8x256xbf16>, vector<256x128xbf16>, vector<8x128xf32> -> vector<8x128xf32>
    %c6 = arith.constant 6 : index
    %c0_44 = arith.constant 0 : index
    %99 = vector.load %arg7[%c6, %c0_44] : memref<10x384xf32, #tpu.memory_space<vmem>>, vector<1x128xf32>
    %100 = vector.broadcast %99 : vector<1x128xf32> to vector<8x128xf32>
    %101 = arith.addf %98, %100 : vector<8x128xf32>
    %102 = arith.addf %87, %101 : vector<8x128xf32>
    %c7 = arith.constant 7 : index
    %c0_45 = arith.constant 0 : index
    %103 = vector.load %arg7[%c7, %c0_45] : memref<10x384xf32, #tpu.memory_space<vmem>>, vector<1x128xf32>
    %c8 = arith.constant 8 : index
    %c0_46 = arith.constant 0 : index
    %104 = vector.load %arg7[%c8, %c0_46] : memref<10x384xf32, #tpu.memory_space<vmem>>, vector<1x128xf32>
    %cst_47 = arith.constant dense<0.000000e+00> : vector<8xf32>
    %105 = vector.multi_reduction <add>, %102, %cst_47 [1] : vector<8x128xf32> to vector<8xf32>
    %106 = vector.shape_cast %105 : vector<8xf32> to vector<8x1xf32>
    %cst_48 = arith.constant 1.280000e+02 : f32
    %107 = vector.broadcast %cst_48 : f32 to vector<8x1xf32>
    %108 = arith.divf %106, %107 : vector<8x1xf32>
    %109 = vector.broadcast %108 : vector<8x1xf32> to vector<8x128xf32>
    %110 = arith.subf %102, %109 : vector<8x128xf32>
    %111 = arith.mulf %110, %110 : vector<8x128xf32>
    %cst_49 = arith.constant dense<0.000000e+00> : vector<8xf32>
    %112 = vector.multi_reduction <add>, %111, %cst_49 [1] : vector<8x128xf32> to vector<8xf32>
    %113 = vector.shape_cast %112 : vector<8xf32> to vector<8x1xf32>
    %cst_50 = arith.constant 1.280000e+02 : f32
    %114 = vector.broadcast %cst_50 : f32 to vector<8x1xf32>
    %115 = arith.divf %113, %114 : vector<8x1xf32>
    %116 = vector.broadcast %108 : vector<8x1xf32> to vector<8x128xf32>
    %117 = arith.subf %102, %116 : vector<8x128xf32>
    %cst_51 = arith.constant 9.99999974E-6 : f32
    %118 = vector.broadcast %cst_51 : f32 to vector<8x1xf32>
    %119 = arith.addf %115, %118 : vector<8x1xf32>
    %120 = math.rsqrt %119 : vector<8x1xf32>
    %121 = vector.broadcast %120 : vector<8x1xf32> to vector<8x128xf32>
    %122 = arith.mulf %117, %121 : vector<8x128xf32>
    %123 = vector.broadcast %103 : vector<1x128xf32> to vector<8x128xf32>
    %124 = arith.mulf %122, %123 : vector<8x128xf32>
    %125 = vector.broadcast %104 : vector<1x128xf32> to vector<8x128xf32>
    %126 = arith.addf %124, %125 : vector<8x128xf32>
    %127 = arith.truncf %126 : vector<8x128xf32> to vector<8x128xbf16>
    %c0_52 = arith.constant 0 : index
    %c768 = arith.constant 768 : index
    %128 = vector.load %arg5[%c0_52, %c768] : memref<128x896xbf16, #tpu.memory_space<vmem>>, vector<128x128xbf16>
    %cst_53 = arith.constant dense<0.000000e+00> : vector<8x128xf32>
    %129 = tpu.matmul %127, %128, %cst_53 {dimension_numbers = #tpu.dot_dimension_numbers<[1], [0], [0], [1], [0, 0, 1, 1], [], []>} : vector<8x128xbf16>, vector<128x128xbf16>, vector<8x128xf32> -> vector<8x128xf32>
    %c9 = arith.constant 9 : index
    %c0_54 = arith.constant 0 : index
    %130 = vector.load %arg7[%c9, %c0_54] : memref<10x384xf32, #tpu.memory_space<vmem>>, vector<1x128xf32>
    %131 = vector.broadcast %130 : vector<1x128xf32> to vector<8x128xf32>
    %132 = arith.addf %129, %131 : vector<8x128xf32>
    %c0_55 = arith.constant 0 : index
    %c0_56 = arith.constant 0 : index
    %133 = vector.load %arg9[%c0_55, %c0_56] : memref<8x128xf32, #tpu.memory_space<vmem>>, vector<8x128xf32>
    tpu.vector_store %arg9[%c0_55, %c0_56], %132 {strides = array<i32>} : memref<8x128xf32, #tpu.memory_space<vmem>>, vector<8x128xf32>,
    return
  }
}

</mosaic_0001>

<llo_original>
// kernel: testra_forward.1
$region0: #{testra_forward.1}
  #allocation0 [shape = 'u32[]', space=smem, size = 0x4, offset = 0x4, fixed_abs, tag = 'smem constant byte address 0x4 - core index']
  #allocation1 [shape = 'u32[144,128]{1,0:T(1,128)}', space=vmem, size = 0x12000, scoped, tag = 'internal scratch']
  %s0 = inlined_call_operand.vmem [shape: bf16[2048,32], index: 0, kind: input, shape index: {}]
  %s1 = inlined_call_operand.vmem [shape: bf16[32,32], index: 1, kind: input, shape index: {}]
  %s2 = inlined_call_operand.vmem [shape: bf16[32,160], index: 2, kind: input, shape index: {}]
  %s3 = inlined_call_operand.vmem [shape: bf16[8,2048], index: 3, kind: input, shape index: {}]
  %s4 = inlined_call_operand.vmem [shape: bf16[160,128], index: 4, kind: input, shape index: {}]
  %s5 = inlined_call_operand.vmem [shape: bf16[128,896], index: 5, kind: input, shape index: {}]
  %s6 = inlined_call_operand.vmem [shape: bf16[256,128], index: 6, kind: input, shape index: {}]
  %s7 = inlined_call_operand.vmem [shape: f32[10,384], index: 7, kind: input, shape index: {}]
  %s8 = inlined_call_operand.vmem [shape: f32[32,128], index: 8, kind: input, shape index: {}]
  %s9 = inlined_call_operand.vmem [shape: f32[8,128], index: 9, kind: output, shape index: {}]
  %s10 = sld [smem:[#allocation0]]
  $region46: #{testra_forward.1} parent=0
    _
  %s12 = ssub.s32 1, %s10
  %s13 = scalar_select 0, %s12, %s10
  // Predicated region
  $region2: #{testra_forward.1} parent=0 // pred_check
    _
  $region3: #{testra_forward.1} parent=0 // pred_check_branch
    %15 = sbr.rel (0) target = $region5
  $region4: #{testra_forward.1} parent=0 // pred_region
    _
  $region5: #{testra_forward.1} parent=0 // pred_fallthru
    _
  // Predicated region
  $region6: #{testra_forward.1} parent=0 // pred_check
    _
  $region7: #{testra_forward.1} parent=0 // pred_check_branch
    %17 = sbr.rel (0) target = $region9
  $region8: #{testra_forward.1} parent=0 // pred_region
    _
  $region9: #{testra_forward.1} parent=0 // pred_fallthru
    _
  // Predicated region
  $region10: #{testra_forward.1} parent=0 // pred_check
    _
  $region11: #{testra_forward.1} parent=0 // pred_check_branch
    %19 = sbr.rel (0) target = $region13
  $region12: #{testra_forward.1} parent=0 // pred_region
    _
  $region13: #{testra_forward.1} parent=0 // pred_fallthru
    _
  // Predicated region
  $region14: #{testra_forward.1} parent=0 // pred_check
    _
  $region15: #{testra_forward.1} parent=0 // pred_check_branch
    %21 = sbr.rel (0) target = $region17
  $region16: #{testra_forward.1} parent=0 // pred_region
    _
  $region17: #{testra_forward.1} parent=0 // pred_fallthru
    _
  // Predicated region
  $region18: #{testra_forward.1} parent=0 // pred_check
    _
  $region19: #{testra_forward.1} parent=0 // pred_check_branch
    %23 = sbr.rel (0) target = $region21
  $region20: #{testra_forward.1} parent=0 // pred_region
    _
  $region21: #{testra_forward.1} parent=0 // pred_fallthru
    _
  // Predicated region
  $region22: #{testra_forward.1} parent=0 // pred_check
    _
  $region23: #{testra_forward.1} parent=0 // pred_check_branch
    %25 = sbr.rel (0) target = $region25
  $region24: #{testra_forward.1} parent=0 // pred_region
    _
  $region25: #{testra_forward.1} parent=0 // pred_fallthru
    _
  // Predicated region
  $region26: #{testra_forward.1} parent=0 // pred_check
    _
  $region27: #{testra_forward.1} parent=0 // pred_check_branch
    %27 = sbr.rel (0) target = $region29
  $region28: #{testra_forward.1} parent=0 // pred_region
    _
  $region29: #{testra_forward.1} parent=0 // pred_fallthru
    _
  // Predicated region
  $region30: #{testra_forward.1} parent=0 // pred_check
    _
  $region31: #{testra_forward.1} parent=0 // pred_check_branch
    %29 = sbr.rel (0) target = $region33
  $region32: #{testra_forward.1} parent=0 // pred_region
    _
  $region33: #{testra_forward.1} parent=0 // pred_fallthru
    _
  // Predicated region
  $region34: #{testra_forward.1} parent=0 // pred_check
    _
  $region35: #{testra_forward.1} parent=0 // pred_check_branch
    %31 = sbr.rel (0) target = $region37
  $region36: #{testra_forward.1} parent=0 // pred_region
    _
  $region37: #{testra_forward.1} parent=0 // pred_fallthru
    _
  %v33 = vld [vmem:[%s0] sm:$0xf]
  %v34 = vld [vmem:[%s0 + $0x4] sm:$0xf]
  %v35 = vld [vmem:[%s0 + $0x8] sm:$0xf]
  %v36 = vld [vmem:[%s0 + $0xc] sm:$0xf]
  %v37 = vld [vmem:[%s0 + $0x10] sm:$0xf]
  %v38 = vld [vmem:[%s0 + $0x14] sm:$0xf]
  %v39 = vld [vmem:[%s0 + $0x18] sm:$0xf]
  %v40 = vld [vmem:[%s0 + $0x1c] sm:$0xf]
  %v41 = vld [vmem:[%s0 + $0x20] sm:$0xf]
  %v42 = vld [vmem:[%s0 + $0x24] sm:$0xf]
  %v43 = vld [vmem:[%s0 + $0x28] sm:$0xf]
  %v44 = vld [vmem:[%s0 + $0x2c] sm:$0xf]
  %v45 = vld [vmem:[%s0 + $0x30] sm:$0xf]
  %v46 = vld [vmem:[%s0 + $0x34] sm:$0xf]
  %v47 = vld [vmem:[%s0 + $0x38] sm:$0xf]
  %v48 = vld [vmem:[%s0 + $0x3c] sm:$0xf]
  %v49 = vld [vmem:[%s0 + $0x40] sm:$0xf]
  %v50 = vld [vmem:[%s0 + $0x44] sm:$0xf]
  %v51 = vld [vmem:[%s0 + $0x48] sm:$0xf]
  %v52 = vld [vmem:[%s0 + $0x4c] sm:$0xf]
  %v53 = vld [vmem:[%s0 + $0x50] sm:$0xf]
  %v54 = vld [vmem:[%s0 + $0x54] sm:$0xf]
  %v55 = vld [vmem:[%s0 + $0x58] sm:$0xf]
  %v56 = vld [vmem:[%s0 + $0x5c] sm:$0xf]
  %v57 = vld [vmem:[%s0 + $0x60] sm:$0xf]
  %v58 = vld [vmem:[%s0 + $0x64] sm:$0xf]
  %v59 = vld [vmem:[%s0 + $0x68] sm:$0xf]
  %v60 = vld [vmem:[%s0 + $0x6c] sm:$0xf]
  %v61 = vld [vmem:[%s0 + $0x70] sm:$0xf]
  %v62 = vld [vmem:[%s0 + $0x74] sm:$0xf]
  %v63 = vld [vmem:[%s0 + $0x78] sm:$0xf]
  %v64 = vld [vmem:[%s0 + $0x7c] sm:$0xf]
  %v65 = vld [vmem:[%s0 + $0x80] sm:$0xf]
  %v66 = vld [vmem:[%s0 + $0x84] sm:$0xf]
  %v67 = vld [vmem:[%s0 + $0x88] sm:$0xf]
  %v68 = vld [vmem:[%s0 + $0x8c] sm:$0xf]
  %v69 = vld [vmem:[%s0 + $0x90] sm:$0xf]
  %v70 = vld [vmem:[%s0 + $0x94] sm:$0xf]
  %v71 = vld [vmem:[%s0 + $0x98] sm:$0xf]
  %v72 = vld [vmem:[%s0 + $0x9c] sm:$0xf]
  %v73 = vld [vmem:[%s0 + $0xa0] sm:$0xf]
  %v74 = vld [vmem:[%s0 + $0xa4] sm:$0xf]
  %v75 = vld [vmem:[%s0 + $0xa8] sm:$0xf]
  %v76 = vld [vmem:[%s0 + $0xac] sm:$0xf]
  %v77 = vld [vmem:[%s0 + $0xb0] sm:$0xf]
  %v78 = vld [vmem:[%s0 + $0xb4] sm:$0xf]
  %v79 = vld [vmem:[%s0 + $0xb8] sm:$0xf]
  %v80 = vld [vmem:[%s0 + $0xbc] sm:$0xf]
  %v81 = vld [vmem:[%s0 + $0xc0] sm:$0xf]
  %v82 = vld [vmem:[%s0 + $0xc4] sm:$0xf]
  %v83 = vld [vmem:[%s0 + $0xc8] sm:$0xf]
  %v84 = vld [vmem:[%s0 + $0xcc] sm:$0xf]
  %v85 = vld [vmem:[%s0 + $0xd0] sm:$0xf]
  %v86 = vld [vmem:[%s0 + $0xd4] sm:$0xf]
  %v87 = vld [vmem:[%s0 + $0xd8] sm:$0xf]
  %v88 = vld [vmem:[%s0 + $0xdc] sm:$0xf]
  %v89 = vld [vmem:[%s0 + $0xe0] sm:$0xf]
  %v90 = vld [vmem:[%s0 + $0xe4] sm:$0xf]
  %v91 = vld [vmem:[%s0 + $0xe8] sm:$0xf]
  %v92 = vld [vmem:[%s0 + $0xec] sm:$0xf]
  %v93 = vld [vmem:[%s0 + $0xf0] sm:$0xf]
  %v94 = vld [vmem:[%s0 + $0xf4] sm:$0xf]
  %v95 = vld [vmem:[%s0 + $0xf8] sm:$0xf]
  %v96 = vld [vmem:[%s0 + $0xfc] sm:$0xf]
  %v97 = vld [vmem:[%s0 + $0x100] sm:$0xf]
  %v98 = vld [vmem:[%s0 + $0x104] sm:$0xf]
  %v99 = vld [vmem:[%s0 + $0x108] sm:$0xf]
  %v100 = vld [vmem:[%s0 + $0x10c] sm:$0xf]
  %v101 = vld [vmem:[%s0 + $0x110] sm:$0xf]
  %v102 = vld [vmem:[%s0 + $0x114] sm:$0xf]
  %v103 = vld [vmem:[%s0 + $0x118] sm:$0xf]
  %v104 = vld [vmem:[%s0 + $0x11c] sm:$0xf]
  %v105 = vld [vmem:[%s0 + $0x120] sm:$0xf]
  %v106 = vld [vmem:[%s0 + $0x124] sm:$0xf]
  %v107 = vld [vmem:[%s0 + $0x128] sm:$0xf]
  %v108 = vld [vmem:[%s0 + $0x12c] sm:$0xf]
  %v109 = vld [vmem:[%s0 + $0x130] sm:$0xf]
  %v110 = vld [vmem:[%s0 + $0x134] sm:$0xf]
  %v111 = vld [vmem:[%s0 + $0x138] sm:$0xf]
  %v112 = vld [vmem:[%s0 + $0x13c] sm:$0xf]
  %v113 = vld [vmem:[%s0 + $0x140] sm:$0xf]
  %v114 = vld [vmem:[%s0 + $0x144] sm:$0xf]
  %v115 = vld [vmem:[%s0 + $0x148] sm:$0xf]
  %v116 = vld [vmem:[%s0 + $0x14c] sm:$0xf]
  %v117 = vld [vmem:[%s0 + $0x150] sm:$0xf]
  %v118 = vld [vmem:[%s0 + $0x154] sm:$0xf]
  %v119 = vld [vmem:[%s0 + $0x158] sm:$0xf]
  %v120 = vld [vmem:[%s0 + $0x15c] sm:$0xf]
  %v121 = vld [vmem:[%s0 + $0x160] sm:$0xf]
  %v122 = vld [vmem:[%s0 + $0x164] sm:$0xf]
  %v123 = vld [vmem:[%s0 + $0x168] sm:$0xf]
  %v124 = vld [vmem:[%s0 + $0x16c] sm:$0xf]
  %v125 = vld [vmem:[%s0 + $0x170] sm:$0xf]
  %v126 = vld [vmem:[%s0 + $0x174] sm:$0xf]
  %v127 = vld [vmem:[%s0 + $0x178] sm:$0xf]
  %v128 = vld [vmem:[%s0 + $0x17c] sm:$0xf]
  %v129 = vld [vmem:[%s0 + $0x180] sm:$0xf]
  %v130 = vld [vmem:[%s0 + $0x184] sm:$0xf]
  %v131 = vld [vmem:[%s0 + $0x188] sm:$0xf]
  %v132 = vld [vmem:[%s0 + $0x18c] sm:$0xf]
  %v133 = vld [vmem:[%s0 + $0x190] sm:$0xf]
  %v134 = vld [vmem:[%s0 + $0x194] sm:$0xf]
  %v135 = vld [vmem:[%s0 + $0x198] sm:$0xf]
  %v136 = vld [vmem:[%s0 + $0x19c] sm:$0xf]
  %v137 = vld [vmem:[%s0 + $0x1a0] sm:$0xf]
  %v138 = vld [vmem:[%s0 + $0x1a4] sm:$0xf]
  %v139 = vld [vmem:[%s0 + $0x1a8] sm:$0xf]
  %v140 = vld [vmem:[%s0 + $0x1ac] sm:$0xf]
  %v141 = vld [vmem:[%s0 + $0x1b0] sm:$0xf]
  %v142 = vld [vmem:[%s0 + $0x1b4] sm:$0xf]
  %v143 = vld [vmem:[%s0 + $0x1b8] sm:$0xf]
  %v144 = vld [vmem:[%s0 + $0x1bc] sm:$0xf]
  %v145 = vld [vmem:[%s0 + $0x1c0] sm:$0xf]
  %v146 = vld [vmem:[%s0 + $0x1c4] sm:$0xf]
  %v147 = vld [vmem:[%s0 + $0x1c8] sm:$0xf]
  %v148 = vld [vmem:[%s0 + $0x1cc] sm:$0xf]
  %v149 = vld [vmem:[%s0 + $0x1d0] sm:$0xf]
  %v150 = vld [vmem:[%s0 + $0x1d4] sm:$0xf]
  %v151 = vld [vmem:[%s0 + $0x1d8] sm:$0xf]
  %v152 = vld [vmem:[%s0 + $0x1dc] sm:$0xf]
  %v153 = vld [vmem:[%s0 + $0x1e0] sm:$0xf]
  %v154 = vld [vmem:[%s0 + $0x1e4] sm:$0xf]
  %v155 = vld [vmem:[%s0 + $0x1e8] sm:$0xf]
  %v156 = vld [vmem:[%s0 + $0x1ec] sm:$0xf]
  %v157 = vld [vmem:[%s0 + $0x1f0] sm:$0xf]
  %v158 = vld [vmem:[%s0 + $0x1f4] sm:$0xf]
  %v159 = vld [vmem:[%s0 + $0x1f8] sm:$0xf]
  %v160 = vld [vmem:[%s0 + $0x1fc] sm:$0xf]
  %v161 = vld [vmem:[%s0 + $0x200] sm:$0xf]
  %v162 = vld [vmem:[%s0 + $0x204] sm:$0xf]
  %v163 = vld [vmem:[%s0 + $0x208] sm:$0xf]
  %v164 = vld [vmem:[%s0 + $0x20c] sm:$0xf]
  %v165 = vld [vmem:[%s0 + $0x210] sm:$0xf]
  %v166 = vld [vmem:[%s0 + $0x214] sm:$0xf]
  %v167 = vld [vmem:[%s0 + $0x218] sm:$0xf]
  %v168 = vld [vmem:[%s0 + $0x21c] sm:$0xf]
  %v169 = vld [vmem:[%s0 + $0x220] sm:$0xf]
  %v170 = vld [vmem:[%s0 + $0x224] sm:$0xf]
  %v171 = vld [vmem:[%s0 + $0x228] sm:$0xf]
  %v172 = vld [vmem:[%s0 + $0x22c] sm:$0xf]
  %v173 = vld [vmem:[%s0 + $0x230] sm:$0xf]
  %v174 = vld [vmem:[%s0 + $0x234] sm:$0xf]
  %v175 = vld [vmem:[%s0 + $0x238] sm:$0xf]
  %v176 = vld [vmem:[%s0 + $0x23c] sm:$0xf]
  %v177 = vld [vmem:[%s0 + $0x240] sm:$0xf]
  %v178 = vld [vmem:[%s0 + $0x244] sm:$0xf]
  %v179 = vld [vmem:[%s0 + $0x248] sm:$0xf]
  %v180 = vld [vmem:[%s0 + $0x24c] sm:$0xf]
  %v181 = vld [vmem:[%s0 + $0x250] sm:$0xf]
  %v182 = vld [vmem:[%s0 + $0x254] sm:$0xf]
  %v183 = vld [vmem:[%s0 + $0x258] sm:$0xf]
  %v184 = vld [vmem:[%s0 + $0x25c] sm:$0xf]
  %v185 = vld [vmem:[%s0 + $0x260] sm:$0xf]
  %v186 = vld [vmem:[%s0 + $0x264] sm:$0xf]
  %v187 = vld [vmem:[%s0 + $0x268] sm:$0xf]
  %v188 = vld [vmem:[%s0 + $0x26c] sm:$0xf]
  %v189 = vld [vmem:[%s0 + $0x270] sm:$0xf]
  %v190 = vld [vmem:[%s0 + $0x274] sm:$0xf]
  %v191 = vld [vmem:[%s0 + $0x278] sm:$0xf]
  %v192 = vld [vmem:[%s0 + $0x27c] sm:$0xf]
  %v193 = vld [vmem:[%s0 + $0x280] sm:$0xf]
  %v194 = vld [vmem:[%s0 + $0x284] sm:$0xf]
  %v195 = vld [vmem:[%s0 + $0x288] sm:$0xf]
  %v196 = vld [vmem:[%s0 + $0x28c] sm:$0xf]
  %v197 = vld [vmem:[%s0 + $0x290] sm:$0xf]
  %v198 = vld [vmem:[%s0 + $0x294] sm:$0xf]
  %v199 = vld [vmem:[%s0 + $0x298] sm:$0xf]
  %v200 = vld [vmem:[%s0 + $0x29c] sm:$0xf]
  %v201 = vld [vmem:[%s0 + $0x2a0] sm:$0xf]
  %v202 = vld [vmem:[%s0 + $0x2a4] sm:$0xf]
  %v203 = vld [vmem:[%s0 + $0x2a8] sm:$0xf]
  %v204 = vld [vmem:[%s0 + $0x2ac] sm:$0xf]
  %v205 = vld [vmem:[%s0 + $0x2b0] sm:$0xf]
  %v206 = vld [vmem:[%s0 + $0x2b4] sm:$0xf]
  %v207 = vld [vmem:[%s0 + $0x2b8] sm:$0xf]
  %v208 = vld [vmem:[%s0 + $0x2bc] sm:$0xf]
  %v209 = vld [vmem:[%s0 + $0x2c0] sm:$0xf]
  %v210 = vld [vmem:[%s0 + $0x2c4] sm:$0xf]
  %v211 = vld [vmem:[%s0 + $0x2c8] sm:$0xf]
  %v212 = vld [vmem:[%s0 + $0x2cc] sm:$0xf]
  %v213 = vld [vmem:[%s0 + $0x2d0] sm:$0xf]
  %v214 = vld [vmem:[%s0 + $0x2d4] sm:$0xf]
  %v215 = vld [vmem:[%s0 + $0x2d8] sm:$0xf]
  %v216 = vld [vmem:[%s0 + $0x2dc] sm:$0xf]
  %v217 = vld [vmem:[%s0 + $0x2e0] sm:$0xf]
  %v218 = vld [vmem:[%s0 + $0x2e4] sm:$0xf]
  %v219 = vld [vmem:[%s0 + $0x2e8] sm:$0xf]
  %v220 = vld [vmem:[%s0 + $0x2ec] sm:$0xf]
  %v221 = vld [vmem:[%s0 + $0x2f0] sm:$0xf]
  %v222 = vld [vmem:[%s0 + $0x2f4] sm:$0xf]
  %v223 = vld [vmem:[%s0 + $0x2f8] sm:$0xf]
  %v224 = vld [vmem:[%s0 + $0x2fc] sm:$0xf]
  %v225 = vld [vmem:[%s0 + $0x300] sm:$0xf]
  %v226 = vld [vmem:[%s0 + $0x304] sm:$0xf]
  %v227 = vld [vmem:[%s0 + $0x308] sm:$0xf]
  %v228 = vld [vmem:[%s0 + $0x30c] sm:$0xf]
  %v229 = vld [vmem:[%s0 + $0x310] sm:$0xf]
  %v230 = vld [vmem:[%s0 + $0x314] sm:$0xf]
  %v231 = vld [vmem:[%s0 + $0x318] sm:$0xf]
  %v232 = vld [vmem:[%s0 + $0x31c] sm:$0xf]
  %v233 = vld [vmem:[%s0 + $0x320] sm:$0xf]
  %v234 = vld [vmem:[%s0 + $0x324] sm:$0xf]
  %v235 = vld [vmem:[%s0 + $0x328] sm:$0xf]
  %v236 = vld [vmem:[%s0 + $0x32c] sm:$0xf]
  %v237 = vld [vmem:[%s0 + $0x330] sm:$0xf]
  %v238 = vld [vmem:[%s0 + $0x334] sm:$0xf]
  %v239 = vld [vmem:[%s0 + $0x338] sm:$0xf]
  %v240 = vld [vmem:[%s0 + $0x33c] sm:$0xf]
  %v241 = vld [vmem:[%s0 + $0x340] sm:$0xf]
  %v242 = vld [vmem:[%s0 + $0x344] sm:$0xf]
  %v243 = vld [vmem:[%s0 + $0x348] sm:$0xf]
  %v244 = vld [vmem:[%s0 + $0x34c] sm:$0xf]
  %v245 = vld [vmem:[%s0 + $0x350] sm:$0xf]
  %v246 = vld [vmem:[%s0 + $0x354] sm:$0xf]
  %v247 = vld [vmem:[%s0 + $0x358] sm:$0xf]
  %v248 = vld [vmem:[%s0 + $0x35c] sm:$0xf]
  %v249 = vld [vmem:[%s0 + $0x360] sm:$0xf]
  %v250 = vld [vmem:[%s0 + $0x364] sm:$0xf]
  %v251 = vld [vmem:[%s0 + $0x368] sm:$0xf]
  %v252 = vld [vmem:[%s0 + $0x36c] sm:$0xf]
  %v253 = vld [vmem:[%s0 + $0x370] sm:$0xf]
  %v254 = vld [vmem:[%s0 + $0x374] sm:$0xf]
  %v255 = vld [vmem:[%s0 + $0x378] sm:$0xf]
  %v256 = vld [vmem:[%s0 + $0x37c] sm:$0xf]
  %v257 = vld [vmem:[%s0 + $0x380] sm:$0xf]
  %v258 = vld [vmem:[%s0 + $0x384] sm:$0xf]
  %v259 = vld [vmem:[%s0 + $0x388] sm:$0xf]
  %v260 = vld [vmem:[%s0 + $0x38c] sm:$0xf]
  %v261 = vld [vmem:[%s0 + $0x390] sm:$0xf]
  %v262 = vld [vmem:[%s0 + $0x394] sm:$0xf]
  %v263 = vld [vmem:[%s0 + $0x398] sm:$0xf]
  %v264 = vld [vmem:[%s0 + $0x39c] sm:$0xf]
  %v265 = vld [vmem:[%s0 + $0x3a0] sm:$0xf]
  %v266 = vld [vmem:[%s0 + $0x3a4] sm:$0xf]
  %v267 = vld [vmem:[%s0 + $0x3a8] sm:$0xf]
  %v268 = vld [vmem:[%s0 + $0x3ac] sm:$0xf]
  %v269 = vld [vmem:[%s0 + $0x3b0] sm:$0xf]
  %v270 = vld [vmem:[%s0 + $0x3b4] sm:$0xf]
  %v271 = vld [vmem:[%s0 + $0x3b8] sm:$0xf]
  %v272 = vld [vmem:[%s0 + $0x3bc] sm:$0xf]
  %v273 = vld [vmem:[%s0 + $0x3c0] sm:$0xf]
  %v274 = vld [vmem:[%s0 + $0x3c4] sm:$0xf]
  %v275 = vld [vmem:[%s0 + $0x3c8] sm:$0xf]
  %v276 = vld [vmem:[%s0 + $0x3cc] sm:$0xf]
  %v277 = vld [vmem:[%s0 + $0x3d0] sm:$0xf]
  %v278 = vld [vmem:[%s0 + $0x3d4] sm:$0xf]
  %v279 = vld [vmem:[%s0 + $0x3d8] sm:$0xf]
  %v280 = vld [vmem:[%s0 + $0x3dc] sm:$0xf]
  %v281 = vld [vmem:[%s0 + $0x3e0] sm:$0xf]
  %v282 = vld [vmem:[%s0 + $0x3e4] sm:$0xf]
  %v283 = vld [vmem:[%s0 + $0x3e8] sm:$0xf]
  %v284 = vld [vmem:[%s0 + $0x3ec] sm:$0xf]
  %v285 = vld [vmem:[%s0 + $0x3f0] sm:$0xf]
  %v286 = vld [vmem:[%s0 + $0x3f4] sm:$0xf]
  %v287 = vld [vmem:[%s0 + $0x3f8] sm:$0xf]
  %v288 = vld [vmem:[%s0 + $0x3fc] sm:$0xf]
  %v289 = vld [vmem:[%s1] sm:$0xf]
  %v290 = vld [vmem:[%s1 + $0x4] sm:$0xf]
  %v291 = vld [vmem:[%s1 + $0x8] sm:$0xf]
  %v292 = vld [vmem:[%s1 + $0xc] sm:$0xf]
  %v549 = vunpack.c.l.b16 %v33
  %v550 = vunpack.c.l.b16 %v34
  %v551 = vunpack.c.l.b16 %v35
  %v552 = vunpack.c.l.b16 %v36
  %v553 = vunpack.c.l.b16 %v37
  %v554 = vunpack.c.l.b16 %v38
  %v555 = vunpack.c.l.b16 %v39
  %v556 = vunpack.c.l.b16 %v40
  %v557 = vunpack.c.l.b16 %v41
  %v558 = vunpack.c.l.b16 %v42
  %v559 = vunpack.c.l.b16 %v43
  %v560 = vunpack.c.l.b16 %v44
  %v561 = vunpack.c.l.b16 %v45
  %v562 = vunpack.c.l.b16 %v46
  %v563 = vunpack.c.l.b16 %v47
  %v564 = vunpack.c.l.b16 %v48
  %v565 = vunpack.c.l.b16 %v49
  %v566 = vunpack.c.l.b16 %v50
  %v567 = vunpack.c.l.b16 %v51
  %v568 = vunpack.c.l.b16 %v52
  %v569 = vunpack.c.l.b16 %v53
  %v570 = vunpack.c.l.b16 %v54
  %v571 = vunpack.c.l.b16 %v55
  %v572 = vunpack.c.l.b16 %v56
  %v573 = vunpack.c.l.b16 %v57
  %v574 = vunpack.c.l.b16 %v58
  %v575 = vunpack.c.l.b16 %v59
  %v576 = vunpack.c.l.b16 %v60
  %v577 = vunpack.c.l.b16 %v61
  %v578 = vunpack.c.l.b16 %v62
  %v579 = vunpack.c.l.b16 %v63
  %v580 = vunpack.c.l.b16 %v64
  %v581 = vunpack.c.l.b16 %v65
  %v582 = vunpack.c.l.b16 %v66
  %v583 = vunpack.c.l.b16 %v67
  %v584 = vunpack.c.l.b16 %v68
  %v585 = vunpack.c.l.b16 %v69
  %v586 = vunpack.c.l.b16 %v70
  %v587 = vunpack.c.l.b16 %v71
  %v588 = vunpack.c.l.b16 %v72
  %v589 = vunpack.c.l.b16 %v73
  %v590 = vunpack.c.l.b16 %v74
  %v591 = vunpack.c.l.b16 %v75
  %v592 = vunpack.c.l.b16 %v76
  %v593 = vunpack.c.l.b16 %v77
  %v594 = vunpack.c.l.b16 %v78
  %v595 = vunpack.c.l.b16 %v79
  %v596 = vunpack.c.l.b16 %v80
  %v597 = vunpack.c.l.b16 %v81
  %v598 = vunpack.c.l.b16 %v82
  %v599 = vunpack.c.l.b16 %v83
  %v600 = vunpack.c.l.b16 %v84
  %v601 = vunpack.c.l.b16 %v85
  %v602 = vunpack.c.l.b16 %v86
  %v603 = vunpack.c.l.b16 %v87
  %v604 = vunpack.c.l.b16 %v88
  %v605 = vunpack.c.l.b16 %v89
  %v606 = vunpack.c.l.b16 %v90
  %v607 = vunpack.c.l.b16 %v91
  %v608 = vunpack.c.l.b16 %v92
  %v609 = vunpack.c.l.b16 %v93
  %v610 = vunpack.c.l.b16 %v94
  %v611 = vunpack.c.l.b16 %v95
  %v612 = vunpack.c.l.b16 %v96
  %v613 = vunpack.c.l.b16 %v97
  %v614 = vunpack.c.l.b16 %v98
  %v615 = vunpack.c.l.b16 %v99
  %v616 = vunpack.c.l.b16 %v100
  %v617 = vunpack.c.l.b16 %v101
  %v618 = vunpack.c.l.b16 %v102
  %v619 = vunpack.c.l.b16 %v103
  %v620 = vunpack.c.l.b16 %v104
  %v621 = vunpack.c.l.b16 %v105
  %v622 = vunpack.c.l.b16 %v106
  %v623 = vunpack.c.l.b16 %v107
  %v624 = vunpack.c.l.b16 %v108
  %v625 = vunpack.c.l.b16 %v109
  %v626 = vunpack.c.l.b16 %v110
  %v627 = vunpack.c.l.b16 %v111
  %v628 = vunpack.c.l.b16 %v112
  %v629 = vunpack.c.l.b16 %v113
  %v630 = vunpack.c.l.b16 %v114
  %v631 = vunpack.c.l.b16 %v115
  %v632 = vunpack.c.l.b16 %v116
  %v633 = vunpack.c.l.b16 %v117
  %v634 = vunpack.c.l.b16 %v118
  %v635 = vunpack.c.l.b16 %v119
  %v636 = vunpack.c.l.b16 %v120
  %v637 = vunpack.c.l.b16 %v121
  %v638 = vunpack.c.l.b16 %v122
  %v639 = vunpack.c.l.b16 %v123
  %v640 = vunpack.c.l.b16 %v124
  %v641 = vunpack.c.l.b16 %v125
  %v642 = vunpack.c.l.b16 %v126
  %v643 = vunpack.c.l.b16 %v127
  %v644 = vunpack.c.l.b16 %v128
  %v645 = vunpack.c.l.b16 %v129
  %v646 = vunpack.c.l.b16 %v130
  %v647 = vunpack.c.l.b16 %v131
  %v648 = vunpack.c.l.b16 %v132
  %v649 = vunpack.c.l.b16 %v133
  %v650 = vunpack.c.l.b16 %v134
  %v651 = vunpack.c.l.b16 %v135
  %v652 = vunpack.c.l.b16 %v136
  %v653 = vunpack.c.l.b16 %v137
  %v654 = vunpack.c.l.b16 %v138
  %v655 = vunpack.c.l.b16 %v139
  %v656 = vunpack.c.l.b16 %v140
  %v657 = vunpack.c.l.b16 %v141
  %v658 = vunpack.c.l.b16 %v142
  %v659 = vunpack.c.l.b16 %v143
  %v660 = vunpack.c.l.b16 %v144
  %v661 = vunpack.c.l.b16 %v145
  %v662 = vunpack.c.l.b16 %v146
  %v663 = vunpack.c.l.b16 %v147
  %v664 = vunpack.c.l.b16 %v148
  %v665 = vunpack.c.l.b16 %v149
  %v666 = vunpack.c.l.b16 %v150
  %v667 = vunpack.c.l.b16 %v151
  %v668 = vunpack.c.l.b16 %v152
  %v669 = vunpack.c.l.b16 %v153
  %v670 = vunpack.c.l.b16 %v154
  %v671 = vunpack.c.l.b16 %v155
  %v672 = vunpack.c.l.b16 %v156
  %v673 = vunpack.c.l.b16 %v157
  %v674 = vunpack.c.l.b16 %v158
  %v675 = vunpack.c.l.b16 %v159
  %v676 = vunpack.c.l.b16 %v160
  %v677 = vunpack.c.l.b16 %v161
  %v678 = vunpack.c.l.b16 %v162
  %v679 = vunpack.c.l.b16 %v163
  %v680 = vunpack.c.l.b16 %v164
  %v681 = vunpack.c.l.b16 %v165
  %v682 = vunpack.c.l.b16 %v166
  %v683 = vunpack.c.l.b16 %v167
  %v684 = vunpack.c.l.b16 %v168
  %v685 = vunpack.c.l.b16 %v169
  %v686 = vunpack.c.l.b16 %v170
  %v687 = vunpack.c.l.b16 %v171
  %v688 = vunpack.c.l.b16 %v172
  %v689 = vunpack.c.l.b16 %v173
  %v690 = vunpack.c.l.b16 %v174
  %v691 = vunpack.c.l.b16 %v175
  %v692 = vunpack.c.l.b16 %v176
  %v693 = vunpack.c.l.b16 %v177
  %v694 = vunpack.c.l.b16 %v178
  %v695 = vunpack.c.l.b16 %v179
  %v696 = vunpack.c.l.b16 %v180
  %v697 = vunpack.c.l.b16 %v181
  %v698 = vunpack.c.l.b16 %v182
  %v699 = vunpack.c.l.b16 %v183
  %v700 = vunpack.c.l.b16 %v184
  %v701 = vunpack.c.l.b16 %v185
  %v702 = vunpack.c.l.b16 %v186
  %v703 = vunpack.c.l.b16 %v187
  %v704 = vunpack.c.l.b16 %v188
  %v705 = vunpack.c.l.b16 %v189
  %v706 = vunpack.c.l.b16 %v190
  %v707 = vunpack.c.l.b16 %v191
  %v708 = vunpack.c.l.b16 %v192
  %v709 = vunpack.c.l.b16 %v193
  %v710 = vunpack.c.l.b16 %v194
  %v711 = vunpack.c.l.b16 %v195
  %v712 = vunpack.c.l.b16 %v196
  %v713 = vunpack.c.l.b16 %v197
  %v714 = vunpack.c.l.b16 %v198
  %v715 = vunpack.c.l.b16 %v199
  %v716 = vunpack.c.l.b16 %v200
  %v717 = vunpack.c.l.b16 %v201
  %v718 = vunpack.c.l.b16 %v202
  %v719 = vunpack.c.l.b16 %v203
  %v720 = vunpack.c.l.b16 %v204
  %v721 = vunpack.c.l.b16 %v205
  %v722 = vunpack.c.l.b16 %v206
  %v723 = vunpack.c.l.b16 %v207
  %v724 = vunpack.c.l.b16 %v208
  %v725 = vunpack.c.l.b16 %v209
  %v726 = vunpack.c.l.b16 %v210
  %v727 = vunpack.c.l.b16 %v211
  %v728 = vunpack.c.l.b16 %v212
  %v729 = vunpack.c.l.b16 %v213
  %v730 = vunpack.c.l.b16 %v214
  %v731 = vunpack.c.l.b16 %v215
  %v732 = vunpack.c.l.b16 %v216
  %v733 = vunpack.c.l.b16 %v217
  %v734 = vunpack.c.l.b16 %v218
  %v735 = vunpack.c.l.b16 %v219
  %v736 = vunpack.c.l.b16 %v220
  %v737 = vunpack.c.l.b16 %v221
  %v738 = vunpack.c.l.b16 %v222
  %v739 = vunpack.c.l.b16 %v223
  %v740 = vunpack.c.l.b16 %v224
  %v741 = vunpack.c.l.b16 %v225
  %v742 = vunpack.c.l.b16 %v226
  %v743 = vunpack.c.l.b16 %v227
  %v744 = vunpack.c.l.b16 %v228
  %v745 = vunpack.c.l.b16 %v229
  %v746 = vunpack.c.l.b16 %v230
  %v747 = vunpack.c.l.b16 %v231
  %v748 = vunpack.c.l.b16 %v232
  %v749 = vunpack.c.l.b16 %v233
  %v750 = vunpack.c.l.b16 %v234
  %v751 = vunpack.c.l.b16 %v235
  %v752 = vunpack.c.l.b16 %v236
  %v753 = vunpack.c.l.b16 %v237
  %v754 = vunpack.c.l.b16 %v238
  %v755 = vunpack.c.l.b16 %v239
  %v756 = vunpack.c.l.b16 %v240
  %v757 = vunpack.c.l.b16 %v241
  %v758 = vunpack.c.l.b16 %v242
  %v759 = vunpack.c.l.b16 %v243
  %v760 = vunpack.c.l.b16 %v244
  %v761 = vunpack.c.l.b16 %v245
  %v762 = vunpack.c.l.b16 %v246
  %v763 = vunpack.c.l.b16 %v247
  %v764 = vunpack.c.l.b16 %v248
  %v765 = vunpack.c.l.b16 %v249
  %v766 = vunpack.c.l.b16 %v250
  %v767 = vunpack.c.l.b16 %v251
  %v768 = vunpack.c.l.b16 %v252
  %v769 = vunpack.c.l.b16 %v253
  %v770 = vunpack.c.l.b16 %v254
  %v771 = vunpack.c.l.b16 %v255
  %v772 = vunpack.c.l.b16 %v256
  %v773 = vunpack.c.l.b16 %v257
  %v774 = vunpack.c.l.b16 %v258
  %v775 = vunpack.c.l.b16 %v259
  %v776 = vunpack.c.l.b16 %v260
  %v777 = vunpack.c.l.b16 %v261
  %v778 = vunpack.c.l.b16 %v262
  %v779 = vunpack.c.l.b16 %v263
  %v780 = vunpack.c.l.b16 %v264
  %v781 = vunpack.c.l.b16 %v265
  %v782 = vunpack.c.l.b16 %v266
  %v783 = vunpack.c.l.b16 %v267
  %v784 = vunpack.c.l.b16 %v268
  %v785 = vunpack.c.l.b16 %v269
  %v786 = vunpack.c.l.b16 %v270
  %v787 = vunpack.c.l.b16 %v271
  %v788 = vunpack.c.l.b16 %v272
  %v789 = vunpack.c.l.b16 %v273
  %v790 = vunpack.c.l.b16 %v274
  %v791 = vunpack.c.l.b16 %v275
  %v792 = vunpack.c.l.b16 %v276
  %v793 = vunpack.c.l.b16 %v277
  %v794 = vunpack.c.l.b16 %v278
  %v795 = vunpack.c.l.b16 %v279
  %v796 = vunpack.c.l.b16 %v280
  %v797 = vunpack.c.l.b16 %v281
  %v798 = vunpack.c.l.b16 %v282
  %v799 = vunpack.c.l.b16 %v283
  %v800 = vunpack.c.l.b16 %v284
  %v801 = vunpack.c.l.b16 %v285
  %v802 = vunpack.c.l.b16 %v286
  %v803 = vunpack.c.l.b16 %v287
  %v804 = vunpack.c.l.b16 %v288
  %v805 = vpack.c.b16 %v550, %v549
  %v806 = vpack.c.b16 %v552, %v551
  %v807 = vpack.c.b16 %v554, %v553
  %v808 = vpack.c.b16 %v556, %v555
  %v809 = vpack.c.b16 %v558, %v557
  %v810 = vpack.c.b16 %v560, %v559
  %v811 = vpack.c.b16 %v562, %v561
  %v812 = vpack.c.b16 %v564, %v563
  %v813 = vpack.c.b16 %v566, %v565
  %v814 = vpack.c.b16 %v568, %v567
  %v815 = vpack.c.b16 %v570, %v569
  %v816 = vpack.c.b16 %v572, %v571
  %v817 = vpack.c.b16 %v574, %v573
  %v818 = vpack.c.b16 %v576, %v575
  %v819 = vpack.c.b16 %v578, %v577
  %v820 = vpack.c.b16 %v580, %v579
  %v821 = vpack.c.b16 %v582, %v581
  %v822 = vpack.c.b16 %v584, %v583
  %v823 = vpack.c.b16 %v586, %v585
  %v824 = vpack.c.b16 %v588, %v587
  %v825 = vpack.c.b16 %v590, %v589
  %v826 = vpack.c.b16 %v592, %v591
  %v827 = vpack.c.b16 %v594, %v593
  %v828 = vpack.c.b16 %v596, %v595
  %v829 = vpack.c.b16 %v598, %v597
  %v830 = vpack.c.b16 %v600, %v599
  %v831 = vpack.c.b16 %v602, %v601
  %v832 = vpack.c.b16 %v604, %v603
  %v833 = vpack.c.b16 %v606, %v605
  %v834 = vpack.c.b16 %v608, %v607
  %v835 = vpack.c.b16 %v610, %v609
  %v836 = vpack.c.b16 %v612, %v611
  %v837 = vpack.c.b16 %v614, %v613
  %v838 = vpack.c.b16 %v616, %v615
  %v839 = vpack.c.b16 %v618, %v617
  %v840 = vpack.c.b16 %v620, %v619
  %v841 = vpack.c.b16 %v622, %v621
  %v842 = vpack.c.b16 %v624, %v623
  %v843 = vpack.c.b16 %v626, %v625
  %v844 = vpack.c.b16 %v628, %v627
  %v845 = vpack.c.b16 %v630, %v629
  %v846 = vpack.c.b16 %v632, %v631
  %v847 = vpack.c.b16 %v634, %v633
  %v848 = vpack.c.b16 %v636, %v635
  %v849 = vpack.c.b16 %v638, %v637
  %v850 = vpack.c.b16 %v640, %v639
  %v851 = vpack.c.b16 %v642, %v641
  %v852 = vpack.c.b16 %v644, %v643
  %v853 = vpack.c.b16 %v646, %v645
  %v854 = vpack.c.b16 %v648, %v647
  %v855 = vpack.c.b16 %v650, %v649
  %v856 = vpack.c.b16 %v652, %v651
  %v857 = vpack.c.b16 %v654, %v653
  %v858 = vpack.c.b16 %v656, %v655
  %v859 = vpack.c.b16 %v658, %v657
  %v860 = vpack.c.b16 %v660, %v659
  %v861 = vpack.c.b16 %v662, %v661
  %v862 = vpack.c.b16 %v664, %v663
  %v863 = vpack.c.b16 %v666, %v665
  %v864 = vpack.c.b16 %v668, %v667
  %v865 = vpack.c.b16 %v670, %v669
  %v866 = vpack.c.b16 %v672, %v671
  %v867 = vpack.c.b16 %v674, %v673
  %v868 = vpack.c.b16 %v676, %v675
  %v869 = vpack.c.b16 %v678, %v677
  %v870 = vpack.c.b16 %v680, %v679
  %v871 = vpack.c.b16 %v682, %v681
  %v872 = vpack.c.b16 %v684, %v683
  %v873 = vpack.c.b16 %v686, %v685
  %v874 = vpack.c.b16 %v688, %v687
  %v875 = vpack.c.b16 %v690, %v689
  %v876 = vpack.c.b16 %v692, %v691
  %v877 = vpack.c.b16 %v694, %v693
  %v878 = vpack.c.b16 %v696, %v695
  %v879 = vpack.c.b16 %v698, %v697
  %v880 = vpack.c.b16 %v700, %v699
  %v881 = vpack.c.b16 %v702, %v701
  %v882 = vpack.c.b16 %v704, %v703
  %v883 = vpack.c.b16 %v706, %v705
  %v884 = vpack.c.b16 %v708, %v707
  %v885 = vpack.c.b16 %v710, %v709
  %v886 = vpack.c.b16 %v712, %v711
  %v887 = vpack.c.b16 %v714, %v713
  %v888 = vpack.c.b16 %v716, %v715
  %v889 = vpack.c.b16 %v718, %v717
  %v890 = vpack.c.b16 %v720, %v719
  %v891 = vpack.c.b16 %v722, %v721
  %v892 = vpack.c.b16 %v724, %v723
  %v893 = vpack.c.b16 %v726, %v725
  %v894 = vpack.c.b16 %v728, %v727
  %v895 = vpack.c.b16 %v730, %v729
  %v896 = vpack.c.b16 %v732, %v731
  %v897 = vpack.c.b16 %v734, %v733
  %v898 = vpack.c.b16 %v736, %v735
  %v899 = vpack.c.b16 %v738, %v737
  %v900 = vpack.c.b16 %v740, %v739
  %v901 = vpack.c.b16 %v742, %v741
  %v902 = vpack.c.b16 %v744, %v743
  %v903 = vpack.c.b16 %v746, %v745
  %v904 = vpack.c.b16 %v748, %v747
  %v905 = vpack.c.b16 %v750, %v749
  %v906 = vpack.c.b16 %v752, %v751
  %v907 = vpack.c.b16 %v754, %v753
  %v908 = vpack.c.b16 %v756, %v755
  %v909 = vpack.c.b16 %v758, %v757
  %v910 = vpack.c.b16 %v760, %v759
  %v911 = vpack.c.b16 %v762, %v761
  %v912 = vpack.c.b16 %v764, %v763
  %v913 = vpack.c.b16 %v766, %v765
  %v914 = vpack.c.b16 %v768, %v767
  %v915 = vpack.c.b16 %v770, %v769
  %v916 = vpack.c.b16 %v772, %v771
  %v917 = vpack.c.b16 %v774, %v773
  %v918 = vpack.c.b16 %v776, %v775
  %v919 = vpack.c.b16 %v778, %v777
  %v920 = vpack.c.b16 %v780, %v779
  %v921 = vpack.c.b16 %v782, %v781
  %v922 = vpack.c.b16 %v784, %v783
  %v923 = vpack.c.b16 %v786, %v785
  %v924 = vpack.c.b16 %v788, %v787
  %v925 = vpack.c.b16 %v790, %v789
  %v926 = vpack.c.b16 %v792, %v791
  %v927 = vpack.c.b16 %v794, %v793
  %v928 = vpack.c.b16 %v796, %v795
  %v929 = vpack.c.b16 %v798, %v797
  %v930 = vpack.c.b16 %v800, %v799
  %v931 = vpack.c.b16 %v802, %v801
  %v932 = vpack.c.b16 %v804, %v803
  %v937 = vunpack.c.l.b16 %v289
  %v938 = vunpack.c.l.b16 %v290
  %v939 = vunpack.c.l.b16 %v291
  %v940 = vunpack.c.l.b16 %v292
  %v941 = vpack.c.b16 %v938, %v937
  %v942 = vpack.c.b16 %v940, %v939
  %vm945 = vcmask 261120
  %v947 = vsel %vm945, %v805, 0
  %v950 = vsel %vm945, %v806, 0
  %v953 = vsel %vm945, %v807, 0
  %v956 = vsel %vm945, %v808, 0
  %v959 = vsel %vm945, %v809, 0
  %v962 = vsel %vm945, %v810, 0
  %v965 = vsel %vm945, %v811, 0
  %v968 = vsel %vm945, %v812, 0
  %v971 = vsel %vm945, %v813, 0
  %v974 = vsel %vm945, %v814, 0
  %v977 = vsel %vm945, %v815, 0
  %v980 = vsel %vm945, %v816, 0
  %v983 = vsel %vm945, %v817, 0
  %v986 = vsel %vm945, %v818, 0
  %v989 = vsel %vm945, %v819, 0
  %v992 = vsel %vm945, %v820, 0
  %v995 = vsel %vm945, %v821, 0
  %v998 = vsel %vm945, %v822, 0
  %v1001 = vsel %vm945, %v823, 0
  %v1004 = vsel %vm945, %v824, 0
  %v1007 = vsel %vm945, %v825, 0
  %v1010 = vsel %vm945, %v826, 0
  %v1013 = vsel %vm945, %v827, 0
  %v1016 = vsel %vm945, %v828, 0
  %v1019 = vsel %vm945, %v829, 0
  %v1022 = vsel %vm945, %v830, 0
  %v1025 = vsel %vm945, %v831, 0
  %v1028 = vsel %vm945, %v832, 0
  %v1031 = vsel %vm945, %v833, 0
  %v1034 = vsel %vm945, %v834, 0
  %v1037 = vsel %vm945, %v835, 0
  %v1040 = vsel %vm945, %v836, 0
  %v1043 = vsel %vm945, %v837, 0
  %v1046 = vsel %vm945, %v838, 0
  %v1049 = vsel %vm945, %v839, 0
  %v1052 = vsel %vm945, %v840, 0
  %v1055 = vsel %vm945, %v841, 0
  %v1058 = vsel %vm945, %v842, 0
  %v1061 = vsel %vm945, %v843, 0
  %v1064 = vsel %vm945, %v844, 0
  %v1067 = vsel %vm945, %v845, 0
  %v1070 = vsel %vm945, %v846, 0
  %v1073 = vsel %vm945, %v847, 0
  %v1076 = vsel %vm945, %v848, 0
  %v1079 = vsel %vm945, %v849, 0
  %v1082 = vsel %vm945, %v850, 0
  %v1085 = vsel %vm945, %v851, 0
  %v1088 = vsel %vm945, %v852, 0
  %v1091 = vsel %vm945, %v853, 0
  %v1094 = vsel %vm945, %v854, 0
  %v1097 = vsel %vm945, %v855, 0
  %v1100 = vsel %vm945, %v856, 0
  %v1103 = vsel %vm945, %v857, 0
  %v1106 = vsel %vm945, %v858, 0
  %v1109 = vsel %vm945, %v859, 0
  %v1112 = vsel %vm945, %v860, 0
  %v1115 = vsel %vm945, %v861, 0
  %v1118 = vsel %vm945, %v862, 0
  %v1121 = vsel %vm945, %v863, 0
  %v1124 = vsel %vm945, %v864, 0
  %v1127 = vsel %vm945, %v865, 0
  %v1130 = vsel %vm945, %v866, 0
  %v1133 = vsel %vm945, %v867, 0
  %v1136 = vsel %vm945, %v868, 0
  %v1139 = vsel %vm945, %v869, 0
  %v1142 = vsel %vm945, %v870, 0
  %v1145 = vsel %vm945, %v871, 0
  %v1148 = vsel %vm945, %v872, 0
  %v1151 = vsel %vm945, %v873, 0
  %v1154 = vsel %vm945, %v874, 0
  %v1157 = vsel %vm945, %v875, 0
  %v1160 = vsel %vm945, %v876, 0
  %v1163 = vsel %vm945, %v877, 0
  %v1166 = vsel %vm945, %v878, 0
  %v1169 = vsel %vm945, %v879, 0
  %v1172 = vsel %vm945, %v880, 0
  %v1175 = vsel %vm945, %v881, 0
  %v1178 = vsel %vm945, %v882, 0
  %v1181 = vsel %vm945, %v883, 0
  %v1184 = vsel %vm945, %v884, 0
  %v1187 = vsel %vm945, %v885, 0
  %v1190 = vsel %vm945, %v886, 0
  %v1193 = vsel %vm945, %v887, 0
  %v1196 = vsel %vm945, %v888, 0
  %v1199 = vsel %vm945, %v889, 0
  %v1202 = vsel %vm945, %v890, 0
  %v1205 = vsel %vm945, %v891, 0
  %v1208 = vsel %vm945, %v892, 0
  %v1211 = vsel %vm945, %v893, 0
  %v1214 = vsel %vm945, %v894, 0
  %v1217 = vsel %vm945, %v895, 0
  %v1220 = vsel %vm945, %v896, 0
  %v1223 = vsel %vm945, %v897, 0
  %v1226 = vsel %vm945, %v898, 0
  %v1229 = vsel %vm945, %v899, 0
  %v1232 = vsel %vm945, %v900, 0
  %v1235 = vsel %vm945, %v901, 0
  %v1238 = vsel %vm945, %v902, 0
  %v1241 = vsel %vm945, %v903, 0
  %v1244 = vsel %vm945, %v904, 0
  %v1247 = vsel %vm945, %v905, 0
  %v1250 = vsel %vm945, %v906, 0
  %v1253 = vsel %vm945, %v907, 0
  %v1256 = vsel %vm945, %v908, 0
  %v1259 = vsel %vm945, %v909, 0
  %v1262 = vsel %vm945, %v910, 0
  %v1265 = vsel %vm945, %v911, 0
  %v1268 = vsel %vm945, %v912, 0
  %v1271 = vsel %vm945, %v913, 0
  %v1274 = vsel %vm945, %v914, 0
  %v1277 = vsel %vm945, %v915, 0
  %v1280 = vsel %vm945, %v916, 0
  %v1283 = vsel %vm945, %v917, 0
  %v1286 = vsel %vm945, %v918, 0
  %v1289 = vsel %vm945, %v919, 0
  %v1292 = vsel %vm945, %v920, 0
  %v1295 = vsel %vm945, %v921, 0
  %v1298 = vsel %vm945, %v922, 0
  %v1301 = vsel %vm945, %v923, 0
  %v1304 = vsel %vm945, %v924, 0
  %v1307 = vsel %vm945, %v925, 0
  %v1310 = vsel %vm945, %v926, 0
  %v1313 = vsel %vm945, %v927, 0
  %v1316 = vsel %vm945, %v928, 0
  %v1319 = vsel %vm945, %v929, 0
  %v1322 = vsel %vm945, %v930, 0
  %v1325 = vsel %vm945, %v931, 0
  %v1328 = vsel %vm945, %v932, 0
  %1330 = vmatprep.subr.bf16.mxu0 0
  %1331 = vmatpush1.bf16.msra.mxu0 %v941
  %1332 = vmatprep.subr.bf16.mxu0 0
  %1333 = vmatpush1.bf16.msra.mxu0 %v942
  %1334 = vmatprep.subr.bf16.mxu0 0
  %1335 = vmatpush1.bf16.msra.mxu0 0
  %1336 = vmatprep.subr.bf16.mxu0 0
  %1337 = vmatpush1.bf16.msra.mxu0 0
  %1338 = vmatprep.subr.bf16.mxu0 0
  %1339 = vmatpush1.bf16.msra.mxu0 0
  %1340 = vmatprep.subr.bf16.mxu0 0
  %1341 = vmatpush1.bf16.msra.mxu0 0
  %1342 = vmatprep.subr.bf16.mxu0 0
  %1343 = vmatpush1.bf16.msra.mxu0 0
  %1344 = vmatprep.subr.bf16.mxu0 0
  %1345 = vmatpush1.bf16.msra.mxu0 0
  %1346 = vmatprep.subr.bf16.mxu0 0
  %1347 = vmatpush1.bf16.msra.mxu0 0
  %1348 = vmatprep.subr.bf16.mxu0 0
  %1349 = vmatpush1.bf16.msra.mxu0 0
  %1350 = vmatprep.subr.bf16.mxu0 0
  %1351 = vmatpush1.bf16.msra.mxu0 0
  %1352 = vmatprep.subr.bf16.mxu0 0
  %1353 = vmatpush1.bf16.msra.mxu0 0
  %1354 = vmatprep.subr.bf16.mxu0 0
  %1355 = vmatpush1.bf16.msra.mxu0 0
  %1356 = vmatprep.subr.bf16.mxu0 0
  %1357 = vmatpush1.bf16.msra.mxu0 0
  %1358 = vmatprep.subr.bf16.mxu0 0
  %1359 = vmatpush1.bf16.msra.mxu0 0
  %1360 = vmatprep.subr.bf16.mxu0 0
  %1361 = vmatpush1.bf16.msra.mxu0 0
  %1362 = vmatprep.mubr.bf16.mxu0 0
  %1363 = vmatmul.mubr.bf16.gmra.mrb[0].mxu0 %v947
  %v1364 = vpop.f32.mrb[0].mxu0
  %v1365 = vadd.f32 0.0, %v1364
  %v1366 = vpop.f32.mrb[0].mxu0
  %v1367 = vpop.f32.mrb[0].mxu0
  %v1368 = vadd.f32 0.0, %v1367
  %v1369 = vpop.f32.mrb[0].mxu0
  %1370 = vmatprep.mubr.bf16.mxu0 0
  %1371 = vmatmul.mubr.bf16.gmra.mrb[0].mxu0 %v950
  %v1372 = vpop.f32.mrb[0].mxu0
  %v1373 = vadd.f32 0.0, %v1372
  %v1374 = vpop.f32.mrb[0].mxu0
  %v1375 = vpop.f32.mrb[0].mxu0
  %v1376 = vadd.f32 0.0, %v1375
  %v1377 = vpop.f32.mrb[0].mxu0
  %1378 = vmatprep.mubr.bf16.mxu0 0
  %1379 = vmatmul.mubr.bf16.gmra.mrb[0].mxu0 %v953
  %v1380 = vpop.f32.mrb[0].mxu0
  %v1381 = vadd.f32 0.0, %v1380
  %v1382 = vpop.f32.mrb[0].mxu0
  %v1383 = vpop.f32.mrb[0].mxu0
  %v1384 = vadd.f32 0.0, %v1383
  %v1385 = vpop.f32.mrb[0].mxu0
  %1386 = vmatprep.mubr.bf16.mxu0 0
  %1387 = vmatmul.mubr.bf16.gmra.mrb[0].mxu0 %v956
  %v1388 = vpop.f32.mrb[0].mxu0
  %v1389 = vadd.f32 0.0, %v1388
  %v1390 = vpop.f32.mrb[0].mxu0
  %v1391 = vpop.f32.mrb[0].mxu0
  %v1392 = vadd.f32 0.0, %v1391
  %v1393 = vpop.f32.mrb[0].mxu0
  %1394 = vmatprep.mubr.bf16.mxu0 0
  %1395 = vmatmul.mubr.bf16.gmra.mrb[0].mxu0 %v959
  %v1396 = vpop.f32.mrb[0].mxu0
  %v1397 = vadd.f32 0.0, %v1396
  %v1398 = vpop.f32.mrb[0].mxu0
  %v1399 = vpop.f32.mrb[0].mxu0
  %v1400 = vadd.f32 0.0, %v1399
  %v1401 = vpop.f32.mrb[0].mxu0
  %1402 = vmatprep.mubr.bf16.mxu0 0
  %1403 = vmatmul.mubr.bf16.gmra.mrb[0].mxu0 %v962
  %v1404 = vpop.f32.mrb[0].mxu0
  %v1405 = vadd.f32 0.0, %v1404
  %v1406 = vpop.f32.mrb[0].mxu0
  %v1407 = vpop.f32.mrb[0].mxu0
  %v1408 = vadd.f32 0.0, %v1407
  %v1409 = vpop.f32.mrb[0].mxu0
  %1410 = vmatprep.mubr.bf16.mxu0 0
  %1411 = vmatmul.mubr.bf16.gmra.mrb[0].mxu0 %v965
  %v1412 = vpop.f32.mrb[0].mxu0
  %v1413 = vadd.f32 0.0, %v1412
  %v1414 = vpop.f32.mrb[0].mxu0
  %v1415 = vpop.f32.mrb[0].mxu0
  %v1416 = vadd.f32 0.0, %v1415
  %v1417 = vpop.f32.mrb[0].mxu0
  %1418 = vmatprep.mubr.bf16.mxu0 0
  %1419 = vmatmul.mubr.bf16.gmra.mrb[0].mxu0 %v968
  %v1420 = vpop.f32.mrb[0].mxu0
  %v1421 = vadd.f32 0.0, %v1420
  %v1422 = vpop.f32.mrb[0].mxu0
  %v1423 = vpop.f32.mrb[0].mxu0
  %v1424 = vadd.f32 0.0, %v1423
  %v1425 = vpop.f32.mrb[0].mxu0
  %1426 = vmatprep.mubr.bf16.mxu0 0
  %1427 = vmatmul.mubr.bf16.gmra.mrb[0].mxu0 %v971
  %v1428 = vpop.f32.mrb[0].mxu0
  %v1429 = vadd.f32 0.0, %v1428
  %v1430 = vpop.f32.mrb[0].mxu0
  %v1431 = vpop.f32.mrb[0].mxu0
  %v1432 = vadd.f32 0.0, %v1431
  %v1433 = vpop.f32.mrb[0].mxu0
  %1434 = vmatprep.mubr.bf16.mxu0 0
  %1435 = vmatmul.mubr.bf16.gmra.mrb[0].mxu0 %v974
  %v1436 = vpop.f32.mrb[0].mxu0
  %v1437 = vadd.f32 0.0, %v1436
  %v1438 = vpop.f32.mrb[0].mxu0
  %v1439 = vpop.f32.mrb[0].mxu0
  %v1440 = vadd.f32 0.0, %v1439
  %v1441 = vpop.f32.mrb[0].mxu0
  %1442 = vmatprep.mubr.bf16.mxu0 0
  %1443 = vmatmul.mubr.bf16.gmra.mrb[0].mxu0 %v977
  %v1444 = vpop.f32.mrb[0].mxu0
  %v1445 = vadd.f32 0.0, %v1444
  %v1446 = vpop.f32.mrb[0].mxu0
  %v1447 = vpop.f32.mrb[0].mxu0
  %v1448 = vadd.f32 0.0, %v1447
  %v1449 = vpop.f32.mrb[0].mxu0
  %1450 = vmatprep.mubr.bf16.mxu0 0
  %1451 = vmatmul.mubr.bf16.gmra.mrb[0].mxu0 %v980
  %v1452 = vpop.f32.mrb[0].mxu0
  %v1453 = vadd.f32 0.0, %v1452
  %v1454 = vpop.f32.mrb[0].mxu0
  %v1455 = vpop.f32.mrb[0].mxu0
  %v1456 = vadd.f32 0.0, %v1455
  %v1457 = vpop.f32.mrb[0].mxu0
  %1458 = vmatprep.mubr.bf16.mxu0 0
  %1459 = vmatmul.mubr.bf16.gmra.mrb[0].mxu0 %v983
  %v1460 = vpop.f32.mrb[0].mxu0
  %v1461 = vadd.f32 0.0, %v1460
  %v1462 = vpop.f32.mrb[0].mxu0
  %v1463 = vpop.f32.mrb[0].mxu0
  %v1464 = vadd.f32 0.0, %v1463
  %v1465 = vpop.f32.mrb[0].mxu0
  %1466 = vmatprep.mubr.bf16.mxu0 0
  %1467 = vmatmul.mubr.bf16.gmra.mrb[0].mxu0 %v986
  %v1468 = vpop.f32.mrb[0].mxu0
  %v1469 = vadd.f32 0.0, %v1468
  %v1470 = vpop.f32.mrb[0].mxu0
  %v1471 = vpop.f32.mrb[0].mxu0
  %v1472 = vadd.f32 0.0, %v1471
  %v1473 = vpop.f32.mrb[0].mxu0
  %1474 = vmatprep.mubr.bf16.mxu0 0
  %1475 = vmatmul.mubr.bf16.gmra.mrb[0].mxu0 %v989
  %v1476 = vpop.f32.mrb[0].mxu0
  %v1477 = vadd.f32 0.0, %v1476
  %v1478 = vpop.f32.mrb[0].mxu0
  %v1479 = vpop.f32.mrb[0].mxu0
  %v1480 = vadd.f32 0.0, %v1479
  %v1481 = vpop.f32.mrb[0].mxu0
  %1482 = vmatprep.mubr.bf16.mxu0 0
  %1483 = vmatmul.mubr.bf16.gmra.mrb[0].mxu0 %v992
  %v1484 = vpop.f32.mrb[0].mxu0
  %v1485 = vadd.f32 0.0, %v1484
  %v1486 = vpop.f32.mrb[0].mxu0
  %v1487 = vpop.f32.mrb[0].mxu0
  %v1488 = vadd.f32 0.0, %v1487
  %v1489 = vpop.f32.mrb[0].mxu0
  %1490 = vmatprep.mubr.bf16.mxu0 0
  %1491 = vmatmul.mubr.bf16.gmra.mrb[0].mxu0 %v995
  %v1492 = vpop.f32.mrb[0].mxu0
  %v1493 = vadd.f32 0.0, %v1492
  %v1494 = vpop.f32.mrb[0].mxu0
  %v1495 = vpop.f32.mrb[0].mxu0
  %v1496 = vadd.f32 0.0, %v1495
  %v1497 = vpop.f32.mrb[0].mxu0
  %1498 = vmatprep.mubr.bf16.mxu0 0
  %1499 = vmatmul.mubr.bf16.gmra.mrb[0].mxu0 %v998
  %v1500 = vpop.f32.mrb[0].mxu0
  %v1501 = vadd.f32 0.0, %v1500
  %v1502 = vpop.f32.mrb[0].mxu0
  %v1503 = vpop.f32.mrb[0].mxu0
  %v1504 = vadd.f32 0.0, %v1503
  %v1505 = vpop.f32.mrb[0].mxu0
  %1506 = vmatprep.mubr.bf16.mxu0 0
  %1507 = vmatmul.mubr.bf16.gmra.mrb[0].mxu0 %v1001
  %v1508 = vpop.f32.mrb[0].mxu0
  %v1509 = vadd.f32 0.0, %v1508
  %v1510 = vpop.f32.mrb[0].mxu0
  %v1511 = vpop.f32.mrb[0].mxu0
  %v1512 = vadd.f32 0.0, %v1511
  %v1513 = vpop.f32.mrb[0].mxu0
  %1514 = vmatprep.mubr.bf16.mxu0 0
  %1515 = vmatmul.mubr.bf16.gmra.mrb[0].mxu0 %v1004
  %v1516 = vpop.f32.mrb[0].mxu0
  %v1517 = vadd.f32 0.0, %v1516
  %v1518 = vpop.f32.mrb[0].mxu0
  %v1519 = vpop.f32.mrb[0].mxu0
  %v1520 = vadd.f32 0.0, %v1519
  %v1521 = vpop.f32.mrb[0].mxu0
  %1522 = vmatprep.mubr.bf16.mxu0 0
  %1523 = vmatmul.mubr.bf16.gmra.mrb[0].mxu0 %v1007
  %v1524 = vpop.f32.mrb[0].mxu0
  %v1525 = vadd.f32 0.0, %v1524
  %v1526 = vpop.f32.mrb[0].mxu0
  %v1527 = vpop.f32.mrb[0].mxu0
  %v1528 = vadd.f32 0.0, %v1527
  %v1529 = vpop.f32.mrb[0].mxu0
  %1530 = vmatprep.mubr.bf16.mxu0 0
  %1531 = vmatmul.mubr.bf16.gmra.mrb[0].mxu0 %v1010
  %v1532 = vpop.f32.mrb[0].mxu0
  %v1533 = vadd.f32 0.0, %v1532
  %v1534 = vpop.f32.mrb[0].mxu0
  %v1535 = vpop.f32.mrb[0].mxu0
  %v1536 = vadd.f32 0.0, %v1535
  %v1537 = vpop.f32.mrb[0].mxu0
  %1538 = vmatprep.mubr.bf16.mxu0 0
  %1539 = vmatmul.mubr.bf16.gmra.mrb[0].mxu0 %v1013
  %v1540 = vpop.f32.mrb[0].mxu0
  %v1541 = vadd.f32 0.0, %v1540
  %v1542 = vpop.f32.mrb[0].mxu0
  %v1543 = vpop.f32.mrb[0].mxu0
  %v1544 = vadd.f32 0.0, %v1543
  %v1545 = vpop.f32.mrb[0].mxu0
  %1546 = vmatprep.mubr.bf16.mxu0 0
  %1547 = vmatmul.mubr.bf16.gmra.mrb[0].mxu0 %v1016
  %v1548 = vpop.f32.mrb[0].mxu0
  %v1549 = vadd.f32 0.0, %v1548
  %v1550 = vpop.f32.mrb[0].mxu0
  %v1551 = vpop.f32.mrb[0].mxu0
  %v1552 = vadd.f32 0.0, %v1551
  %v1553 = vpop.f32.mrb[0].mxu0
  %1554 = vmatprep.mubr.bf16.mxu0 0
  %1555 = vmatmul.mubr.bf16.gmra.mrb[0].mxu0 %v1019
  %v1556 = vpop.f32.mrb[0].mxu0
  %v1557 = vadd.f32 0.0, %v1556
  %v1558 = vpop.f32.mrb[0].mxu0
  %v1559 = vpop.f32.mrb[0].mxu0
  %v1560 = vadd.f32 0.0, %v1559
  %v1561 = vpop.f32.mrb[0].mxu0
  %1562 = vmatprep.mubr.bf16.mxu0 0
  %1563 = vmatmul.mubr.bf16.gmra.mrb[0].mxu0 %v1022
  %v1564 = vpop.f32.mrb[0].mxu0
  %v1565 = vadd.f32 0.0, %v1564
  %v1566 = vpop.f32.mrb[0].mxu0
  %v1567 = vpop.f32.mrb[0].mxu0
  %v1568 = vadd.f32 0.0, %v1567
  %v1569 = vpop.f32.mrb[0].mxu0
  %1570 = vmatprep.mubr.bf16.mxu0 0
  %1571 = vmatmul.mubr.bf16.gmra.mrb[0].mxu0 %v1025
  %v1572 = vpop.f32.mrb[0].mxu0
  %v1573 = vadd.f32 0.0, %v1572
  %v1574 = vpop.f32.mrb[0].mxu0
  %v1575 = vpop.f32.mrb[0].mxu0
  %v1576 = vadd.f32 0.0, %v1575
  %v1577 = vpop.f32.mrb[0].mxu0
  %1578 = vmatprep.mubr.bf16.mxu0 0
  %1579 = vmatmul.mubr.bf16.gmra.mrb[0].mxu0 %v1028
  %v1580 = vpop.f32.mrb[0].mxu0
  %v1581 = vadd.f32 0.0, %v1580
  %v1582 = vpop.f32.mrb[0].mxu0
  %v1583 = vpop.f32.mrb[0].mxu0
  %v1584 = vadd.f32 0.0, %v1583
  %v1585 = vpop.f32.mrb[0].mxu0
  %1586 = vmatprep.mubr.bf16.mxu0 0
  %1587 = vmatmul.mubr.bf16.gmra.mrb[0].mxu0 %v1031
  %v1588 = vpop.f32.mrb[0].mxu0
  %v1589 = vadd.f32 0.0, %v1588
  %v1590 = vpop.f32.mrb[0].mxu0
  %v1591 = vpop.f32.mrb[0].mxu0
  %v1592 = vadd.f32 0.0, %v1591
  %v1593 = vpop.f32.mrb[0].mxu0
  %1594 = vmatprep.mubr.bf16.mxu0 0
  %1595 = vmatmul.mubr.bf16.gmra.mrb[0].mxu0 %v1034
  %v1596 = vpop.f32.mrb[0].mxu0
  %v1597 = vadd.f32 0.0, %v1596
  %v1598 = vpop.f32.mrb[0].mxu0
  %v1599 = vpop.f32.mrb[0].mxu0
  %v1600 = vadd.f32 0.0, %v1599
  %v1601 = vpop.f32.mrb[0].mxu0
  %1602 = vmatprep.mubr.bf16.mxu0 0
  %1603 = vmatmul.mubr.bf16.gmra.mrb[0].mxu0 %v1037
  %v1604 = vpop.f32.mrb[0].mxu0
  %v1605 = vadd.f32 0.0, %v1604
  %v1606 = vpop.f32.mrb[0].mxu0
  %v1607 = vpop.f32.mrb[0].mxu0
  %v1608 = vadd.f32 0.0, %v1607
  %v1609 = vpop.f32.mrb[0].mxu0
  %1610 = vmatprep.mubr.bf16.mxu0 0
  %1611 = vmatmul.mubr.bf16.gmra.mrb[0].mxu0 %v1040
  %v1612 = vpop.f32.mrb[0].mxu0
  %v1613 = vadd.f32 0.0, %v1612
  %v1614 = vpop.f32.mrb[0].mxu0
  %v1615 = vpop.f32.mrb[0].mxu0
  %v1616 = vadd.f32 0.0, %v1615
  %v1617 = vpop.f32.mrb[0].mxu0
  %1618 = vmatprep.mubr.bf16.mxu0 0
  %1619 = vmatmul.mubr.bf16.gmra.mrb[0].mxu0 %v1043
  %v1620 = vpop.f32.mrb[0].mxu0
  %v1621 = vadd.f32 0.0, %v1620
  %v1622 = vpop.f32.mrb[0].mxu0
  %v1623 = vpop.f32.mrb[0].mxu0
  %v1624 = vadd.f32 0.0, %v1623
  %v1625 = vpop.f32.mrb[0].mxu0
  %1626 = vmatprep.mubr.bf16.mxu0 0
  %1627 = vmatmul.mubr.bf16.gmra.mrb[0].mxu0 %v1046
  %v1628 = vpop.f32.mrb[0].mxu0
  %v1629 = vadd.f32 0.0, %v1628
  %v1630 = vpop.f32.mrb[0].mxu0
  %v1631 = vpop.f32.mrb[0].mxu0
  %v1632 = vadd.f32 0.0, %v1631
  %v1633 = vpop.f32.mrb[0].mxu0
  %1634 = vmatprep.mubr.bf16.mxu0 0
  %1635 = vmatmul.mubr.bf16.gmra.mrb[0].mxu0 %v1049
  %v1636 = vpop.f32.mrb[0].mxu0
  %v1637 = vadd.f32 0.0, %v1636
  %v1638 = vpop.f32.mrb[0].mxu0
  %v1639 = vpop.f32.mrb[0].mxu0
  %v1640 = vadd.f32 0.0, %v1639
  %v1641 = vpop.f32.mrb[0].mxu0
  %1642 = vmatprep.mubr.bf16.mxu0 0
  %1643 = vmatmul.mubr.bf16.gmra.mrb[0].mxu0 %v1052
  %v1644 = vpop.f32.mrb[0].mxu0
  %v1645 = vadd.f32 0.0, %v1644
  %v1646 = vpop.f32.mrb[0].mxu0
  %v1647 = vpop.f32.mrb[0].mxu0
  %v1648 = vadd.f32 0.0, %v1647
  %v1649 = vpop.f32.mrb[0].mxu0
  %1650 = vmatprep.mubr.bf16.mxu0 0
  %1651 = vmatmul.mubr.bf16.gmra.mrb[0].mxu0 %v1055
  %v1652 = vpop.f32.mrb[0].mxu0
  %v1653 = vadd.f32 0.0, %v1652
  %v1654 = vpop.f32.mrb[0].mxu0
  %v1655 = vpop.f32.mrb[0].mxu0
  %v1656 = vadd.f32 0.0, %v1655
  %v1657 = vpop.f32.mrb[0].mxu0
  %1658 = vmatprep.mubr.bf16.mxu0 0
  %1659 = vmatmul.mubr.bf16.gmra.mrb[0].mxu0 %v1058
  %v1660 = vpop.f32.mrb[0].mxu0
  %v1661 = vadd.f32 0.0, %v1660
  %v1662 = vpop.f32.mrb[0].mxu0
  %v1663 = vpop.f32.mrb[0].mxu0
  %v1664 = vadd.f32 0.0, %v1663
  %v1665 = vpop.f32.mrb[0].mxu0
  %1666 = vmatprep.mubr.bf16.mxu0 0
  %1667 = vmatmul.mubr.bf16.gmra.mrb[0].mxu0 %v1061
  %v1668 = vpop.f32.mrb[0].mxu0
  %v1669 = vadd.f32 0.0, %v1668
  %v1670 = vpop.f32.mrb[0].mxu0
  %v1671 = vpop.f32.mrb[0].mxu0
  %v1672 = vadd.f32 0.0, %v1671
  %v1673 = vpop.f32.mrb[0].mxu0
  %1674 = vmatprep.mubr.bf16.mxu0 0
  %1675 = vmatmul.mubr.bf16.gmra.mrb[0].mxu0 %v1064
  %v1676 = vpop.f32.mrb[0].mxu0
  %v1677 = vadd.f32 0.0, %v1676
  %v1678 = vpop.f32.mrb[0].mxu0
  %v1679 = vpop.f32.mrb[0].mxu0
  %v1680 = vadd.f32 0.0, %v1679
  %v1681 = vpop.f32.mrb[0].mxu0
  %1682 = vmatprep.mubr.bf16.mxu0 0
  %1683 = vmatmul.mubr.bf16.gmra.mrb[0].mxu0 %v1067
  %v1684 = vpop.f32.mrb[0].mxu0
  %v1685 = vadd.f32 0.0, %v1684
  %v1686 = vpop.f32.mrb[0].mxu0
  %v1687 = vpop.f32.mrb[0].mxu0
  %v1688 = vadd.f32 0.0, %v1687
  %v1689 = vpop.f32.mrb[0].mxu0
  %1690 = vmatprep.mubr.bf16.mxu0 0
  %1691 = vmatmul.mubr.bf16.gmra.mrb[0].mxu0 %v1070
  %v1692 = vpop.f32.mrb[0].mxu0
  %v1693 = vadd.f32 0.0, %v1692
  %v1694 = vpop.f32.mrb[0].mxu0
  %v1695 = vpop.f32.mrb[0].mxu0
  %v1696 = vadd.f32 0.0, %v1695
  %v1697 = vpop.f32.mrb[0].mxu0
  %1698 = vmatprep.mubr.bf16.mxu0 0
  %1699 = vmatmul.mubr.bf16.gmra.mrb[0].mxu0 %v1073
  %v1700 = vpop.f32.mrb[0].mxu0
  %v1701 = vadd.f32 0.0, %v1700
  %v1702 = vpop.f32.mrb[0].mxu0
  %v1703 = vpop.f32.mrb[0].mxu0
  %v1704 = vadd.f32 0.0, %v1703
  %v1705 = vpop.f32.mrb[0].mxu0
  %1706 = vmatprep.mubr.bf16.mxu0 0
  %1707 = vmatmul.mubr.bf16.gmra.mrb[0].mxu0 %v1076
  %v1708 = vpop.f32.mrb[0].mxu0
  %v1709 = vadd.f32 0.0, %v1708
  %v1710 = vpop.f32.mrb[0].mxu0
  %v1711 = vpop.f32.mrb[0].mxu0
  %v1712 = vadd.f32 0.0, %v1711
  %v1713 = vpop.f32.mrb[0].mxu0
  %1714 = vmatprep.mubr.bf16.mxu0 0
  %1715 = vmatmul.mubr.bf16.gmra.mrb[0].mxu0 %v1079
  %v1716 = vpop.f32.mrb[0].mxu0
  %v1717 = vadd.f32 0.0, %v1716
  %v1718 = vpop.f32.mrb[0].mxu0
  %v1719 = vpop.f32.mrb[0].mxu0
  %v1720 = vadd.f32 0.0, %v1719
  %v1721 = vpop.f32.mrb[0].mxu0
  %1722 = vmatprep.mubr.bf16.mxu0 0
  %1723 = vmatmul.mubr.bf16.gmra.mrb[0].mxu0 %v1082
  %v1724 = vpop.f32.mrb[0].mxu0
  %v1725 = vadd.f32 0.0, %v1724
  %v1726 = vpop.f32.mrb[0].mxu0
  %v1727 = vpop.f32.mrb[0].mxu0
  %v1728 = vadd.f32 0.0, %v1727
  %v1729 = vpop.f32.mrb[0].mxu0
  %1730 = vmatprep.mubr.bf16.mxu0 0
  %1731 = vmatmul.mubr.bf16.gmra.mrb[0].mxu0 %v1085
  %v1732 = vpop.f32.mrb[0].mxu0
  %v1733 = vadd.f32 0.0, %v1732
  %v1734 = vpop.f32.mrb[0].mxu0
  %v1735 = vpop.f32.mrb[0].mxu0
  %v1736 = vadd.f32 0.0, %v1735
  %v1737 = vpop.f32.mrb[0].mxu0
  %1738 = vmatprep.mubr.bf16.mxu0 0
  %1739 = vmatmul.mubr.bf16.gmra.mrb[0].mxu0 %v1088
  %v1740 = vpop.f32.mrb[0].mxu0
  %v1741 = vadd.f32 0.0, %v1740
  %v1742 = vpop.f32.mrb[0].mxu0
  %v1743 = vpop.f32.mrb[0].mxu0
  %v1744 = vadd.f32 0.0, %v1743
  %v1745 = vpop.f32.mrb[0].mxu0
  %1746 = vmatprep.mubr.bf16.mxu0 0
  %1747 = vmatmul.mubr.bf16.gmra.mrb[0].mxu0 %v1091
  %v1748 = vpop.f32.mrb[0].mxu0
  %v1749 = vadd.f32 0.0, %v1748
  %v1750 = vpop.f32.mrb[0].mxu0
  %v1751 = vpop.f32.mrb[0].mxu0
  %v1752 = vadd.f32 0.0, %v1751
  %v1753 = vpop.f32.mrb[0].mxu0
  %1754 = vmatprep.mubr.bf16.mxu0 0
  %1755 = vmatmul.mubr.bf16.gmra.mrb[0].mxu0 %v1094
  %v1756 = vpop.f32.mrb[0].mxu0
  %v1757 = vadd.f32 0.0, %v1756
  %v1758 = vpop.f32.mrb[0].mxu0
  %v1759 = vpop.f32.mrb[0].mxu0
  %v1760 = vadd.f32 0.0, %v1759
  %v1761 = vpop.f32.mrb[0].mxu0
  %1762 = vmatprep.mubr.bf16.mxu0 0
  %1763 = vmatmul.mubr.bf16.gmra.mrb[0].mxu0 %v1097
  %v1764 = vpop.f32.mrb[0].mxu0
  %v1765 = vadd.f32 0.0, %v1764
  %v1766 = vpop.f32.mrb[0].mxu0
  %v1767 = vpop.f32.mrb[0].mxu0
  %v1768 = vadd.f32 0.0, %v1767
  %v1769 = vpop.f32.mrb[0].mxu0
  %1770 = vmatprep.mubr.bf16.mxu0 0
  %1771 = vmatmul.mubr.bf16.gmra.mrb[0].mxu0 %v1100
  %v1772 = vpop.f32.mrb[0].mxu0
  %v1773 = vadd.f32 0.0, %v1772
  %v1774 = vpop.f32.mrb[0].mxu0
  %v1775 = vpop.f32.mrb[0].mxu0
  %v1776 = vadd.f32 0.0, %v1775
  %v1777 = vpop.f32.mrb[0].mxu0
  %1778 = vmatprep.mubr.bf16.mxu0 0
  %1779 = vmatmul.mubr.bf16.gmra.mrb[0].mxu0 %v1103
  %v1780 = vpop.f32.mrb[0].mxu0
  %v1781 = vadd.f32 0.0, %v1780
  %v1782 = vpop.f32.mrb[0].mxu0
  %v1783 = vpop.f32.mrb[0].mxu0
  %v1784 = vadd.f32 0.0, %v1783
  %v1785 = vpop.f32.mrb[0].mxu0
  %1786 = vmatprep.mubr.bf16.mxu0 0
  %1787 = vmatmul.mubr.bf16.gmra.mrb[0].mxu0 %v1106
  %v1788 = vpop.f32.mrb[0].mxu0
  %v1789 = vadd.f32 0.0, %v1788
  %v1790 = vpop.f32.mrb[0].mxu0
  %v1791 = vpop.f32.mrb[0].mxu0
  %v1792 = vadd.f32 0.0, %v1791
  %v1793 = vpop.f32.mrb[0].mxu0
  %1794 = vmatprep.mubr.bf16.mxu0 0
  %1795 = vmatmul.mubr.bf16.gmra.mrb[0].mxu0 %v1109
  %v1796 = vpop.f32.mrb[0].mxu0
  %v1797 = vadd.f32 0.0, %v1796
  %v1798 = vpop.f32.mrb[0].mxu0
  %v1799 = vpop.f32.mrb[0].mxu0
  %v1800 = vadd.f32 0.0, %v1799
  %v1801 = vpop.f32.mrb[0].mxu0
  %1802 = vmatprep.mubr.bf16.mxu0 0
  %1803 = vmatmul.mubr.bf16.gmra.mrb[0].mxu0 %v1112
  %v1804 = vpop.f32.mrb[0].mxu0
  %v1805 = vadd.f32 0.0, %v1804
  %v1806 = vpop.f32.mrb[0].mxu0
  %v1807 = vpop.f32.mrb[0].mxu0
  %v1808 = vadd.f32 0.0, %v1807
  %v1809 = vpop.f32.mrb[0].mxu0
  %1810 = vmatprep.mubr.bf16.mxu0 0
  %1811 = vmatmul.mubr.bf16.gmra.mrb[0].mxu0 %v1115
  %v1812 = vpop.f32.mrb[0].mxu0
  %v1813 = vadd.f32 0.0, %v1812
  %v1814 = vpop.f32.mrb[0].mxu0
  %v1815 = vpop.f32.mrb[0].mxu0
  %v1816 = vadd.f32 0.0, %v1815
  %v1817 = vpop.f32.mrb[0].mxu0
  %1818 = vmatprep.mubr.bf16.mxu0 0
  %1819 = vmatmul.mubr.bf16.gmra.mrb[0].mxu0 %v1118
  %v1820 = vpop.f32.mrb[0].mxu0
  %v1821 = vadd.f32 0.0, %v1820
  %v1822 = vpop.f32.mrb[0].mxu0
  %v1823 = vpop.f32.mrb[0].mxu0
  %v1824 = vadd.f32 0.0, %v1823
  %v1825 = vpop.f32.mrb[0].mxu0
  %1826 = vmatprep.mubr.bf16.mxu0 0
  %1827 = vmatmul.mubr.bf16.gmra.mrb[0].mxu0 %v1121
  %v1828 = vpop.f32.mrb[0].mxu0
  %v1829 = vadd.f32 0.0, %v1828
  %v1830 = vpop.f32.mrb[0].mxu0
  %v1831 = vpop.f32.mrb[0].mxu0
  %v1832 = vadd.f32 0.0, %v1831
  %v1833 = vpop.f32.mrb[0].mxu0
  %1834 = vmatprep.mubr.bf16.mxu0 0
  %1835 = vmatmul.mubr.bf16.gmra.mrb[0].mxu0 %v1124
  %v1836 = vpop.f32.mrb[0].mxu0
  %v1837 = vadd.f32 0.0, %v1836
  %v1838 = vpop.f32.mrb[0].mxu0
  %v1839 = vpop.f32.mrb[0].mxu0
  %v1840 = vadd.f32 0.0, %v1839
  %v1841 = vpop.f32.mrb[0].mxu0
  %1842 = vmatprep.mubr.bf16.mxu0 0
  %1843 = vmatmul.mubr.bf16.gmra.mrb[0].mxu0 %v1127
  %v1844 = vpop.f32.mrb[0].mxu0
  %v1845 = vadd.f32 0.0, %v1844
  %v1846 = vpop.f32.mrb[0].mxu0
  %v1847 = vpop.f32.mrb[0].mxu0
  %v1848 = vadd.f32 0.0, %v1847
  %v1849 = vpop.f32.mrb[0].mxu0
  %1850 = vmatprep.mubr.bf16.mxu0 0
  %1851 = vmatmul.mubr.bf16.gmra.mrb[0].mxu0 %v1130
  %v1852 = vpop.f32.mrb[0].mxu0
  %v1853 = vadd.f32 0.0, %v1852
  %v1854 = vpop.f32.mrb[0].mxu0
  %v1855 = vpop.f32.mrb[0].mxu0
  %v1856 = vadd.f32 0.0, %v1855
  %v1857 = vpop.f32.mrb[0].mxu0
  %1858 = vmatprep.mubr.bf16.mxu0 0
  %1859 = vmatmul.mubr.bf16.gmra.mrb[0].mxu0 %v1133
  %v1860 = vpop.f32.mrb[0].mxu0
  %v1861 = vadd.f32 0.0, %v1860
  %v1862 = vpop.f32.mrb[0].mxu0
  %v1863 = vpop.f32.mrb[0].mxu0
  %v1864 = vadd.f32 0.0, %v1863
  %v1865 = vpop.f32.mrb[0].mxu0
  %1866 = vmatprep.mubr.bf16.mxu0 0
  %1867 = vmatmul.mubr.bf16.gmra.mrb[0].mxu0 %v1136
  %v1868 = vpop.f32.mrb[0].mxu0
  %v1869 = vadd.f32 0.0, %v1868
  %v1870 = vpop.f32.mrb[0].mxu0
  %v1871 = vpop.f32.mrb[0].mxu0
  %v1872 = vadd.f32 0.0, %v1871
  %v1873 = vpop.f32.mrb[0].mxu0
  %1874 = vmatprep.mubr.bf16.mxu0 0
  %1875 = vmatmul.mubr.bf16.gmra.mrb[0].mxu0 %v1139
  %v1876 = vpop.f32.mrb[0].mxu0
  %v1877 = vadd.f32 0.0, %v1876
  %v1878 = vpop.f32.mrb[0].mxu0
  %v1879 = vpop.f32.mrb[0].mxu0
  %v1880 = vadd.f32 0.0, %v1879
  %v1881 = vpop.f32.mrb[0].mxu0
  %1882 = vmatprep.mubr.bf16.mxu0 0
  %1883 = vmatmul.mubr.bf16.gmra.mrb[0].mxu0 %v1142
  %v1884 = vpop.f32.mrb[0].mxu0
  %v1885 = vadd.f32 0.0, %v1884
  %v1886 = vpop.f32.mrb[0].mxu0
  %v1887 = vpop.f32.mrb[0].mxu0
  %v1888 = vadd.f32 0.0, %v1887
  %v1889 = vpop.f32.mrb[0].mxu0
  %1890 = vmatprep.mubr.bf16.mxu0 0
  %1891 = vmatmul.mubr.bf16.gmra.mrb[0].mxu0 %v1145
  %v1892 = vpop.f32.mrb[0].mxu0
  %v1893 = vadd.f32 0.0, %v1892
  %v1894 = vpop.f32.mrb[0].mxu0
  %v1895 = vpop.f32.mrb[0].mxu0
  %v1896 = vadd.f32 0.0, %v1895
  %v1897 = vpop.f32.mrb[0].mxu0
  %1898 = vmatprep.mubr.bf16.mxu0 0
  %1899 = vmatmul.mubr.bf16.gmra.mrb[0].mxu0 %v1148
  %v1900 = vpop.f32.mrb[0].mxu0
  %v1901 = vadd.f32 0.0, %v1900
  %v1902 = vpop.f32.mrb[0].mxu0
  %v1903 = vpop.f32.mrb[0].mxu0
  %v1904 = vadd.f32 0.0, %v1903
  %v1905 = vpop.f32.mrb[0].mxu0
  %1906 = vmatprep.mubr.bf16.mxu0 0
  %1907 = vmatmul.mubr.bf16.gmra.mrb[0].mxu0 %v1151
  %v1908 = vpop.f32.mrb[0].mxu0
  %v1909 = vadd.f32 0.0, %v1908
  %v1910 = vpop.f32.mrb[0].mxu0
  %v1911 = vpop.f32.mrb[0].mxu0
  %v1912 = vadd.f32 0.0, %v1911
  %v1913 = vpop.f32.mrb[0].mxu0
  %1914 = vmatprep.mubr.bf16.mxu0 0
  %1915 = vmatmul.mubr.bf16.gmra.mrb[0].mxu0 %v1154
  %v1916 = vpop.f32.mrb[0].mxu0
  %v1917 = vadd.f32 0.0, %v1916
  %v1918 = vpop.f32.mrb[0].mxu0
  %v1919 = vpop.f32.mrb[0].mxu0
  %v1920 = vadd.f32 0.0, %v1919
  %v1921 = vpop.f32.mrb[0].mxu0
  %1922 = vmatprep.mubr.bf16.mxu0 0
  %1923 = vmatmul.mubr.bf16.gmra.mrb[0].mxu0 %v1157
  %v1924 = vpop.f32.mrb[0].mxu0
  %v1925 = vadd.f32 0.0, %v1924
  %v1926 = vpop.f32.mrb[0].mxu0
  %v1927 = vpop.f32.mrb[0].mxu0
  %v1928 = vadd.f32 0.0, %v1927
  %v1929 = vpop.f32.mrb[0].mxu0
  %1930 = vmatprep.mubr.bf16.mxu0 0
  %1931 = vmatmul.mubr.bf16.gmra.mrb[0].mxu0 %v1160
  %v1932 = vpop.f32.mrb[0].mxu0
  %v1933 = vadd.f32 0.0, %v1932
  %v1934 = vpop.f32.mrb[0].mxu0
  %v1935 = vpop.f32.mrb[0].mxu0
  %v1936 = vadd.f32 0.0, %v1935
  %v1937 = vpop.f32.mrb[0].mxu0
  %1938 = vmatprep.mubr.bf16.mxu0 0
  %1939 = vmatmul.mubr.bf16.gmra.mrb[0].mxu0 %v1163
  %v1940 = vpop.f32.mrb[0].mxu0
  %v1941 = vadd.f32 0.0, %v1940
  %v1942 = vpop.f32.mrb[0].mxu0
  %v1943 = vpop.f32.mrb[0].mxu0
  %v1944 = vadd.f32 0.0, %v1943
  %v1945 = vpop.f32.mrb[0].mxu0
  %1946 = vmatprep.mubr.bf16.mxu0 0
  %1947 = vmatmul.mubr.bf16.gmra.mrb[0].mxu0 %v1166
  %v1948 = vpop.f32.mrb[0].mxu0
  %v1949 = vadd.f32 0.0, %v1948
  %v1950 = vpop.f32.mrb[0].mxu0
  %v1951 = vpop.f32.mrb[0].mxu0
  %v1952 = vadd.f32 0.0, %v1951
  %v1953 = vpop.f32.mrb[0].mxu0
  %1954 = vmatprep.mubr.bf16.mxu0 0
  %1955 = vmatmul.mubr.bf16.gmra.mrb[0].mxu0 %v1169
  %v1956 = vpop.f32.mrb[0].mxu0
  %v1957 = vadd.f32 0.0, %v1956
  %v1958 = vpop.f32.mrb[0].mxu0
  %v1959 = vpop.f32.mrb[0].mxu0
  %v1960 = vadd.f32 0.0, %v1959
  %v1961 = vpop.f32.mrb[0].mxu0
  %1962 = vmatprep.mubr.bf16.mxu0 0
  %1963 = vmatmul.mubr.bf16.gmra.mrb[0].mxu0 %v1172
  %v1964 = vpop.f32.mrb[0].mxu0
  %v1965 = vadd.f32 0.0, %v1964
  %v1966 = vpop.f32.mrb[0].mxu0
  %v1967 = vpop.f32.mrb[0].mxu0
  %v1968 = vadd.f32 0.0, %v1967
  %v1969 = vpop.f32.mrb[0].mxu0
  %1970 = vmatprep.mubr.bf16.mxu0 0
  %1971 = vmatmul.mubr.bf16.gmra.mrb[0].mxu0 %v1175
  %v1972 = vpop.f32.mrb[0].mxu0
  %v1973 = vadd.f32 0.0, %v1972
  %v1974 = vpop.f32.mrb[0].mxu0
  %v1975 = vpop.f32.mrb[0].mxu0
  %v1976 = vadd.f32 0.0, %v1975
  %v1977 = vpop.f32.mrb[0].mxu0
  %1978 = vmatprep.mubr.bf16.mxu0 0
  %1979 = vmatmul.mubr.bf16.gmra.mrb[0].mxu0 %v1178
  %v1980 = vpop.f32.mrb[0].mxu0
  %v1981 = vadd.f32 0.0, %v1980
  %v1982 = vpop.f32.mrb[0].mxu0
  %v1983 = vpop.f32.mrb[0].mxu0
  %v1984 = vadd.f32 0.0, %v1983
  %v1985 = vpop.f32.mrb[0].mxu0
  %1986 = vmatprep.mubr.bf16.mxu0 0
  %1987 = vmatmul.mubr.bf16.gmra.mrb[0].mxu0 %v1181
  %v1988 = vpop.f32.mrb[0].mxu0
  %v1989 = vadd.f32 0.0, %v1988
  %v1990 = vpop.f32.mrb[0].mxu0
  %v1991 = vpop.f32.mrb[0].mxu0
  %v1992 = vadd.f32 0.0, %v1991
  %v1993 = vpop.f32.mrb[0].mxu0
  %1994 = vmatprep.mubr.bf16.mxu0 0
  %1995 = vmatmul.mubr.bf16.gmra.mrb[0].mxu0 %v1184
  %v1996 = vpop.f32.mrb[0].mxu0
  %v1997 = vadd.f32 0.0, %v1996
  %v1998 = vpop.f32.mrb[0].mxu0
  %v1999 = vpop.f32.mrb[0].mxu0
  %v2000 = vadd.f32 0.0, %v1999
  %v2001 = vpop.f32.mrb[0].mxu0
  %2002 = vmatprep.mubr.bf16.mxu0 0
  %2003 = vmatmul.mubr.bf16.gmra.mrb[0].mxu0 %v1187
  %v2004 = vpop.f32.mrb[0].mxu0
  %v2005 = vadd.f32 0.0, %v2004
  %v2006 = vpop.f32.mrb[0].mxu0
  %v2007 = vpop.f32.mrb[0].mxu0
  %v2008 = vadd.f32 0.0, %v2007
  %v2009 = vpop.f32.mrb[0].mxu0
  %2010 = vmatprep.mubr.bf16.mxu0 0
  %2011 = vmatmul.mubr.bf16.gmra.mrb[0].mxu0 %v1190
  %v2012 = vpop.f32.mrb[0].mxu0
  %v2013 = vadd.f32 0.0, %v2012
  %v2014 = vpop.f32.mrb[0].mxu0
  %v2015 = vpop.f32.mrb[0].mxu0
  %v2016 = vadd.f32 0.0, %v2015
  %v2017 = vpop.f32.mrb[0].mxu0
  %2018 = vmatprep.mubr.bf16.mxu0 0
  %2019 = vmatmul.mubr.bf16.gmra.mrb[0].mxu0 %v1193
  %v2020 = vpop.f32.mrb[0].mxu0
  %v2021 = vadd.f32 0.0, %v2020
  %v2022 = vpop.f32.mrb[0].mxu0
  %v2023 = vpop.f32.mrb[0].mxu0
  %v2024 = vadd.f32 0.0, %v2023
  %v2025 = vpop.f32.mrb[0].mxu0
  %2026 = vmatprep.mubr.bf16.mxu0 0
  %2027 = vmatmul.mubr.bf16.gmra.mrb[0].mxu0 %v1196
  %v2028 = vpop.f32.mrb[0].mxu0
  %v2029 = vadd.f32 0.0, %v2028
  %v2030 = vpop.f32.mrb[0].mxu0
  %v2031 = vpop.f32.mrb[0].mxu0
  %v2032 = vadd.f32 0.0, %v2031
  %v2033 = vpop.f32.mrb[0].mxu0
  %2034 = vmatprep.mubr.bf16.mxu0 0
  %2035 = vmatmul.mubr.bf16.gmra.mrb[0].mxu0 %v1199
  %v2036 = vpop.f32.mrb[0].mxu0
  %v2037 = vadd.f32 0.0, %v2036
  %v2038 = vpop.f32.mrb[0].mxu0
  %v2039 = vpop.f32.mrb[0].mxu0
  %v2040 = vadd.f32 0.0, %v2039
  %v2041 = vpop.f32.mrb[0].mxu0
  %2042 = vmatprep.mubr.bf16.mxu0 0
  %2043 = vmatmul.mubr.bf16.gmra.mrb[0].mxu0 %v1202
  %v2044 = vpop.f32.mrb[0].mxu0
  %v2045 = vadd.f32 0.0, %v2044
  %v2046 = vpop.f32.mrb[0].mxu0
  %v2047 = vpop.f32.mrb[0].mxu0
  %v2048 = vadd.f32 0.0, %v2047
  %v2049 = vpop.f32.mrb[0].mxu0
  %2050 = vmatprep.mubr.bf16.mxu0 0
  %2051 = vmatmul.mubr.bf16.gmra.mrb[0].mxu0 %v1205
  %v2052 = vpop.f32.mrb[0].mxu0
  %v2053 = vadd.f32 0.0, %v2052
  %v2054 = vpop.f32.mrb[0].mxu0
  %v2055 = vpop.f32.mrb[0].mxu0
  %v2056 = vadd.f32 0.0, %v2055
  %v2057 = vpop.f32.mrb[0].mxu0
  %2058 = vmatprep.mubr.bf16.mxu0 0
  %2059 = vmatmul.mubr.bf16.gmra.mrb[0].mxu0 %v1208
  %v2060 = vpop.f32.mrb[0].mxu0
  %v2061 = vadd.f32 0.0, %v2060
  %v2062 = vpop.f32.mrb[0].mxu0
  %v2063 = vpop.f32.mrb[0].mxu0
  %v2064 = vadd.f32 0.0, %v2063
  %v2065 = vpop.f32.mrb[0].mxu0
  %2066 = vmatprep.mubr.bf16.mxu0 0
  %2067 = vmatmul.mubr.bf16.gmra.mrb[0].mxu0 %v1211
  %v2068 = vpop.f32.mrb[0].mxu0
  %v2069 = vadd.f32 0.0, %v2068
  %v2070 = vpop.f32.mrb[0].mxu0
  %v2071 = vpop.f32.mrb[0].mxu0
  %v2072 = vadd.f32 0.0, %v2071
  %v2073 = vpop.f32.mrb[0].mxu0
  %2074 = vmatprep.mubr.bf16.mxu0 0
  %2075 = vmatmul.mubr.bf16.gmra.mrb[0].mxu0 %v1214
  %v2076 = vpop.f32.mrb[0].mxu0
  %v2077 = vadd.f32 0.0, %v2076
  %v2078 = vpop.f32.mrb[0].mxu0
  %v2079 = vpop.f32.mrb[0].mxu0
  %v2080 = vadd.f32 0.0, %v2079
  %v2081 = vpop.f32.mrb[0].mxu0
  %2082 = vmatprep.mubr.bf16.mxu0 0
  %2083 = vmatmul.mubr.bf16.gmra.mrb[0].mxu0 %v1217
  %v2084 = vpop.f32.mrb[0].mxu0
  %v2085 = vadd.f32 0.0, %v2084
  %v2086 = vpop.f32.mrb[0].mxu0
  %v2087 = vpop.f32.mrb[0].mxu0
  %v2088 = vadd.f32 0.0, %v2087
  %v2089 = vpop.f32.mrb[0].mxu0
  %2090 = vmatprep.mubr.bf16.mxu0 0
  %2091 = vmatmul.mubr.bf16.gmra.mrb[0].mxu0 %v1220
  %v2092 = vpop.f32.mrb[0].mxu0
  %v2093 = vadd.f32 0.0, %v2092
  %v2094 = vpop.f32.mrb[0].mxu0
  %v2095 = vpop.f32.mrb[0].mxu0
  %v2096 = vadd.f32 0.0, %v2095
  %v2097 = vpop.f32.mrb[0].mxu0
  %2098 = vmatprep.mubr.bf16.mxu0 0
  %2099 = vmatmul.mubr.bf16.gmra.mrb[0].mxu0 %v1223
  %v2100 = vpop.f32.mrb[0].mxu0
  %v2101 = vadd.f32 0.0, %v2100
  %v2102 = vpop.f32.mrb[0].mxu0
  %v2103 = vpop.f32.mrb[0].mxu0
  %v2104 = vadd.f32 0.0, %v2103
  %v2105 = vpop.f32.mrb[0].mxu0
  %2106 = vmatprep.mubr.bf16.mxu0 0
  %2107 = vmatmul.mubr.bf16.gmra.mrb[0].mxu0 %v1226
  %v2108 = vpop.f32.mrb[0].mxu0
  %v2109 = vadd.f32 0.0, %v2108
  %v2110 = vpop.f32.mrb[0].mxu0
  %v2111 = vpop.f32.mrb[0].mxu0
  %v2112 = vadd.f32 0.0, %v2111
  %v2113 = vpop.f32.mrb[0].mxu0
  %2114 = vmatprep.mubr.bf16.mxu0 0
  %2115 = vmatmul.mubr.bf16.gmra.mrb[0].mxu0 %v1229
  %v2116 = vpop.f32.mrb[0].mxu0
  %v2117 = vadd.f32 0.0, %v2116
  %v2118 = vpop.f32.mrb[0].mxu0
  %v2119 = vpop.f32.mrb[0].mxu0
  %v2120 = vadd.f32 0.0, %v2119
  %v2121 = vpop.f32.mrb[0].mxu0
  %2122 = vmatprep.mubr.bf16.mxu0 0
  %2123 = vmatmul.mubr.bf16.gmra.mrb[0].mxu0 %v1232
  %v2124 = vpop.f32.mrb[0].mxu0
  %v2125 = vadd.f32 0.0, %v2124
  %v2126 = vpop.f32.mrb[0].mxu0
  %v2127 = vpop.f32.mrb[0].mxu0
  %v2128 = vadd.f32 0.0, %v2127
  %v2129 = vpop.f32.mrb[0].mxu0
  %2130 = vmatprep.mubr.bf16.mxu0 0
  %2131 = vmatmul.mubr.bf16.gmra.mrb[0].mxu0 %v1235
  %v2132 = vpop.f32.mrb[0].mxu0
  %v2133 = vadd.f32 0.0, %v2132
  %v2134 = vpop.f32.mrb[0].mxu0
  %v2135 = vpop.f32.mrb[0].mxu0
  %v2136 = vadd.f32 0.0, %v2135
  %v2137 = vpop.f32.mrb[0].mxu0
  %2138 = vmatprep.mubr.bf16.mxu0 0
  %2139 = vmatmul.mubr.bf16.gmra.mrb[0].mxu0 %v1238
  %v2140 = vpop.f32.mrb[0].mxu0
  %v2141 = vadd.f32 0.0, %v2140
  %v2142 = vpop.f32.mrb[0].mxu0
  %v2143 = vpop.f32.mrb[0].mxu0
  %v2144 = vadd.f32 0.0, %v2143
  %v2145 = vpop.f32.mrb[0].mxu0
  %2146 = vmatprep.mubr.bf16.mxu0 0
  %2147 = vmatmul.mubr.bf16.gmra.mrb[0].mxu0 %v1241
  %v2148 = vpop.f32.mrb[0].mxu0
  %v2149 = vadd.f32 0.0, %v2148
  %v2150 = vpop.f32.mrb[0].mxu0
  %v2151 = vpop.f32.mrb[0].mxu0
  %v2152 = vadd.f32 0.0, %v2151
  %v2153 = vpop.f32.mrb[0].mxu0
  %2154 = vmatprep.mubr.bf16.mxu0 0
  %2155 = vmatmul.mubr.bf16.gmra.mrb[0].mxu0 %v1244
  %v2156 = vpop.f32.mrb[0].mxu0
  %v2157 = vadd.f32 0.0, %v2156
  %v2158 = vpop.f32.mrb[0].mxu0
  %v2159 = vpop.f32.mrb[0].mxu0
  %v2160 = vadd.f32 0.0, %v2159
  %v2161 = vpop.f32.mrb[0].mxu0
  %2162 = vmatprep.mubr.bf16.mxu0 0
  %2163 = vmatmul.mubr.bf16.gmra.mrb[0].mxu0 %v1247
  %v2164 = vpop.f32.mrb[0].mxu0
  %v2165 = vadd.f32 0.0, %v2164
  %v2166 = vpop.f32.mrb[0].mxu0
  %v2167 = vpop.f32.mrb[0].mxu0
  %v2168 = vadd.f32 0.0, %v2167
  %v2169 = vpop.f32.mrb[0].mxu0
  %2170 = vmatprep.mubr.bf16.mxu0 0
  %2171 = vmatmul.mubr.bf16.gmra.mrb[0].mxu0 %v1250
  %v2172 = vpop.f32.mrb[0].mxu0
  %v2173 = vadd.f32 0.0, %v2172
  %v2174 = vpop.f32.mrb[0].mxu0
  %v2175 = vpop.f32.mrb[0].mxu0
  %v2176 = vadd.f32 0.0, %v2175
  %v2177 = vpop.f32.mrb[0].mxu0
  %2178 = vmatprep.mubr.bf16.mxu0 0
  %2179 = vmatmul.mubr.bf16.gmra.mrb[0].mxu0 %v1253
  %v2180 = vpop.f32.mrb[0].mxu0
  %v2181 = vadd.f32 0.0, %v2180
  %v2182 = vpop.f32.mrb[0].mxu0
  %v2183 = vpop.f32.mrb[0].mxu0
  %v2184 = vadd.f32 0.0, %v2183
  %v2185 = vpop.f32.mrb[0].mxu0
  %2186 = vmatprep.mubr.bf16.mxu0 0
  %2187 = vmatmul.mubr.bf16.gmra.mrb[0].mxu0 %v1256
  %v2188 = vpop.f32.mrb[0].mxu0
  %v2189 = vadd.f32 0.0, %v2188
  %v2190 = vpop.f32.mrb[0].mxu0
  %v2191 = vpop.f32.mrb[0].mxu0
  %v2192 = vadd.f32 0.0, %v2191
  %v2193 = vpop.f32.mrb[0].mxu0
  %2194 = vmatprep.mubr.bf16.mxu0 0
  %2195 = vmatmul.mubr.bf16.gmra.mrb[0].mxu0 %v1259
  %v2196 = vpop.f32.mrb[0].mxu0
  %v2197 = vadd.f32 0.0, %v2196
  %v2198 = vpop.f32.mrb[0].mxu0
  %v2199 = vpop.f32.mrb[0].mxu0
  %v2200 = vadd.f32 0.0, %v2199
  %v2201 = vpop.f32.mrb[0].mxu0
  %2202 = vmatprep.mubr.bf16.mxu0 0
  %2203 = vmatmul.mubr.bf16.gmra.mrb[0].mxu0 %v1262
  %v2204 = vpop.f32.mrb[0].mxu0
  %v2205 = vadd.f32 0.0, %v2204
  %v2206 = vpop.f32.mrb[0].mxu0
  %v2207 = vpop.f32.mrb[0].mxu0
  %v2208 = vadd.f32 0.0, %v2207
  %v2209 = vpop.f32.mrb[0].mxu0
  %2210 = vmatprep.mubr.bf16.mxu0 0
  %2211 = vmatmul.mubr.bf16.gmra.mrb[0].mxu0 %v1265
  %v2212 = vpop.f32.mrb[0].mxu0
  %v2213 = vadd.f32 0.0, %v2212
  %v2214 = vpop.f32.mrb[0].mxu0
  %v2215 = vpop.f32.mrb[0].mxu0
  %v2216 = vadd.f32 0.0, %v2215
  %v2217 = vpop.f32.mrb[0].mxu0
  %2218 = vmatprep.mubr.bf16.mxu0 0
  %2219 = vmatmul.mubr.bf16.gmra.mrb[0].mxu0 %v1268
  %v2220 = vpop.f32.mrb[0].mxu0
  %v2221 = vadd.f32 0.0, %v2220
  %v2222 = vpop.f32.mrb[0].mxu0
  %v2223 = vpop.f32.mrb[0].mxu0
  %v2224 = vadd.f32 0.0, %v2223
  %v2225 = vpop.f32.mrb[0].mxu0
  %2226 = vmatprep.mubr.bf16.mxu0 0
  %2227 = vmatmul.mubr.bf16.gmra.mrb[0].mxu0 %v1271
  %v2228 = vpop.f32.mrb[0].mxu0
  %v2229 = vadd.f32 0.0, %v2228
  %v2230 = vpop.f32.mrb[0].mxu0
  %v2231 = vpop.f32.mrb[0].mxu0
  %v2232 = vadd.f32 0.0, %v2231
  %v2233 = vpop.f32.mrb[0].mxu0
  %2234 = vmatprep.mubr.bf16.mxu0 0
  %2235 = vmatmul.mubr.bf16.gmra.mrb[0].mxu0 %v1274
  %v2236 = vpop.f32.mrb[0].mxu0
  %v2237 = vadd.f32 0.0, %v2236
  %v2238 = vpop.f32.mrb[0].mxu0
  %v2239 = vpop.f32.mrb[0].mxu0
  %v2240 = vadd.f32 0.0, %v2239
  %v2241 = vpop.f32.mrb[0].mxu0
  %2242 = vmatprep.mubr.bf16.mxu0 0
  %2243 = vmatmul.mubr.bf16.gmra.mrb[0].mxu0 %v1277
  %v2244 = vpop.f32.mrb[0].mxu0
  %v2245 = vadd.f32 0.0, %v2244
  %v2246 = vpop.f32.mrb[0].mxu0
  %v2247 = vpop.f32.mrb[0].mxu0
  %v2248 = vadd.f32 0.0, %v2247
  %v2249 = vpop.f32.mrb[0].mxu0
  %2250 = vmatprep.mubr.bf16.mxu0 0
  %2251 = vmatmul.mubr.bf16.gmra.mrb[0].mxu0 %v1280
  %v2252 = vpop.f32.mrb[0].mxu0
  %v2253 = vadd.f32 0.0, %v2252
  %v2254 = vpop.f32.mrb[0].mxu0
  %v2255 = vpop.f32.mrb[0].mxu0
  %v2256 = vadd.f32 0.0, %v2255
  %v2257 = vpop.f32.mrb[0].mxu0
  %2258 = vmatprep.mubr.bf16.mxu0 0
  %2259 = vmatmul.mubr.bf16.gmra.mrb[0].mxu0 %v1283
  %v2260 = vpop.f32.mrb[0].mxu0
  %v2261 = vadd.f32 0.0, %v2260
  %v2262 = vpop.f32.mrb[0].mxu0
  %v2263 = vpop.f32.mrb[0].mxu0
  %v2264 = vadd.f32 0.0, %v2263
  %v2265 = vpop.f32.mrb[0].mxu0
  %2266 = vmatprep.mubr.bf16.mxu0 0
  %2267 = vmatmul.mubr.bf16.gmra.mrb[0].mxu0 %v1286
  %v2268 = vpop.f32.mrb[0].mxu0
  %v2269 = vadd.f32 0.0, %v2268
  %v2270 = vpop.f32.mrb[0].mxu0
  %v2271 = vpop.f32.mrb[0].mxu0
  %v2272 = vadd.f32 0.0, %v2271
  %v2273 = vpop.f32.mrb[0].mxu0
  %2274 = vmatprep.mubr.bf16.mxu0 0
  %2275 = vmatmul.mubr.bf16.gmra.mrb[0].mxu0 %v1289
  %v2276 = vpop.f32.mrb[0].mxu0
  %v2277 = vadd.f32 0.0, %v2276
  %v2278 = vpop.f32.mrb[0].mxu0
  %v2279 = vpop.f32.mrb[0].mxu0
  %v2280 = vadd.f32 0.0, %v2279
  %v2281 = vpop.f32.mrb[0].mxu0
  %2282 = vmatprep.mubr.bf16.mxu0 0
  %2283 = vmatmul.mubr.bf16.gmra.mrb[0].mxu0 %v1292
  %v2284 = vpop.f32.mrb[0].mxu0
  %v2285 = vadd.f32 0.0, %v2284
  %v2286 = vpop.f32.mrb[0].mxu0
  %v2287 = vpop.f32.mrb[0].mxu0
  %v2288 = vadd.f32 0.0, %v2287
  %v2289 = vpop.f32.mrb[0].mxu0
  %2290 = vmatprep.mubr.bf16.mxu0 0
  %2291 = vmatmul.mubr.bf16.gmra.mrb[0].mxu0 %v1295
  %v2292 = vpop.f32.mrb[0].mxu0
  %v2293 = vadd.f32 0.0, %v2292
  %v2294 = vpop.f32.mrb[0].mxu0
  %v2295 = vpop.f32.mrb[0].mxu0
  %v2296 = vadd.f32 0.0, %v2295
  %v2297 = vpop.f32.mrb[0].mxu0
  %2298 = vmatprep.mubr.bf16.mxu0 0
  %2299 = vmatmul.mubr.bf16.gmra.mrb[0].mxu0 %v1298
  %v2300 = vpop.f32.mrb[0].mxu0
  %v2301 = vadd.f32 0.0, %v2300
  %v2302 = vpop.f32.mrb[0].mxu0
  %v2303 = vpop.f32.mrb[0].mxu0
  %v2304 = vadd.f32 0.0, %v2303
  %v2305 = vpop.f32.mrb[0].mxu0
  %2306 = vmatprep.mubr.bf16.mxu0 0
  %2307 = vmatmul.mubr.bf16.gmra.mrb[0].mxu0 %v1301
  %v2308 = vpop.f32.mrb[0].mxu0
  %v2309 = vadd.f32 0.0, %v2308
  %v2310 = vpop.f32.mrb[0].mxu0
  %v2311 = vpop.f32.mrb[0].mxu0
  %v2312 = vadd.f32 0.0, %v2311
  %v2313 = vpop.f32.mrb[0].mxu0
  %2314 = vmatprep.mubr.bf16.mxu0 0
  %2315 = vmatmul.mubr.bf16.gmra.mrb[0].mxu0 %v1304
  %v2316 = vpop.f32.mrb[0].mxu0
  %v2317 = vadd.f32 0.0, %v2316
  %v2318 = vpop.f32.mrb[0].mxu0
  %v2319 = vpop.f32.mrb[0].mxu0
  %v2320 = vadd.f32 0.0, %v2319
  %v2321 = vpop.f32.mrb[0].mxu0
  %2322 = vmatprep.mubr.bf16.mxu0 0
  %2323 = vmatmul.mubr.bf16.gmra.mrb[0].mxu0 %v1307
  %v2324 = vpop.f32.mrb[0].mxu0
  %v2325 = vadd.f32 0.0, %v2324
  %v2326 = vpop.f32.mrb[0].mxu0
  %v2327 = vpop.f32.mrb[0].mxu0
  %v2328 = vadd.f32 0.0, %v2327
  %v2329 = vpop.f32.mrb[0].mxu0
  %2330 = vmatprep.mubr.bf16.mxu0 0
  %2331 = vmatmul.mubr.bf16.gmra.mrb[0].mxu0 %v1310
  %v2332 = vpop.f32.mrb[0].mxu0
  %v2333 = vadd.f32 0.0, %v2332
  %v2334 = vpop.f32.mrb[0].mxu0
  %v2335 = vpop.f32.mrb[0].mxu0
  %v2336 = vadd.f32 0.0, %v2335
  %v2337 = vpop.f32.mrb[0].mxu0
  %2338 = vmatprep.mubr.bf16.mxu0 0
  %2339 = vmatmul.mubr.bf16.gmra.mrb[0].mxu0 %v1313
  %v2340 = vpop.f32.mrb[0].mxu0
  %v2341 = vadd.f32 0.0, %v2340
  %v2342 = vpop.f32.mrb[0].mxu0
  %v2343 = vpop.f32.mrb[0].mxu0
  %v2344 = vadd.f32 0.0, %v2343
  %v2345 = vpop.f32.mrb[0].mxu0
  %2346 = vmatprep.mubr.bf16.mxu0 0
  %2347 = vmatmul.mubr.bf16.gmra.mrb[0].mxu0 %v1316
  %v2348 = vpop.f32.mrb[0].mxu0
  %v2349 = vadd.f32 0.0, %v2348
  %v2350 = vpop.f32.mrb[0].mxu0
  %v2351 = vpop.f32.mrb[0].mxu0
  %v2352 = vadd.f32 0.0, %v2351
  %v2353 = vpop.f32.mrb[0].mxu0
  %2354 = vmatprep.mubr.bf16.mxu0 0
  %2355 = vmatmul.mubr.bf16.gmra.mrb[0].mxu0 %v1319
  %v2356 = vpop.f32.mrb[0].mxu0
  %v2357 = vadd.f32 0.0, %v2356
  %v2358 = vpop.f32.mrb[0].mxu0
  %v2359 = vpop.f32.mrb[0].mxu0
  %v2360 = vadd.f32 0.0, %v2359
  %v2361 = vpop.f32.mrb[0].mxu0
  %2362 = vmatprep.mubr.bf16.mxu0 0
  %2363 = vmatmul.mubr.bf16.gmra.mrb[0].mxu0 %v1322
  %v2364 = vpop.f32.mrb[0].mxu0
  %v2365 = vadd.f32 0.0, %v2364
  %v2366 = vpop.f32.mrb[0].mxu0
  %v2367 = vpop.f32.mrb[0].mxu0
  %v2368 = vadd.f32 0.0, %v2367
  %v2369 = vpop.f32.mrb[0].mxu0
  %2370 = vmatprep.mubr.bf16.mxu0 0
  %2371 = vmatmul.mubr.bf16.gmra.mrb[0].mxu0 %v1325
  %v2372 = vpop.f32.mrb[0].mxu0
  %v2373 = vadd.f32 0.0, %v2372
  %v2374 = vpop.f32.mrb[0].mxu0
  %v2375 = vpop.f32.mrb[0].mxu0
  %v2376 = vadd.f32 0.0, %v2375
  %v2377 = vpop.f32.mrb[0].mxu0
  %2378 = vmatprep.mubr.bf16.mxu0 0
  %2379 = vmatmul.mubr.bf16.gmra.mrb[0].mxu0 %v1328
  %v2380 = vpop.f32.mrb[0].mxu0
  %v2381 = vadd.f32 0.0, %v2380
  %v2382 = vpop.f32.mrb[0].mxu0
  %v2383 = vpop.f32.mrb[0].mxu0
  %v2384 = vadd.f32 0.0, %v2383
  %v2385 = vpop.f32.mrb[0].mxu0
  %2386 = vdwg.mxu0
  %v2387 = vmax.f32 %v1365, 0.0
  %v2388 = vmax.f32 %v1368, 0.0
  %v2389 = vmax.f32 %v1373, 0.0
  %v2390 = vmax.f32 %v1376, 0.0
  %v2391 = vmax.f32 %v1381, 0.0
  %v2392 = vmax.f32 %v1384, 0.0
  %v2393 = vmax.f32 %v1389, 0.0
  %v2394 = vmax.f32 %v1392, 0.0
  %v2395 = vmax.f32 %v1397, 0.0
  %v2396 = vmax.f32 %v1400, 0.0
  %v2397 = vmax.f32 %v1405, 0.0
  %v2398 = vmax.f32 %v1408, 0.0
  %v2399 = vmax.f32 %v1413, 0.0
  %v2400 = vmax.f32 %v1416, 0.0
  %v2401 = vmax.f32 %v1421, 0.0
  %v2402 = vmax.f32 %v1424, 0.0
  %v2403 = vmax.f32 %v1429, 0.0
  %v2404 = vmax.f32 %v1432, 0.0
  %v2405 = vmax.f32 %v1437, 0.0
  %v2406 = vmax.f32 %v1440, 0.0
  %v2407 = vmax.f32 %v1445, 0.0
  %v2408 = vmax.f32 %v1448, 0.0
  %v2409 = vmax.f32 %v1453, 0.0
  %v2410 = vmax.f32 %v1456, 0.0
  %v2411 = vmax.f32 %v1461, 0.0
  %v2412 = vmax.f32 %v1464, 0.0
  %v2413 = vmax.f32 %v1469, 0.0
  %v2414 = vmax.f32 %v1472, 0.0
  %v2415 = vmax.f32 %v1477, 0.0
  %v2416 = vmax.f32 %v1480, 0.0
  %v2417 = vmax.f32 %v1485, 0.0
  %v2418 = vmax.f32 %v1488, 0.0
  %v2419 = vmax.f32 %v1493, 0.0
  %v2420 = vmax.f32 %v1496, 0.0
  %v2421 = vmax.f32 %v1501, 0.0
  %v2422 = vmax.f32 %v1504, 0.0
  %v2423 = vmax.f32 %v1509, 0.0
  %v2424 = vmax.f32 %v1512, 0.0
  %v2425 = vmax.f32 %v1517, 0.0
  %v2426 = vmax.f32 %v1520, 0.0
  %v2427 = vmax.f32 %v1525, 0.0
  %v2428 = vmax.f32 %v1528, 0.0
  %v2429 = vmax.f32 %v1533, 0.0
  %v2430 = vmax.f32 %v1536, 0.0
  %v2431 = vmax.f32 %v1541, 0.0
  %v2432 = vmax.f32 %v1544, 0.0
  %v2433 = vmax.f32 %v1549, 0.0
  %v2434 = vmax.f32 %v1552, 0.0
  %v2435 = vmax.f32 %v1557, 0.0
  %v2436 = vmax.f32 %v1560, 0.0
  %v2437 = vmax.f32 %v1565, 0.0
  %v2438 = vmax.f32 %v1568, 0.0
  %v2439 = vmax.f32 %v1573, 0.0
  %v2440 = vmax.f32 %v1576, 0.0
  %v2441 = vmax.f32 %v1581, 0.0
  %v2442 = vmax.f32 %v1584, 0.0
  %v2443 = vmax.f32 %v1589, 0.0
  %v2444 = vmax.f32 %v1592, 0.0
  %v2445 = vmax.f32 %v1597, 0.0
  %v2446 = vmax.f32 %v1600, 0.0
  %v2447 = vmax.f32 %v1605, 0.0
  %v2448 = vmax.f32 %v1608, 0.0
  %v2449 = vmax.f32 %v1613, 0.0
  %v2450 = vmax.f32 %v1616, 0.0
  %v2451 = vmax.f32 %v1621, 0.0
  %v2452 = vmax.f32 %v1624, 0.0
  %v2453 = vmax.f32 %v1629, 0.0
  %v2454 = vmax.f32 %v1632, 0.0
  %v2455 = vmax.f32 %v1637, 0.0
  %v2456 = vmax.f32 %v1640, 0.0
  %v2457 = vmax.f32 %v1645, 0.0
  %v2458 = vmax.f32 %v1648, 0.0
  %v2459 = vmax.f32 %v1653, 0.0
  %v2460 = vmax.f32 %v1656, 0.0
  %v2461 = vmax.f32 %v1661, 0.0
  %v2462 = vmax.f32 %v1664, 0.0
  %v2463 = vmax.f32 %v1669, 0.0
  %v2464 = vmax.f32 %v1672, 0.0
  %v2465 = vmax.f32 %v1677, 0.0
  %v2466 = vmax.f32 %v1680, 0.0
  %v2467 = vmax.f32 %v1685, 0.0
  %v2468 = vmax.f32 %v1688, 0.0
  %v2469 = vmax.f32 %v1693, 0.0
  %v2470 = vmax.f32 %v1696, 0.0
  %v2471 = vmax.f32 %v1701, 0.0
  %v2472 = vmax.f32 %v1704, 0.0
  %v2473 = vmax.f32 %v1709, 0.0
  %v2474 = vmax.f32 %v1712, 0.0
  %v2475 = vmax.f32 %v1717, 0.0
  %v2476 = vmax.f32 %v1720, 0.0
  %v2477 = vmax.f32 %v1725, 0.0
  %v2478 = vmax.f32 %v1728, 0.0
  %v2479 = vmax.f32 %v1733, 0.0
  %v2480 = vmax.f32 %v1736, 0.0
  %v2481 = vmax.f32 %v1741, 0.0
  %v2482 = vmax.f32 %v1744, 0.0
  %v2483 = vmax.f32 %v1749, 0.0
  %v2484 = vmax.f32 %v1752, 0.0
  %v2485 = vmax.f32 %v1757, 0.0
  %v2486 = vmax.f32 %v1760, 0.0
  %v2487 = vmax.f32 %v1765, 0.0
  %v2488 = vmax.f32 %v1768, 0.0
  %v2489 = vmax.f32 %v1773, 0.0
  %v2490 = vmax.f32 %v1776, 0.0
  %v2491 = vmax.f32 %v1781, 0.0
  %v2492 = vmax.f32 %v1784, 0.0
  %v2493 = vmax.f32 %v1789, 0.0
  %v2494 = vmax.f32 %v1792, 0.0
  %v2495 = vmax.f32 %v1797, 0.0
  %v2496 = vmax.f32 %v1800, 0.0
  %v2497 = vmax.f32 %v1805, 0.0
  %v2498 = vmax.f32 %v1808, 0.0
  %v2499 = vmax.f32 %v1813, 0.0
  %v2500 = vmax.f32 %v1816, 0.0
  %v2501 = vmax.f32 %v1821, 0.0
  %v2502 = vmax.f32 %v1824, 0.0
  %v2503 = vmax.f32 %v1829, 0.0
  %v2504 = vmax.f32 %v1832, 0.0
  %v2505 = vmax.f32 %v1837, 0.0
  %v2506 = vmax.f32 %v1840, 0.0
  %v2507 = vmax.f32 %v1845, 0.0
  %v2508 = vmax.f32 %v1848, 0.0
  %v2509 = vmax.f32 %v1853, 0.0
  %v2510 = vmax.f32 %v1856, 0.0
  %v2511 = vmax.f32 %v1861, 0.0
  %v2512 = vmax.f32 %v1864, 0.0
  %v2513 = vmax.f32 %v1869, 0.0
  %v2514 = vmax.f32 %v1872, 0.0
  %v2515 = vmax.f32 %v1877, 0.0
  %v2516 = vmax.f32 %v1880, 0.0
  %v2517 = vmax.f32 %v1885, 0.0
  %v2518 = vmax.f32 %v1888, 0.0
  %v2519 = vmax.f32 %v1893, 0.0
  %v2520 = vmax.f32 %v1896, 0.0
  %v2521 = vmax.f32 %v1901, 0.0
  %v2522 = vmax.f32 %v1904, 0.0
  %v2523 = vmax.f32 %v1909, 0.0
  %v2524 = vmax.f32 %v1912, 0.0
  %v2525 = vmax.f32 %v1917, 0.0
  %v2526 = vmax.f32 %v1920, 0.0
  %v2527 = vmax.f32 %v1925, 0.0
  %v2528 = vmax.f32 %v1928, 0.0
  %v2529 = vmax.f32 %v1933, 0.0
  %v2530 = vmax.f32 %v1936, 0.0
  %v2531 = vmax.f32 %v1941, 0.0
  %v2532 = vmax.f32 %v1944, 0.0
  %v2533 = vmax.f32 %v1949, 0.0
  %v2534 = vmax.f32 %v1952, 0.0
  %v2535 = vmax.f32 %v1957, 0.0
  %v2536 = vmax.f32 %v1960, 0.0
  %v2537 = vmax.f32 %v1965, 0.0
  %v2538 = vmax.f32 %v1968, 0.0
  %v2539 = vmax.f32 %v1973, 0.0
  %v2540 = vmax.f32 %v1976, 0.0
  %v2541 = vmax.f32 %v1981, 0.0
  %v2542 = vmax.f32 %v1984, 0.0
  %v2543 = vmax.f32 %v1989, 0.0
  %v2544 = vmax.f32 %v1992, 0.0
  %v2545 = vmax.f32 %v1997, 0.0
  %v2546 = vmax.f32 %v2000, 0.0
  %v2547 = vmax.f32 %v2005, 0.0
  %v2548 = vmax.f32 %v2008, 0.0
  %v2549 = vmax.f32 %v2013, 0.0
  %v2550 = vmax.f32 %v2016, 0.0
  %v2551 = vmax.f32 %v2021, 0.0
  %v2552 = vmax.f32 %v2024, 0.0
  %v2553 = vmax.f32 %v2029, 0.0
  %v2554 = vmax.f32 %v2032, 0.0
  %v2555 = vmax.f32 %v2037, 0.0
  %v2556 = vmax.f32 %v2040, 0.0
  %v2557 = vmax.f32 %v2045, 0.0
  %v2558 = vmax.f32 %v2048, 0.0
  %v2559 = vmax.f32 %v2053, 0.0
  %v2560 = vmax.f32 %v2056, 0.0
  %v2561 = vmax.f32 %v2061, 0.0
  %v2562 = vmax.f32 %v2064, 0.0
  %v2563 = vmax.f32 %v2069, 0.0
  %v2564 = vmax.f32 %v2072, 0.0
  %v2565 = vmax.f32 %v2077, 0.0
  %v2566 = vmax.f32 %v2080, 0.0
  %v2567 = vmax.f32 %v2085, 0.0
  %v2568 = vmax.f32 %v2088, 0.0
  %v2569 = vmax.f32 %v2093, 0.0
  %v2570 = vmax.f32 %v2096, 0.0
  %v2571 = vmax.f32 %v2101, 0.0
  %v2572 = vmax.f32 %v2104, 0.0
  %v2573 = vmax.f32 %v2109, 0.0
  %v2574 = vmax.f32 %v2112, 0.0
  %v2575 = vmax.f32 %v2117, 0.0
  %v2576 = vmax.f32 %v2120, 0.0
  %v2577 = vmax.f32 %v2125, 0.0
  %v2578 = vmax.f32 %v2128, 0.0
  %v2579 = vmax.f32 %v2133, 0.0
  %v2580 = vmax.f32 %v2136, 0.0
  %v2581 = vmax.f32 %v2141, 0.0
  %v2582 = vmax.f32 %v2144, 0.0
  %v2583 = vmax.f32 %v2149, 0.0
  %v2584 = vmax.f32 %v2152, 0.0
  %v2585 = vmax.f32 %v2157, 0.0
  %v2586 = vmax.f32 %v2160, 0.0
  %v2587 = vmax.f32 %v2165, 0.0
  %v2588 = vmax.f32 %v2168, 0.0
  %v2589 = vmax.f32 %v2173, 0.0
  %v2590 = vmax.f32 %v2176, 0.0
  %v2591 = vmax.f32 %v2181, 0.0
  %v2592 = vmax.f32 %v2184, 0.0
  %v2593 = vmax.f32 %v2189, 0.0
  %v2594 = vmax.f32 %v2192, 0.0
  %v2595 = vmax.f32 %v2197, 0.0
  %v2596 = vmax.f32 %v2200, 0.0
  %v2597 = vmax.f32 %v2205, 0.0
  %v2598 = vmax.f32 %v2208, 0.0
  %v2599 = vmax.f32 %v2213, 0.0
  %v2600 = vmax.f32 %v2216, 0.0
  %v2601 = vmax.f32 %v2221, 0.0
  %v2602 = vmax.f32 %v2224, 0.0
  %v2603 = vmax.f32 %v2229, 0.0
  %v2604 = vmax.f32 %v2232, 0.0
  %v2605 = vmax.f32 %v2237, 0.0
  %v2606 = vmax.f32 %v2240, 0.0
  %v2607 = vmax.f32 %v2245, 0.0
  %v2608 = vmax.f32 %v2248, 0.0
  %v2609 = vmax.f32 %v2253, 0.0
  %v2610 = vmax.f32 %v2256, 0.0
  %v2611 = vmax.f32 %v2261, 0.0
  %v2612 = vmax.f32 %v2264, 0.0
  %v2613 = vmax.f32 %v2269, 0.0
  %v2614 = vmax.f32 %v2272, 0.0
  %v2615 = vmax.f32 %v2277, 0.0
  %v2616 = vmax.f32 %v2280, 0.0
  %v2617 = vmax.f32 %v2285, 0.0
  %v2618 = vmax.f32 %v2288, 0.0
  %v2619 = vmax.f32 %v2293, 0.0
  %v2620 = vmax.f32 %v2296, 0.0
  %v2621 = vmax.f32 %v2301, 0.0
  %v2622 = vmax.f32 %v2304, 0.0
  %v2623 = vmax.f32 %v2309, 0.0
  %v2624 = vmax.f32 %v2312, 0.0
  %v2625 = vmax.f32 %v2317, 0.0
  %v2626 = vmax.f32 %v2320, 0.0
  %v2627 = vmax.f32 %v2325, 0.0
  %v2628 = vmax.f32 %v2328, 0.0
  %v2629 = vmax.f32 %v2333, 0.0
  %v2630 = vmax.f32 %v2336, 0.0
  %v2631 = vmax.f32 %v2341, 0.0
  %v2632 = vmax.f32 %v2344, 0.0
  %v2633 = vmax.f32 %v2349, 0.0
  %v2634 = vmax.f32 %v2352, 0.0
  %v2635 = vmax.f32 %v2357, 0.0
  %v2636 = vmax.f32 %v2360, 0.0
  %v2637 = vmax.f32 %v2365, 0.0
  %v2638 = vmax.f32 %v2368, 0.0
  %v2639 = vmax.f32 %v2373, 0.0
  %v2640 = vmax.f32 %v2376, 0.0
  %v2641 = vmax.f32 %v2381, 0.0
  %v2642 = vmax.f32 %v2384, 0.0
  %v2643 = vpack.c.bf16 %v2388, %v2387
  %v2644 = vpack.c.bf16 %v2390, %v2389
  %v2645 = vpack.c.bf16 %v2392, %v2391
  %v2646 = vpack.c.bf16 %v2394, %v2393
  %v2647 = vpack.c.bf16 %v2396, %v2395
  %v2648 = vpack.c.bf16 %v2398, %v2397
  %v2649 = vpack.c.bf16 %v2400, %v2399
  %v2650 = vpack.c.bf16 %v2402, %v2401
  %v2651 = vpack.c.bf16 %v2404, %v2403
  %v2652 = vpack.c.bf16 %v2406, %v2405
  %v2653 = vpack.c.bf16 %v2408, %v2407
  %v2654 = vpack.c.bf16 %v2410, %v2409
  %v2655 = vpack.c.bf16 %v2412, %v2411
  %v2656 = vpack.c.bf16 %v2414, %v2413
  %v2657 = vpack.c.bf16 %v2416, %v2415
  %v2658 = vpack.c.bf16 %v2418, %v2417
  %v2659 = vpack.c.bf16 %v2420, %v2419
  %v2660 = vpack.c.bf16 %v2422, %v2421
  %v2661 = vpack.c.bf16 %v2424, %v2423
  %v2662 = vpack.c.bf16 %v2426, %v2425
  %v2663 = vpack.c.bf16 %v2428, %v2427
  %v2664 = vpack.c.bf16 %v2430, %v2429
  %v2665 = vpack.c.bf16 %v2432, %v2431
  %v2666 = vpack.c.bf16 %v2434, %v2433
  %v2667 = vpack.c.bf16 %v2436, %v2435
  %v2668 = vpack.c.bf16 %v2438, %v2437
  %v2669 = vpack.c.bf16 %v2440, %v2439
  %v2670 = vpack.c.bf16 %v2442, %v2441
  %v2671 = vpack.c.bf16 %v2444, %v2443
  %v2672 = vpack.c.bf16 %v2446, %v2445
  %v2673 = vpack.c.bf16 %v2448, %v2447
  %v2674 = vpack.c.bf16 %v2450, %v2449
  %v2675 = vpack.c.bf16 %v2452, %v2451
  %v2676 = vpack.c.bf16 %v2454, %v2453
  %v2677 = vpack.c.bf16 %v2456, %v2455
  %v2678 = vpack.c.bf16 %v2458, %v2457
  %v2679 = vpack.c.bf16 %v2460, %v2459
  %v2680 = vpack.c.bf16 %v2462, %v2461
  %v2681 = vpack.c.bf16 %v2464, %v2463
  %v2682 = vpack.c.bf16 %v2466, %v2465
  %v2683 = vpack.c.bf16 %v2468, %v2467
  %v2684 = vpack.c.bf16 %v2470, %v2469
  %v2685 = vpack.c.bf16 %v2472, %v2471
  %v2686 = vpack.c.bf16 %v2474, %v2473
  %v2687 = vpack.c.bf16 %v2476, %v2475
  %v2688 = vpack.c.bf16 %v2478, %v2477
  %v2689 = vpack.c.bf16 %v2480, %v2479
  %v2690 = vpack.c.bf16 %v2482, %v2481
  %v2691 = vpack.c.bf16 %v2484, %v2483
  %v2692 = vpack.c.bf16 %v2486, %v2485
  %v2693 = vpack.c.bf16 %v2488, %v2487
  %v2694 = vpack.c.bf16 %v2490, %v2489
  %v2695 = vpack.c.bf16 %v2492, %v2491
  %v2696 = vpack.c.bf16 %v2494, %v2493
  %v2697 = vpack.c.bf16 %v2496, %v2495
  %v2698 = vpack.c.bf16 %v2498, %v2497
  %v2699 = vpack.c.bf16 %v2500, %v2499
  %v2700 = vpack.c.bf16 %v2502, %v2501
  %v2701 = vpack.c.bf16 %v2504, %v2503
  %v2702 = vpack.c.bf16 %v2506, %v2505
  %v2703 = vpack.c.bf16 %v2508, %v2507
  %v2704 = vpack.c.bf16 %v2510, %v2509
  %v2705 = vpack.c.bf16 %v2512, %v2511
  %v2706 = vpack.c.bf16 %v2514, %v2513
  %v2707 = vpack.c.bf16 %v2516, %v2515
  %v2708 = vpack.c.bf16 %v2518, %v2517
  %v2709 = vpack.c.bf16 %v2520, %v2519
  %v2710 = vpack.c.bf16 %v2522, %v2521
  %v2711 = vpack.c.bf16 %v2524, %v2523
  %v2712 = vpack.c.bf16 %v2526, %v2525
  %v2713 = vpack.c.bf16 %v2528, %v2527
  %v2714 = vpack.c.bf16 %v2530, %v2529
  %v2715 = vpack.c.bf16 %v2532, %v2531
  %v2716 = vpack.c.bf16 %v2534, %v2533
  %v2717 = vpack.c.bf16 %v2536, %v2535
  %v2718 = vpack.c.bf16 %v2538, %v2537
  %v2719 = vpack.c.bf16 %v2540, %v2539
  %v2720 = vpack.c.bf16 %v2542, %v2541
  %v2721 = vpack.c.bf16 %v2544, %v2543
  %v2722 = vpack.c.bf16 %v2546, %v2545
  %v2723 = vpack.c.bf16 %v2548, %v2547
  %v2724 = vpack.c.bf16 %v2550, %v2549
  %v2725 = vpack.c.bf16 %v2552, %v2551
  %v2726 = vpack.c.bf16 %v2554, %v2553
  %v2727 = vpack.c.bf16 %v2556, %v2555
  %v2728 = vpack.c.bf16 %v2558, %v2557
  %v2729 = vpack.c.bf16 %v2560, %v2559
  %v2730 = vpack.c.bf16 %v2562, %v2561
  %v2731 = vpack.c.bf16 %v2564, %v2563
  %v2732 = vpack.c.bf16 %v2566, %v2565
  %v2733 = vpack.c.bf16 %v2568, %v2567
  %v2734 = vpack.c.bf16 %v2570, %v2569
  %v2735 = vpack.c.bf16 %v2572, %v2571
  %v2736 = vpack.c.bf16 %v2574, %v2573
  %v2737 = vpack.c.bf16 %v2576, %v2575
  %v2738 = vpack.c.bf16 %v2578, %v2577
  %v2739 = vpack.c.bf16 %v2580, %v2579
  %v2740 = vpack.c.bf16 %v2582, %v2581
  %v2741 = vpack.c.bf16 %v2584, %v2583
  %v2742 = vpack.c.bf16 %v2586, %v2585
  %v2743 = vpack.c.bf16 %v2588, %v2587
  %v2744 = vpack.c.bf16 %v2590, %v2589
  %v2745 = vpack.c.bf16 %v2592, %v2591
  %v2746 = vpack.c.bf16 %v2594, %v2593
  %v2747 = vpack.c.bf16 %v2596, %v2595
  %v2748 = vpack.c.bf16 %v2598, %v2597
  %v2749 = vpack.c.bf16 %v2600, %v2599
  %v2750 = vpack.c.bf16 %v2602, %v2601
  %v2751 = vpack.c.bf16 %v2604, %v2603
  %v2752 = vpack.c.bf16 %v2606, %v2605
  %v2753 = vpack.c.bf16 %v2608, %v2607
  %v2754 = vpack.c.bf16 %v2610, %v2609
  %v2755 = vpack.c.bf16 %v2612, %v2611
  %v2756 = vpack.c.bf16 %v2614, %v2613
  %v2757 = vpack.c.bf16 %v2616, %v2615
  %v2758 = vpack.c.bf16 %v2618, %v2617
  %v2759 = vpack.c.bf16 %v2620, %v2619
  %v2760 = vpack.c.bf16 %v2622, %v2621
  %v2761 = vpack.c.bf16 %v2624, %v2623
  %v2762 = vpack.c.bf16 %v2626, %v2625
  %v2763 = vpack.c.bf16 %v2628, %v2627
  %v2764 = vpack.c.bf16 %v2630, %v2629
  %v2765 = vpack.c.bf16 %v2632, %v2631
  %v2766 = vpack.c.bf16 %v2634, %v2633
  %v2767 = vpack.c.bf16 %v2636, %v2635
  %v2768 = vpack.c.bf16 %v2638, %v2637
  %v2769 = vpack.c.bf16 %v2640, %v2639
  %v2770 = vpack.c.bf16 %v2642, %v2641
  %v2771 = vld [vmem:[%s2] sm:$0xff]
  %v2772 = vld [vmem:[%s2 + $0x8] sm:$0xff]
  %v2773 = vld [vmem:[%s2 + $0x10] sm:$0xff]
  %v2774 = vld [vmem:[%s2 + $0x18] sm:$0xff]
  %v2775 = vld [vmem:[%s7] ss:$8 sm:$0x3]
  %v2777 = vlaneseq
  %v2778 = vshrl.u32 %v2777, 7
  %v2779 = vsub.s32 0, %v2778
  %v2780 = vrot.slane %v2775, %v2779
  %v2781 = vlaneseq
  %v2782 = vshrl.u32 %v2781, 7
  %v2783 = vsub.s32 1, %v2782
  %v2784 = vrot.slane %v2775, %v2783
  %v2791 = vunpack.c.l.b16 %v2771
  %v2792 = vunpack.c.h.b16 %v2771
  %v2793 = vunpack.c.l.b16 %v2772
  %v2794 = vunpack.c.h.b16 %v2772
  %v2795 = vunpack.c.l.b16 %v2773
  %v2796 = vunpack.c.h.b16 %v2773
  %v2797 = vunpack.c.l.b16 %v2774
  %v2798 = vunpack.c.h.b16 %v2774
  %v2799 = vpack.c.b16 %v2793, %v2791
  %v2800 = vpack.c.b16 %v2794, %v2792
  %v2801 = vpack.c.b16 %v2797, %v2795
  %v2802 = vpack.c.b16 %v2798, %v2796
  %v2808 = vsel %vm945, %v2643, 0
  %v2811 = vsel %vm945, %v2644, 0
  %v2814 = vsel %vm945, %v2645, 0
  %v2817 = vsel %vm945, %v2646, 0
  %v2820 = vsel %vm945, %v2647, 0
  %v2823 = vsel %vm945, %v2648, 0
  %v2826 = vsel %vm945, %v2649, 0
  %v2829 = vsel %vm945, %v2650, 0
  %v2832 = vsel %vm945, %v2651, 0
  %v2835 = vsel %vm945, %v2652, 0
  %v2838 = vsel %vm945, %v2653, 0
  %v2841 = vsel %vm945, %v2654, 0
  %v2844 = vsel %vm945, %v2655, 0
  %v2847 = vsel %vm945, %v2656, 0
  %v2850 = vsel %vm945, %v2657, 0
  %v2853 = vsel %vm945, %v2658, 0
  %v2856 = vsel %vm945, %v2659, 0
  %v2859 = vsel %vm945, %v2660, 0
  %v2862 = vsel %vm945, %v2661, 0
  %v2865 = vsel %vm945, %v2662, 0
  %v2868 = vsel %vm945, %v2663, 0
  %v2871 = vsel %vm945, %v2664, 0
  %v2874 = vsel %vm945, %v2665, 0
  %v2877 = vsel %vm945, %v2666, 0
  %v2880 = vsel %vm945, %v2667, 0
  %v2883 = vsel %vm945, %v2668, 0
  %v2886 = vsel %vm945, %v2669, 0
  %v2889 = vsel %vm945, %v2670, 0
  %v2892 = vsel %vm945, %v2671, 0
  %v2895 = vsel %vm945, %v2672, 0
  %v2898 = vsel %vm945, %v2673, 0
  %v2901 = vsel %vm945, %v2674, 0
  %v2904 = vsel %vm945, %v2675, 0
  %v2907 = vsel %vm945, %v2676, 0
  %v2910 = vsel %vm945, %v2677, 0
  %v2913 = vsel %vm945, %v2678, 0
  %v2916 = vsel %vm945, %v2679, 0
  %v2919 = vsel %vm945, %v2680, 0
  %v2922 = vsel %vm945, %v2681, 0
  %v2925 = vsel %vm945, %v2682, 0
  %v2928 = vsel %vm945, %v2683, 0
  %v2931 = vsel %vm945, %v2684, 0
  %v2934 = vsel %vm945, %v2685, 0
  %v2937 = vsel %vm945, %v2686, 0
  %v2940 = vsel %vm945, %v2687, 0
  %v2943 = vsel %vm945, %v2688, 0
  %v2946 = vsel %vm945, %v2689, 0
  %v2949 = vsel %vm945, %v2690, 0
  %v2952 = vsel %vm945, %v2691, 0
  %v2955 = vsel %vm945, %v2692, 0
  %v2958 = vsel %vm945, %v2693, 0
  %v2961 = vsel %vm945, %v2694, 0
  %v2964 = vsel %vm945, %v2695, 0
  %v2967 = vsel %vm945, %v2696, 0
  %v2970 = vsel %vm945, %v2697, 0
  %v2973 = vsel %vm945, %v2698, 0
  %v2976 = vsel %vm945, %v2699, 0
  %v2979 = vsel %vm945, %v2700, 0
  %v2982 = vsel %vm945, %v2701, 0
  %v2985 = vsel %vm945, %v2702, 0
  %v2988 = vsel %vm945, %v2703, 0
  %v2991 = vsel %vm945, %v2704, 0
  %v2994 = vsel %vm945, %v2705, 0
  %v2997 = vsel %vm945, %v2706, 0
  %v3000 = vsel %vm945, %v2707, 0
  %v3003 = vsel %vm945, %v2708, 0
  %v3006 = vsel %vm945, %v2709, 0
  %v3009 = vsel %vm945, %v2710, 0
  %v3012 = vsel %vm945, %v2711, 0
  %v3015 = vsel %vm945, %v2712, 0
  %v3018 = vsel %vm945, %v2713, 0
  %v3021 = vsel %vm945, %v2714, 0
  %v3024 = vsel %vm945, %v2715, 0
  %v3027 = vsel %vm945, %v2716, 0
  %v3030 = vsel %vm945, %v2717, 0
  %v3033 = vsel %vm945, %v2718, 0
  %v3036 = vsel %vm945, %v2719, 0
  %v3039 = vsel %vm945, %v2720, 0
  %v3042 = vsel %vm945, %v2721, 0
  %v3045 = vsel %vm945, %v2722, 0
  %v3048 = vsel %vm945, %v2723, 0
  %v3051 = vsel %vm945, %v2724, 0
  %v3054 = vsel %vm945, %v2725, 0
  %v3057 = vsel %vm945, %v2726, 0
  %v3060 = vsel %vm945, %v2727, 0
  %v3063 = vsel %vm945, %v2728, 0
  %v3066 = vsel %vm945, %v2729, 0
  %v3069 = vsel %vm945, %v2730, 0
  %v3072 = vsel %vm945, %v2731, 0
  %v3075 = vsel %vm945, %v2732, 0
  %v3078 = vsel %vm945, %v2733, 0
  %v3081 = vsel %vm945, %v2734, 0
  %v3084 = vsel %vm945, %v2735, 0
  %v3087 = vsel %vm945, %v2736, 0
  %v3090 = vsel %vm945, %v2737, 0
  %v3093 = vsel %vm945, %v2738, 0
  %v3096 = vsel %vm945, %v2739, 0
  %v3099 = vsel %vm945, %v2740, 0
  %v3102 = vsel %vm945, %v2741, 0
  %v3105 = vsel %vm945, %v2742, 0
  %v3108 = vsel %vm945, %v2743, 0
  %v3111 = vsel %vm945, %v2744, 0
  %v3114 = vsel %vm945, %v2745, 0
  %v3117 = vsel %vm945, %v2746, 0
  %v3120 = vsel %vm945, %v2747, 0
  %v3123 = vsel %vm945, %v2748, 0
  %v3126 = vsel %vm945, %v2749, 0
  %v3129 = vsel %vm945, %v2750, 0
  %v3132 = vsel %vm945, %v2751, 0
  %v3135 = vsel %vm945, %v2752, 0
  %v3138 = vsel %vm945, %v2753, 0
  %v3141 = vsel %vm945, %v2754, 0
  %v3144 = vsel %vm945, %v2755, 0
  %v3147 = vsel %vm945, %v2756, 0
  %v3150 = vsel %vm945, %v2757, 0
  %v3153 = vsel %vm945, %v2758, 0
  %v3156 = vsel %vm945, %v2759, 0
  %v3159 = vsel %vm945, %v2760, 0
  %v3162 = vsel %vm945, %v2761, 0
  %v3165 = vsel %vm945, %v2762, 0
  %v3168 = vsel %vm945, %v2763, 0
  %v3171 = vsel %vm945, %v2764, 0
  %v3174 = vsel %vm945, %v2765, 0
  %v3177 = vsel %vm945, %v2766, 0
  %v3180 = vsel %vm945, %v2767, 0
  %v3183 = vsel %vm945, %v2768, 0
  %v3186 = vsel %vm945, %v2769, 0
  %v3189 = vsel %vm945, %v2770, 0
  %3191 = vmatprep.subr.bf16.mxu0 %v2800
  %3192 = vmatpush1.bf16.msra.mxu0 %v2799
  %3193 = vmatprep.subr.bf16.mxu0 %v2802
  %3194 = vmatpush1.bf16.msra.mxu0 %v2801
  %3195 = vmatprep.subr.bf16.mxu0 0
  %3196 = vmatpush1.bf16.msra.mxu0 0
  %3197 = vmatprep.subr.bf16.mxu0 0
  %3198 = vmatpush1.bf16.msra.mxu0 0
  %3199 = vmatprep.subr.bf16.mxu0 0
  %3200 = vmatpush1.bf16.msra.mxu0 0
  %3201 = vmatprep.subr.bf16.mxu0 0
  %3202 = vmatpush1.bf16.msra.mxu0 0
  %3203 = vmatprep.subr.bf16.mxu0 0
  %3204 = vmatpush1.bf16.msra.mxu0 0
  %3205 = vmatprep.subr.bf16.mxu0 0
  %3206 = vmatpush1.bf16.msra.mxu0 0
  %3207 = vmatprep.subr.bf16.mxu0 0
  %3208 = vmatpush1.bf16.msra.mxu0 0
  %3209 = vmatprep.subr.bf16.mxu0 0
  %3210 = vmatpush1.bf16.msra.mxu0 0
  %3211 = vmatprep.subr.bf16.mxu0 0
  %3212 = vmatpush1.bf16.msra.mxu0 0
  %3213 = vmatprep.subr.bf16.mxu0 0
  %3214 = vmatpush1.bf16.msra.mxu0 0
  %3215 = vmatprep.subr.bf16.mxu0 0
  %3216 = vmatpush1.bf16.msra.mxu0 0
  %3217 = vmatprep.subr.bf16.mxu0 0
  %3218 = vmatpush1.bf16.msra.mxu0 0
  %3219 = vmatprep.subr.bf16.mxu0 0
  %3220 = vmatpush1.bf16.msra.mxu0 0
  %3221 = vmatprep.subr.bf16.mxu0 0
  %3222 = vmatpush1.bf16.msra.mxu0 0
  %3223 = vmatprep.mubr.bf16.mxu0 0
  %3224 = vmatmul.mubr.bf16.gmra.mrb[0].mxu0 %v2808
  %v3225 = vpop.f32.mrb[0].mxu0
  %v3226 = vadd.f32 %v2780, %v3225
  %v3227 = vpop.f32.mrb[0].mxu0
  %v3228 = vadd.f32 %v2784, %v3227
  %v3229 = vpop.f32.mrb[0].mxu0
  %v3230 = vadd.f32 %v2780, %v3229
  %v3231 = vpop.f32.mrb[0].mxu0
  %v3232 = vadd.f32 %v2784, %v3231
  %3233 = vmatprep.mubr.bf16.mxu0 0
  %3234 = vmatmul.mubr.bf16.gmra.mrb[0].mxu0 %v2811
  %v3235 = vpop.f32.mrb[0].mxu0
  %v3236 = vadd.f32 %v2780, %v3235
  %v3237 = vpop.f32.mrb[0].mxu0
  %v3238 = vadd.f32 %v2784, %v3237
  %v3239 = vpop.f32.mrb[0].mxu0
  %v3240 = vadd.f32 %v2780, %v3239
  %v3241 = vpop.f32.mrb[0].mxu0
  %v3242 = vadd.f32 %v2784, %v3241
  %3243 = vmatprep.mubr.bf16.mxu0 0
  %3244 = vmatmul.mubr.bf16.gmra.mrb[0].mxu0 %v2814
  %v3245 = vpop.f32.mrb[0].mxu0
  %v3246 = vadd.f32 %v2780, %v3245
  %v3247 = vpop.f32.mrb[0].mxu0
  %v3248 = vadd.f32 %v2784, %v3247
  %v3249 = vpop.f32.mrb[0].mxu0
  %v3250 = vadd.f32 %v2780, %v3249
  %v3251 = vpop.f32.mrb[0].mxu0
  %v3252 = vadd.f32 %v2784, %v3251
  %3253 = vmatprep.mubr.bf16.mxu0 0
  %3254 = vmatmul.mubr.bf16.gmra.mrb[0].mxu0 %v2817
  %v3255 = vpop.f32.mrb[0].mxu0
  %v3256 = vadd.f32 %v2780, %v3255
  %v3257 = vpop.f32.mrb[0].mxu0
  %v3258 = vadd.f32 %v2784, %v3257
  %v3259 = vpop.f32.mrb[0].mxu0
  %v3260 = vadd.f32 %v2780, %v3259
  %v3261 = vpop.f32.mrb[0].mxu0
  %v3262 = vadd.f32 %v2784, %v3261
  %3263 = vmatprep.mubr.bf16.mxu0 0
  %3264 = vmatmul.mubr.bf16.gmra.mrb[0].mxu0 %v2820
  %v3265 = vpop.f32.mrb[0].mxu0
  %v3266 = vadd.f32 %v2780, %v3265
  %v3267 = vpop.f32.mrb[0].mxu0
  %v3268 = vadd.f32 %v2784, %v3267
  %v3269 = vpop.f32.mrb[0].mxu0
  %v3270 = vadd.f32 %v2780, %v3269
  %v3271 = vpop.f32.mrb[0].mxu0
  %v3272 = vadd.f32 %v2784, %v3271
  %3273 = vmatprep.mubr.bf16.mxu0 0
  %3274 = vmatmul.mubr.bf16.gmra.mrb[0].mxu0 %v2823
  %v3275 = vpop.f32.mrb[0].mxu0
  %v3276 = vadd.f32 %v2780, %v3275
  %v3277 = vpop.f32.mrb[0].mxu0
  %v3278 = vadd.f32 %v2784, %v3277
  %v3279 = vpop.f32.mrb[0].mxu0
  %v3280 = vadd.f32 %v2780, %v3279
  %v3281 = vpop.f32.mrb[0].mxu0
  %v3282 = vadd.f32 %v2784, %v3281
  %3283 = vmatprep.mubr.bf16.mxu0 0
  %3284 = vmatmul.mubr.bf16.gmra.mrb[0].mxu0 %v2826
  %v3285 = vpop.f32.mrb[0].mxu0
  %v3286 = vadd.f32 %v2780, %v3285
  %v3287 = vpop.f32.mrb[0].mxu0
  %v3288 = vadd.f32 %v2784, %v3287
  %v3289 = vpop.f32.mrb[0].mxu0
  %v3290 = vadd.f32 %v2780, %v3289
  %v3291 = vpop.f32.mrb[0].mxu0
  %v3292 = vadd.f32 %v2784, %v3291
  %3293 = vmatprep.mubr.bf16.mxu0 0
  %3294 = vmatmul.mubr.bf16.gmra.mrb[0].mxu0 %v2829
  %v3295 = vpop.f32.mrb[0].mxu0
  %v3296 = vadd.f32 %v2780, %v3295
  %v3297 = vpop.f32.mrb[0].mxu0
  %v3298 = vadd.f32 %v2784, %v3297
  %v3299 = vpop.f32.mrb[0].mxu0
  %v3300 = vadd.f32 %v2780, %v3299
  %v3301 = vpop.f32.mrb[0].mxu0
  %v3302 = vadd.f32 %v2784, %v3301
  %3303 = vmatprep.mubr.bf16.mxu0 0
  %3304 = vmatmul.mubr.bf16.gmra.mrb[0].mxu0 %v2832
  %v3305 = vpop.f32.mrb[0].mxu0
  %v3306 = vadd.f32 %v2780, %v3305
  %v3307 = vpop.f32.mrb[0].mxu0
  %v3308 = vadd.f32 %v2784, %v3307
  %v3309 = vpop.f32.mrb[0].mxu0
  %v3310 = vadd.f32 %v2780, %v3309
  %v3311 = vpop.f32.mrb[0].mxu0
  %v3312 = vadd.f32 %v2784, %v3311
  %3313 = vmatprep.mubr.bf16.mxu0 0
  %3314 = vmatmul.mubr.bf16.gmra.mrb[0].mxu0 %v2835
  %v3315 = vpop.f32.mrb[0].mxu0
  %v3316 = vadd.f32 %v2780, %v3315
  %v3317 = vpop.f32.mrb[0].mxu0
  %v3318 = vadd.f32 %v2784, %v3317
  %v3319 = vpop.f32.mrb[0].mxu0
  %v3320 = vadd.f32 %v2780, %v3319
  %v3321 = vpop.f32.mrb[0].mxu0
  %v3322 = vadd.f32 %v2784, %v3321
  %3323 = vmatprep.mubr.bf16.mxu0 0
  %3324 = vmatmul.mubr.bf16.gmra.mrb[0].mxu0 %v2838
  %v3325 = vpop.f32.mrb[0].mxu0
  %v3326 = vadd.f32 %v2780, %v3325
  %v3327 = vpop.f32.mrb[0].mxu0
  %v3328 = vadd.f32 %v2784, %v3327
  %v3329 = vpop.f32.mrb[0].mxu0
  %v3330 = vadd.f32 %v2780, %v3329
  %v3331 = vpop.f32.mrb[0].mxu0
  %v3332 = vadd.f32 %v2784, %v3331
  %3333 = vmatprep.mubr.bf16.mxu0 0
  %3334 = vmatmul.mubr.bf16.gmra.mrb[0].mxu0 %v2841
  %v3335 = vpop.f32.mrb[0].mxu0
  %v3336 = vadd.f32 %v2780, %v3335
  %v3337 = vpop.f32.mrb[0].mxu0
  %v3338 = vadd.f32 %v2784, %v3337
  %v3339 = vpop.f32.mrb[0].mxu0
  %v3340 = vadd.f32 %v2780, %v3339
  %v3341 = vpop.f32.mrb[0].mxu0
  %v3342 = vadd.f32 %v2784, %v3341
  %3343 = vmatprep.mubr.bf16.mxu0 0
  %3344 = vmatmul.mubr.bf16.gmra.mrb[0].mxu0 %v2844
  %v3345 = vpop.f32.mrb[0].mxu0
  %v3346 = vadd.f32 %v2780, %v3345
  %v3347 = vpop.f32.mrb[0].mxu0
  %v3348 = vadd.f32 %v2784, %v3347
  %v3349 = vpop.f32.mrb[0].mxu0
  %v3350 = vadd.f32 %v2780, %v3349
  %v3351 = vpop.f32.mrb[0].mxu0
  %v3352 = vadd.f32 %v2784, %v3351
  %3353 = vmatprep.mubr.bf16.mxu0 0
  %3354 = vmatmul.mubr.bf16.gmra.mrb[0].mxu0 %v2847
  %v3355 = vpop.f32.mrb[0].mxu0
  %v3356 = vadd.f32 %v2780, %v3355
  %v3357 = vpop.f32.mrb[0].mxu0
  %v3358 = vadd.f32 %v2784, %v3357
  %v3359 = vpop.f32.mrb[0].mxu0
  %v3360 = vadd.f32 %v2780, %v3359
  %v3361 = vpop.f32.mrb[0].mxu0
  %v3362 = vadd.f32 %v2784, %v3361
  %3363 = vmatprep.mubr.bf16.mxu0 0
  %3364 = vmatmul.mubr.bf16.gmra.mrb[0].mxu0 %v2850
  %v3365 = vpop.f32.mrb[0].mxu0
  %v3366 = vadd.f32 %v2780, %v3365
  %v3367 = vpop.f32.mrb[0].mxu0
  %v3368 = vadd.f32 %v2784, %v3367
  %v3369 = vpop.f32.mrb[0].mxu0
  %v3370 = vadd.f32 %v2780, %v3369
  %v3371 = vpop.f32.mrb[0].mxu0
  %v3372 = vadd.f32 %v2784, %v3371
  %3373 = vmatprep.mubr.bf16.mxu0 0
  %3374 = vmatmul.mubr.bf16.gmra.mrb[0].mxu0 %v2853
  %v3375 = vpop.f32.mrb[0].mxu0
  %v3376 = vadd.f32 %v2780, %v3375
  %v3377 = vpop.f32.mrb[0].mxu0
  %v3378 = vadd.f32 %v2784, %v3377
  %v3379 = vpop.f32.mrb[0].mxu0
  %v3380 = vadd.f32 %v2780, %v3379
  %v3381 = vpop.f32.mrb[0].mxu0
  %v3382 = vadd.f32 %v2784, %v3381
  %3383 = vmatprep.mubr.bf16.mxu0 0
  %3384 = vmatmul.mubr.bf16.gmra.mrb[0].mxu0 %v2856
  %v3385 = vpop.f32.mrb[0].mxu0
  %v3386 = vadd.f32 %v2780, %v3385
  %v3387 = vpop.f32.mrb[0].mxu0
  %v3388 = vadd.f32 %v2784, %v3387
  %v3389 = vpop.f32.mrb[0].mxu0
  %v3390 = vadd.f32 %v2780, %v3389
  %v3391 = vpop.f32.mrb[0].mxu0
  %v3392 = vadd.f32 %v2784, %v3391
  %3393 = vmatprep.mubr.bf16.mxu0 0
  %3394 = vmatmul.mubr.bf16.gmra.mrb[0].mxu0 %v2859
  %v3395 = vpop.f32.mrb[0].mxu0
  %v3396 = vadd.f32 %v2780, %v3395
  %v3397 = vpop.f32.mrb[0].mxu0
  %v3398 = vadd.f32 %v2784, %v3397
  %v3399 = vpop.f32.mrb[0].mxu0
  %v3400 = vadd.f32 %v2780, %v3399
  %v3401 = vpop.f32.mrb[0].mxu0
  %v3402 = vadd.f32 %v2784, %v3401
  %3403 = vmatprep.mubr.bf16.mxu0 0
  %3404 = vmatmul.mubr.bf16.gmra.mrb[0].mxu0 %v2862
  %v3405 = vpop.f32.mrb[0].mxu0
  %v3406 = vadd.f32 %v2780, %v3405
  %v3407 = vpop.f32.mrb[0].mxu0
  %v3408 = vadd.f32 %v2784, %v3407
  %v3409 = vpop.f32.mrb[0].mxu0
  %v3410 = vadd.f32 %v2780, %v3409
  %v3411 = vpop.f32.mrb[0].mxu0
  %v3412 = vadd.f32 %v2784, %v3411
  %3413 = vmatprep.mubr.bf16.mxu0 0
  %3414 = vmatmul.mubr.bf16.gmra.mrb[0].mxu0 %v2865
  %v3415 = vpop.f32.mrb[0].mxu0
  %v3416 = vadd.f32 %v2780, %v3415
  %v3417 = vpop.f32.mrb[0].mxu0
  %v3418 = vadd.f32 %v2784, %v3417
  %v3419 = vpop.f32.mrb[0].mxu0
  %v3420 = vadd.f32 %v2780, %v3419
  %v3421 = vpop.f32.mrb[0].mxu0
  %v3422 = vadd.f32 %v2784, %v3421
  %3423 = vmatprep.mubr.bf16.mxu0 0
  %3424 = vmatmul.mubr.bf16.gmra.mrb[0].mxu0 %v2868
  %v3425 = vpop.f32.mrb[0].mxu0
  %v3426 = vadd.f32 %v2780, %v3425
  %v3427 = vpop.f32.mrb[0].mxu0
  %v3428 = vadd.f32 %v2784, %v3427
  %v3429 = vpop.f32.mrb[0].mxu0
  %v3430 = vadd.f32 %v2780, %v3429
  %v3431 = vpop.f32.mrb[0].mxu0
  %v3432 = vadd.f32 %v2784, %v3431
  %3433 = vmatprep.mubr.bf16.mxu0 0
  %3434 = vmatmul.mubr.bf16.gmra.mrb[0].mxu0 %v2871
  %v3435 = vpop.f32.mrb[0].mxu0
  %v3436 = vadd.f32 %v2780, %v3435
  %v3437 = vpop.f32.mrb[0].mxu0
  %v3438 = vadd.f32 %v2784, %v3437
  %v3439 = vpop.f32.mrb[0].mxu0
  %v3440 = vadd.f32 %v2780, %v3439
  %v3441 = vpop.f32.mrb[0].mxu0
  %v3442 = vadd.f32 %v2784, %v3441
  %3443 = vmatprep.mubr.bf16.mxu0 0
  %3444 = vmatmul.mubr.bf16.gmra.mrb[0].mxu0 %v2874
  %v3445 = vpop.f32.mrb[0].mxu0
  %v3446 = vadd.f32 %v2780, %v3445
  %v3447 = vpop.f32.mrb[0].mxu0
  %v3448 = vadd.f32 %v2784, %v3447
  %v3449 = vpop.f32.mrb[0].mxu0
  %v3450 = vadd.f32 %v2780, %v3449
  %v3451 = vpop.f32.mrb[0].mxu0
  %v3452 = vadd.f32 %v2784, %v3451
  %3453 = vmatprep.mubr.bf16.mxu0 0
  %3454 = vmatmul.mubr.bf16.gmra.mrb[0].mxu0 %v2877
  %v3455 = vpop.f32.mrb[0].mxu0
  %v3456 = vadd.f32 %v2780, %v3455
  %v3457 = vpop.f32.mrb[0].mxu0
  %v3458 = vadd.f32 %v2784, %v3457
  %v3459 = vpop.f32.mrb[0].mxu0
  %v3460 = vadd.f32 %v2780, %v3459
  %v3461 = vpop.f32.mrb[0].mxu0
  %v3462 = vadd.f32 %v2784, %v3461
  %3463 = vmatprep.mubr.bf16.mxu0 0
  %3464 = vmatmul.mubr.bf16.gmra.mrb[0].mxu0 %v2880
  %v3465 = vpop.f32.mrb[0].mxu0
  %v3466 = vadd.f32 %v2780, %v3465
  %v3467 = vpop.f32.mrb[0].mxu0
  %v3468 = vadd.f32 %v2784, %v3467
  %v3469 = vpop.f32.mrb[0].mxu0
  %v3470 = vadd.f32 %v2780, %v3469
  %v3471 = vpop.f32.mrb[0].mxu0
  %v3472 = vadd.f32 %v2784, %v3471
  %3473 = vmatprep.mubr.bf16.mxu0 0
  %3474 = vmatmul.mubr.bf16.gmra.mrb[0].mxu0 %v2883
  %v3475 = vpop.f32.mrb[0].mxu0
  %v3476 = vadd.f32 %v2780, %v3475
  %v3477 = vpop.f32.mrb[0].mxu0
  %v3478 = vadd.f32 %v2784, %v3477
  %v3479 = vpop.f32.mrb[0].mxu0
  %v3480 = vadd.f32 %v2780, %v3479
  %v3481 = vpop.f32.mrb[0].mxu0
  %v3482 = vadd.f32 %v2784, %v3481
  %3483 = vmatprep.mubr.bf16.mxu0 0
  %3484 = vmatmul.mubr.bf16.gmra.mrb[0].mxu0 %v2886
  %v3485 = vpop.f32.mrb[0].mxu0
  %v3486 = vadd.f32 %v2780, %v3485
  %v3487 = vpop.f32.mrb[0].mxu0
  %v3488 = vadd.f32 %v2784, %v3487
  %v3489 = vpop.f32.mrb[0].mxu0
  %v3490 = vadd.f32 %v2780, %v3489
  %v3491 = vpop.f32.mrb[0].mxu0
  %v3492 = vadd.f32 %v2784, %v3491
  %3493 = vmatprep.mubr.bf16.mxu0 0
  %3494 = vmatmul.mubr.bf16.gmra.mrb[0].mxu0 %v2889
  %v3495 = vpop.f32.mrb[0].mxu0
  %v3496 = vadd.f32 %v2780, %v3495
  %v3497 = vpop.f32.mrb[0].mxu0
  %v3498 = vadd.f32 %v2784, %v3497
  %v3499 = vpop.f32.mrb[0].mxu0
  %v3500 = vadd.f32 %v2780, %v3499
  %v3501 = vpop.f32.mrb[0].mxu0
  %v3502 = vadd.f32 %v2784, %v3501
  %3503 = vmatprep.mubr.bf16.mxu0 0
  %3504 = vmatmul.mubr.bf16.gmra.mrb[0].mxu0 %v2892
  %v3505 = vpop.f32.mrb[0].mxu0
  %v3506 = vadd.f32 %v2780, %v3505
  %v3507 = vpop.f32.mrb[0].mxu0
  %v3508 = vadd.f32 %v2784, %v3507
  %v3509 = vpop.f32.mrb[0].mxu0
  %v3510 = vadd.f32 %v2780, %v3509
  %v3511 = vpop.f32.mrb[0].mxu0
  %v3512 = vadd.f32 %v2784, %v3511
  %3513 = vmatprep.mubr.bf16.mxu0 0
  %3514 = vmatmul.mubr.bf16.gmra.mrb[0].mxu0 %v2895
  %v3515 = vpop.f32.mrb[0].mxu0
  %v3516 = vadd.f32 %v2780, %v3515
  %v3517 = vpop.f32.mrb[0].mxu0
  %v3518 = vadd.f32 %v2784, %v3517
  %v3519 = vpop.f32.mrb[0].mxu0
  %v3520 = vadd.f32 %v2780, %v3519
  %v3521 = vpop.f32.mrb[0].mxu0
  %v3522 = vadd.f32 %v2784, %v3521
  %3523 = vmatprep.mubr.bf16.mxu0 0
  %3524 = vmatmul.mubr.bf16.gmra.mrb[0].mxu0 %v2898
  %v3525 = vpop.f32.mrb[0].mxu0
  %v3526 = vadd.f32 %v2780, %v3525
  %v3527 = vpop.f32.mrb[0].mxu0
  %v3528 = vadd.f32 %v2784, %v3527
  %v3529 = vpop.f32.mrb[0].mxu0
  %v3530 = vadd.f32 %v2780, %v3529
  %v3531 = vpop.f32.mrb[0].mxu0
  %v3532 = vadd.f32 %v2784, %v3531
  %3533 = vmatprep.mubr.bf16.mxu0 0
  %3534 = vmatmul.mubr.bf16.gmra.mrb[0].mxu0 %v2901
  %v3535 = vpop.f32.mrb[0].mxu0
  %v3536 = vadd.f32 %v2780, %v3535
  %v3537 = vpop.f32.mrb[0].mxu0
  %v3538 = vadd.f32 %v2784, %v3537
  %v3539 = vpop.f32.mrb[0].mxu0
  %v3540 = vadd.f32 %v2780, %v3539
  %v3541 = vpop.f32.mrb[0].mxu0
  %v3542 = vadd.f32 %v2784, %v3541
  %3543 = vmatprep.mubr.bf16.mxu0 0
  %3544 = vmatmul.mubr.bf16.gmra.mrb[0].mxu0 %v2904
  %v3545 = vpop.f32.mrb[0].mxu0
  %v3546 = vadd.f32 %v2780, %v3545
  %v3547 = vpop.f32.mrb[0].mxu0
  %v3548 = vadd.f32 %v2784, %v3547
  %v3549 = vpop.f32.mrb[0].mxu0
  %v3550 = vadd.f32 %v2780, %v3549
  %v3551 = vpop.f32.mrb[0].mxu0
  %v3552 = vadd.f32 %v2784, %v3551
  %3553 = vmatprep.mubr.bf16.mxu0 0
  %3554 = vmatmul.mubr.bf16.gmra.mrb[0].mxu0 %v2907
  %v3555 = vpop.f32.mrb[0].mxu0
  %v3556 = vadd.f32 %v2780, %v3555
  %v3557 = vpop.f32.mrb[0].mxu0
  %v3558 = vadd.f32 %v2784, %v3557
  %v3559 = vpop.f32.mrb[0].mxu0
  %v3560 = vadd.f32 %v2780, %v3559
  %v3561 = vpop.f32.mrb[0].mxu0
  %v3562 = vadd.f32 %v2784, %v3561
  %3563 = vmatprep.mubr.bf16.mxu0 0
  %3564 = vmatmul.mubr.bf16.gmra.mrb[0].mxu0 %v2910
  %v3565 = vpop.f32.mrb[0].mxu0
  %v3566 = vadd.f32 %v2780, %v3565
  %v3567 = vpop.f32.mrb[0].mxu0
  %v3568 = vadd.f32 %v2784, %v3567
  %v3569 = vpop.f32.mrb[0].mxu0
  %v3570 = vadd.f32 %v2780, %v3569
  %v3571 = vpop.f32.mrb[0].mxu0
  %v3572 = vadd.f32 %v2784, %v3571
  %3573 = vmatprep.mubr.bf16.mxu0 0
  %3574 = vmatmul.mubr.bf16.gmra.mrb[0].mxu0 %v2913
  %v3575 = vpop.f32.mrb[0].mxu0
  %v3576 = vadd.f32 %v2780, %v3575
  %v3577 = vpop.f32.mrb[0].mxu0
  %v3578 = vadd.f32 %v2784, %v3577
  %v3579 = vpop.f32.mrb[0].mxu0
  %v3580 = vadd.f32 %v2780, %v3579
  %v3581 = vpop.f32.mrb[0].mxu0
  %v3582 = vadd.f32 %v2784, %v3581
  %3583 = vmatprep.mubr.bf16.mxu0 0
  %3584 = vmatmul.mubr.bf16.gmra.mrb[0].mxu0 %v2916
  %v3585 = vpop.f32.mrb[0].mxu0
  %v3586 = vadd.f32 %v2780, %v3585
  %v3587 = vpop.f32.mrb[0].mxu0
  %v3588 = vadd.f32 %v2784, %v3587
  %v3589 = vpop.f32.mrb[0].mxu0
  %v3590 = vadd.f32 %v2780, %v3589
  %v3591 = vpop.f32.mrb[0].mxu0
  %v3592 = vadd.f32 %v2784, %v3591
  %3593 = vmatprep.mubr.bf16.mxu0 0
  %3594 = vmatmul.mubr.bf16.gmra.mrb[0].mxu0 %v2919
  %v3595 = vpop.f32.mrb[0].mxu0
  %v3596 = vadd.f32 %v2780, %v3595
  %v3597 = vpop.f32.mrb[0].mxu0
  %v3598 = vadd.f32 %v2784, %v3597
  %v3599 = vpop.f32.mrb[0].mxu0
  %v3600 = vadd.f32 %v2780, %v3599
  %v3601 = vpop.f32.mrb[0].mxu0
  %v3602 = vadd.f32 %v2784, %v3601
  %3603 = vmatprep.mubr.bf16.mxu0 0
  %3604 = vmatmul.mubr.bf16.gmra.mrb[0].mxu0 %v2922
  %v3605 = vpop.f32.mrb[0].mxu0
  %v3606 = vadd.f32 %v2780, %v3605
  %v3607 = vpop.f32.mrb[0].mxu0
  %v3608 = vadd.f32 %v2784, %v3607
  %v3609 = vpop.f32.mrb[0].mxu0
  %v3610 = vadd.f32 %v2780, %v3609
  %v3611 = vpop.f32.mrb[0].mxu0
  %v3612 = vadd.f32 %v2784, %v3611
  %3613 = vmatprep.mubr.bf16.mxu0 0
  %3614 = vmatmul.mubr.bf16.gmra.mrb[0].mxu0 %v2925
  %v3615 = vpop.f32.mrb[0].mxu0
  %v3616 = vadd.f32 %v2780, %v3615
  %v3617 = vpop.f32.mrb[0].mxu0
  %v3618 = vadd.f32 %v2784, %v3617
  %v3619 = vpop.f32.mrb[0].mxu0
  %v3620 = vadd.f32 %v2780, %v3619
  %v3621 = vpop.f32.mrb[0].mxu0
  %v3622 = vadd.f32 %v2784, %v3621
  %3623 = vmatprep.mubr.bf16.mxu0 0
  %3624 = vmatmul.mubr.bf16.gmra.mrb[0].mxu0 %v2928
  %v3625 = vpop.f32.mrb[0].mxu0
  %v3626 = vadd.f32 %v2780, %v3625
  %v3627 = vpop.f32.mrb[0].mxu0
  %v3628 = vadd.f32 %v2784, %v3627
  %v3629 = vpop.f32.mrb[0].mxu0
  %v3630 = vadd.f32 %v2780, %v3629
  %v3631 = vpop.f32.mrb[0].mxu0
  %v3632 = vadd.f32 %v2784, %v3631
  %3633 = vmatprep.mubr.bf16.mxu0 0
  %3634 = vmatmul.mubr.bf16.gmra.mrb[0].mxu0 %v2931
  %v3635 = vpop.f32.mrb[0].mxu0
  %v3636 = vadd.f32 %v2780, %v3635
  %v3637 = vpop.f32.mrb[0].mxu0
  %v3638 = vadd.f32 %v2784, %v3637
  %v3639 = vpop.f32.mrb[0].mxu0
  %v3640 = vadd.f32 %v2780, %v3639
  %v3641 = vpop.f32.mrb[0].mxu0
  %v3642 = vadd.f32 %v2784, %v3641
  %3643 = vmatprep.mubr.bf16.mxu0 0
  %3644 = vmatmul.mubr.bf16.gmra.mrb[0].mxu0 %v2934
  %v3645 = vpop.f32.mrb[0].mxu0
  %v3646 = vadd.f32 %v2780, %v3645
  %v3647 = vpop.f32.mrb[0].mxu0
  %v3648 = vadd.f32 %v2784, %v3647
  %v3649 = vpop.f32.mrb[0].mxu0
  %v3650 = vadd.f32 %v2780, %v3649
  %v3651 = vpop.f32.mrb[0].mxu0
  %v3652 = vadd.f32 %v2784, %v3651
  %3653 = vmatprep.mubr.bf16.mxu0 0
  %3654 = vmatmul.mubr.bf16.gmra.mrb[0].mxu0 %v2937
  %v3655 = vpop.f32.mrb[0].mxu0
  %v3656 = vadd.f32 %v2780, %v3655
  %v3657 = vpop.f32.mrb[0].mxu0
  %v3658 = vadd.f32 %v2784, %v3657
  %v3659 = vpop.f32.mrb[0].mxu0
  %v3660 = vadd.f32 %v2780, %v3659
  %v3661 = vpop.f32.mrb[0].mxu0
  %v3662 = vadd.f32 %v2784, %v3661
  %3663 = vmatprep.mubr.bf16.mxu0 0
  %3664 = vmatmul.mubr.bf16.gmra.mrb[0].mxu0 %v2940
  %v3665 = vpop.f32.mrb[0].mxu0
  %v3666 = vadd.f32 %v2780, %v3665
  %v3667 = vpop.f32.mrb[0].mxu0
  %v3668 = vadd.f32 %v2784, %v3667
  %v3669 = vpop.f32.mrb[0].mxu0
  %v3670 = vadd.f32 %v2780, %v3669
  %v3671 = vpop.f32.mrb[0].mxu0
  %v3672 = vadd.f32 %v2784, %v3671
  %3673 = vmatprep.mubr.bf16.mxu0 0
  %3674 = vmatmul.mubr.bf16.gmra.mrb[0].mxu0 %v2943
  %v3675 = vpop.f32.mrb[0].mxu0
  %v3676 = vadd.f32 %v2780, %v3675
  %v3677 = vpop.f32.mrb[0].mxu0
  %v3678 = vadd.f32 %v2784, %v3677
  %v3679 = vpop.f32.mrb[0].mxu0
  %v3680 = vadd.f32 %v2780, %v3679
  %v3681 = vpop.f32.mrb[0].mxu0
  %v3682 = vadd.f32 %v2784, %v3681
  %3683 = vmatprep.mubr.bf16.mxu0 0
  %3684 = vmatmul.mubr.bf16.gmra.mrb[0].mxu0 %v2946
  %v3685 = vpop.f32.mrb[0].mxu0
  %v3686 = vadd.f32 %v2780, %v3685
  %v3687 = vpop.f32.mrb[0].mxu0
  %v3688 = vadd.f32 %v2784, %v3687
  %v3689 = vpop.f32.mrb[0].mxu0
  %v3690 = vadd.f32 %v2780, %v3689
  %v3691 = vpop.f32.mrb[0].mxu0
  %v3692 = vadd.f32 %v2784, %v3691
  %3693 = vmatprep.mubr.bf16.mxu0 0
  %3694 = vmatmul.mubr.bf16.gmra.mrb[0].mxu0 %v2949
  %v3695 = vpop.f32.mrb[0].mxu0
  %v3696 = vadd.f32 %v2780, %v3695
  %v3697 = vpop.f32.mrb[0].mxu0
  %v3698 = vadd.f32 %v2784, %v3697
  %v3699 = vpop.f32.mrb[0].mxu0
  %v3700 = vadd.f32 %v2780, %v3699
  %v3701 = vpop.f32.mrb[0].mxu0
  %v3702 = vadd.f32 %v2784, %v3701
  %3703 = vmatprep.mubr.bf16.mxu0 0
  %3704 = vmatmul.mubr.bf16.gmra.mrb[0].mxu0 %v2952
  %v3705 = vpop.f32.mrb[0].mxu0
  %v3706 = vadd.f32 %v2780, %v3705
  %v3707 = vpop.f32.mrb[0].mxu0
  %v3708 = vadd.f32 %v2784, %v3707
  %v3709 = vpop.f32.mrb[0].mxu0
  %v3710 = vadd.f32 %v2780, %v3709
  %v3711 = vpop.f32.mrb[0].mxu0
  %v3712 = vadd.f32 %v2784, %v3711
  %3713 = vmatprep.mubr.bf16.mxu0 0
  %3714 = vmatmul.mubr.bf16.gmra.mrb[0].mxu0 %v2955
  %v3715 = vpop.f32.mrb[0].mxu0
  %v3716 = vadd.f32 %v2780, %v3715
  %v3717 = vpop.f32.mrb[0].mxu0
  %v3718 = vadd.f32 %v2784, %v3717
  %v3719 = vpop.f32.mrb[0].mxu0
  %v3720 = vadd.f32 %v2780, %v3719
  %v3721 = vpop.f32.mrb[0].mxu0
  %v3722 = vadd.f32 %v2784, %v3721
  %3723 = vmatprep.mubr.bf16.mxu0 0
  %3724 = vmatmul.mubr.bf16.gmra.mrb[0].mxu0 %v2958
  %v3725 = vpop.f32.mrb[0].mxu0
  %v3726 = vadd.f32 %v2780, %v3725
  %v3727 = vpop.f32.mrb[0].mxu0
  %v3728 = vadd.f32 %v2784, %v3727
  %v3729 = vpop.f32.mrb[0].mxu0
  %v3730 = vadd.f32 %v2780, %v3729
  %v3731 = vpop.f32.mrb[0].mxu0
  %v3732 = vadd.f32 %v2784, %v3731
  %3733 = vmatprep.mubr.bf16.mxu0 0
  %3734 = vmatmul.mubr.bf16.gmra.mrb[0].mxu0 %v2961
  %v3735 = vpop.f32.mrb[0].mxu0
  %v3736 = vadd.f32 %v2780, %v3735
  %v3737 = vpop.f32.mrb[0].mxu0
  %v3738 = vadd.f32 %v2784, %v3737
  %v3739 = vpop.f32.mrb[0].mxu0
  %v3740 = vadd.f32 %v2780, %v3739
  %v3741 = vpop.f32.mrb[0].mxu0
  %v3742 = vadd.f32 %v2784, %v3741
  %3743 = vmatprep.mubr.bf16.mxu0 0
  %3744 = vmatmul.mubr.bf16.gmra.mrb[0].mxu0 %v2964
  %v3745 = vpop.f32.mrb[0].mxu0
  %v3746 = vadd.f32 %v2780, %v3745
  %v3747 = vpop.f32.mrb[0].mxu0
  %v3748 = vadd.f32 %v2784, %v3747
  %v3749 = vpop.f32.mrb[0].mxu0
  %v3750 = vadd.f32 %v2780, %v3749
  %v3751 = vpop.f32.mrb[0].mxu0
  %v3752 = vadd.f32 %v2784, %v3751
  %3753 = vmatprep.mubr.bf16.mxu0 0
  %3754 = vmatmul.mubr.bf16.gmra.mrb[0].mxu0 %v2967
  %v3755 = vpop.f32.mrb[0].mxu0
  %v3756 = vadd.f32 %v2780, %v3755
  %v3757 = vpop.f32.mrb[0].mxu0
  %v3758 = vadd.f32 %v2784, %v3757
  %v3759 = vpop.f32.mrb[0].mxu0
  %v3760 = vadd.f32 %v2780, %v3759
  %v3761 = vpop.f32.mrb[0].mxu0
  %v3762 = vadd.f32 %v2784, %v3761
  %3763 = vmatprep.mubr.bf16.mxu0 0
  %3764 = vmatmul.mubr.bf16.gmra.mrb[0].mxu0 %v2970
  %v3765 = vpop.f32.mrb[0].mxu0
  %v3766 = vadd.f32 %v2780, %v3765
  %v3767 = vpop.f32.mrb[0].mxu0
  %v3768 = vadd.f32 %v2784, %v3767
  %v3769 = vpop.f32.mrb[0].mxu0
  %v3770 = vadd.f32 %v2780, %v3769
  %v3771 = vpop.f32.mrb[0].mxu0
  %v3772 = vadd.f32 %v2784, %v3771
  %3773 = vmatprep.mubr.bf16.mxu0 0
  %3774 = vmatmul.mubr.bf16.gmra.mrb[0].mxu0 %v2973
  %v3775 = vpop.f32.mrb[0].mxu0
  %v3776 = vadd.f32 %v2780, %v3775
  %v3777 = vpop.f32.mrb[0].mxu0
  %v3778 = vadd.f32 %v2784, %v3777
  %v3779 = vpop.f32.mrb[0].mxu0
  %v3780 = vadd.f32 %v2780, %v3779
  %v3781 = vpop.f32.mrb[0].mxu0
  %v3782 = vadd.f32 %v2784, %v3781
  %3783 = vmatprep.mubr.bf16.mxu0 0
  %3784 = vmatmul.mubr.bf16.gmra.mrb[0].mxu0 %v2976
  %v3785 = vpop.f32.mrb[0].mxu0
  %v3786 = vadd.f32 %v2780, %v3785
  %v3787 = vpop.f32.mrb[0].mxu0
  %v3788 = vadd.f32 %v2784, %v3787
  %v3789 = vpop.f32.mrb[0].mxu0
  %v3790 = vadd.f32 %v2780, %v3789
  %v3791 = vpop.f32.mrb[0].mxu0
  %v3792 = vadd.f32 %v2784, %v3791
  %3793 = vmatprep.mubr.bf16.mxu0 0
  %3794 = vmatmul.mubr.bf16.gmra.mrb[0].mxu0 %v2979
  %v3795 = vpop.f32.mrb[0].mxu0
  %v3796 = vadd.f32 %v2780, %v3795
  %v3797 = vpop.f32.mrb[0].mxu0
  %v3798 = vadd.f32 %v2784, %v3797
  %v3799 = vpop.f32.mrb[0].mxu0
  %v3800 = vadd.f32 %v2780, %v3799
  %v3801 = vpop.f32.mrb[0].mxu0
  %v3802 = vadd.f32 %v2784, %v3801
  %3803 = vmatprep.mubr.bf16.mxu0 0
  %3804 = vmatmul.mubr.bf16.gmra.mrb[0].mxu0 %v2982
  %v3805 = vpop.f32.mrb[0].mxu0
  %v3806 = vadd.f32 %v2780, %v3805
  %v3807 = vpop.f32.mrb[0].mxu0
  %v3808 = vadd.f32 %v2784, %v3807
  %v3809 = vpop.f32.mrb[0].mxu0
  %v3810 = vadd.f32 %v2780, %v3809
  %v3811 = vpop.f32.mrb[0].mxu0
  %v3812 = vadd.f32 %v2784, %v3811
  %3813 = vmatprep.mubr.bf16.mxu0 0
  %3814 = vmatmul.mubr.bf16.gmra.mrb[0].mxu0 %v2985
  %v3815 = vpop.f32.mrb[0].mxu0
  %v3816 = vadd.f32 %v2780, %v3815
  %v3817 = vpop.f32.mrb[0].mxu0
  %v3818 = vadd.f32 %v2784, %v3817
  %v3819 = vpop.f32.mrb[0].mxu0
  %v3820 = vadd.f32 %v2780, %v3819
  %v3821 = vpop.f32.mrb[0].mxu0
  %v3822 = vadd.f32 %v2784, %v3821
  %3823 = vmatprep.mubr.bf16.mxu0 0
  %3824 = vmatmul.mubr.bf16.gmra.mrb[0].mxu0 %v2988
  %v3825 = vpop.f32.mrb[0].mxu0
  %v3826 = vadd.f32 %v2780, %v3825
  %v3827 = vpop.f32.mrb[0].mxu0
  %v3828 = vadd.f32 %v2784, %v3827
  %v3829 = vpop.f32.mrb[0].mxu0
  %v3830 = vadd.f32 %v2780, %v3829
  %v3831 = vpop.f32.mrb[0].mxu0
  %v3832 = vadd.f32 %v2784, %v3831
  %3833 = vmatprep.mubr.bf16.mxu0 0
  %3834 = vmatmul.mubr.bf16.gmra.mrb[0].mxu0 %v2991
  %v3835 = vpop.f32.mrb[0].mxu0
  %v3836 = vadd.f32 %v2780, %v3835
  %v3837 = vpop.f32.mrb[0].mxu0
  %v3838 = vadd.f32 %v2784, %v3837
  %v3839 = vpop.f32.mrb[0].mxu0
  %v3840 = vadd.f32 %v2780, %v3839
  %v3841 = vpop.f32.mrb[0].mxu0
  %v3842 = vadd.f32 %v2784, %v3841
  %3843 = vmatprep.mubr.bf16.mxu0 0
  %3844 = vmatmul.mubr.bf16.gmra.mrb[0].mxu0 %v2994
  %v3845 = vpop.f32.mrb[0].mxu0
  %v3846 = vadd.f32 %v2780, %v3845
  %v3847 = vpop.f32.mrb[0].mxu0
  %v3848 = vadd.f32 %v2784, %v3847
  %v3849 = vpop.f32.mrb[0].mxu0
  %v3850 = vadd.f32 %v2780, %v3849
  %v3851 = vpop.f32.mrb[0].mxu0
  %v3852 = vadd.f32 %v2784, %v3851
  %3853 = vmatprep.mubr.bf16.mxu0 0
  %3854 = vmatmul.mubr.bf16.gmra.mrb[0].mxu0 %v2997
  %v3855 = vpop.f32.mrb[0].mxu0
  %v3856 = vadd.f32 %v2780, %v3855
  %v3857 = vpop.f32.mrb[0].mxu0
  %v3858 = vadd.f32 %v2784, %v3857
  %v3859 = vpop.f32.mrb[0].mxu0
  %v3860 = vadd.f32 %v2780, %v3859
  %v3861 = vpop.f32.mrb[0].mxu0
  %v3862 = vadd.f32 %v2784, %v3861
  %3863 = vmatprep.mubr.bf16.mxu0 0
  %3864 = vmatmul.mubr.bf16.gmra.mrb[0].mxu0 %v3000
  %v3865 = vpop.f32.mrb[0].mxu0
  %v3866 = vadd.f32 %v2780, %v3865
  %v3867 = vpop.f32.mrb[0].mxu0
  %v3868 = vadd.f32 %v2784, %v3867
  %v3869 = vpop.f32.mrb[0].mxu0
  %v3870 = vadd.f32 %v2780, %v3869
  %v3871 = vpop.f32.mrb[0].mxu0
  %v3872 = vadd.f32 %v2784, %v3871
  %3873 = vmatprep.mubr.bf16.mxu0 0
  %3874 = vmatmul.mubr.bf16.gmra.mrb[0].mxu0 %v3003
  %v3875 = vpop.f32.mrb[0].mxu0
  %v3876 = vadd.f32 %v2780, %v3875
  %v3877 = vpop.f32.mrb[0].mxu0
  %v3878 = vadd.f32 %v2784, %v3877
  %v3879 = vpop.f32.mrb[0].mxu0
  %v3880 = vadd.f32 %v2780, %v3879
  %v3881 = vpop.f32.mrb[0].mxu0
  %v3882 = vadd.f32 %v2784, %v3881
  %3883 = vmatprep.mubr.bf16.mxu0 0
  %3884 = vmatmul.mubr.bf16.gmra.mrb[0].mxu0 %v3006
  %v3885 = vpop.f32.mrb[0].mxu0
  %v3886 = vadd.f32 %v2780, %v3885
  %v3887 = vpop.f32.mrb[0].mxu0
  %v3888 = vadd.f32 %v2784, %v3887
  %v3889 = vpop.f32.mrb[0].mxu0
  %v3890 = vadd.f32 %v2780, %v3889
  %v3891 = vpop.f32.mrb[0].mxu0
  %v3892 = vadd.f32 %v2784, %v3891
  %3893 = vmatprep.mubr.bf16.mxu0 0
  %3894 = vmatmul.mubr.bf16.gmra.mrb[0].mxu0 %v3009
  %v3895 = vpop.f32.mrb[0].mxu0
  %v3896 = vadd.f32 %v2780, %v3895
  %v3897 = vpop.f32.mrb[0].mxu0
  %v3898 = vadd.f32 %v2784, %v3897
  %v3899 = vpop.f32.mrb[0].mxu0
  %v3900 = vadd.f32 %v2780, %v3899
  %v3901 = vpop.f32.mrb[0].mxu0
  %v3902 = vadd.f32 %v2784, %v3901
  %3903 = vmatprep.mubr.bf16.mxu0 0
  %3904 = vmatmul.mubr.bf16.gmra.mrb[0].mxu0 %v3012
  %v3905 = vpop.f32.mrb[0].mxu0
  %v3906 = vadd.f32 %v2780, %v3905
  %v3907 = vpop.f32.mrb[0].mxu0
  %v3908 = vadd.f32 %v2784, %v3907
  %v3909 = vpop.f32.mrb[0].mxu0
  %v3910 = vadd.f32 %v2780, %v3909
  %v3911 = vpop.f32.mrb[0].mxu0
  %v3912 = vadd.f32 %v2784, %v3911
  %3913 = vmatprep.mubr.bf16.mxu0 0
  %3914 = vmatmul.mubr.bf16.gmra.mrb[0].mxu0 %v3015
  %v3915 = vpop.f32.mrb[0].mxu0
  %v3916 = vadd.f32 %v2780, %v3915
  %v3917 = vpop.f32.mrb[0].mxu0
  %v3918 = vadd.f32 %v2784, %v3917
  %v3919 = vpop.f32.mrb[0].mxu0
  %v3920 = vadd.f32 %v2780, %v3919
  %v3921 = vpop.f32.mrb[0].mxu0
  %v3922 = vadd.f32 %v2784, %v3921
  %3923 = vmatprep.mubr.bf16.mxu0 0
  %3924 = vmatmul.mubr.bf16.gmra.mrb[0].mxu0 %v3018
  %v3925 = vpop.f32.mrb[0].mxu0
  %v3926 = vadd.f32 %v2780, %v3925
  %v3927 = vpop.f32.mrb[0].mxu0
  %v3928 = vadd.f32 %v2784, %v3927
  %v3929 = vpop.f32.mrb[0].mxu0
  %v3930 = vadd.f32 %v2780, %v3929
  %v3931 = vpop.f32.mrb[0].mxu0
  %v3932 = vadd.f32 %v2784, %v3931
  %3933 = vmatprep.mubr.bf16.mxu0 0
  %3934 = vmatmul.mubr.bf16.gmra.mrb[0].mxu0 %v3021
  %v3935 = vpop.f32.mrb[0].mxu0
  %v3936 = vadd.f32 %v2780, %v3935
  %v3937 = vpop.f32.mrb[0].mxu0
  %v3938 = vadd.f32 %v2784, %v3937
  %v3939 = vpop.f32.mrb[0].mxu0
  %v3940 = vadd.f32 %v2780, %v3939
  %v3941 = vpop.f32.mrb[0].mxu0
  %v3942 = vadd.f32 %v2784, %v3941
  %3943 = vmatprep.mubr.bf16.mxu0 0
  %3944 = vmatmul.mubr.bf16.gmra.mrb[0].mxu0 %v3024
  %v3945 = vpop.f32.mrb[0].mxu0
  %v3946 = vadd.f32 %v2780, %v3945
  %v3947 = vpop.f32.mrb[0].mxu0
  %v3948 = vadd.f32 %v2784, %v3947
  %v3949 = vpop.f32.mrb[0].mxu0
  %v3950 = vadd.f32 %v2780, %v3949
  %v3951 = vpop.f32.mrb[0].mxu0
  %v3952 = vadd.f32 %v2784, %v3951
  %3953 = vmatprep.mubr.bf16.mxu0 0
  %3954 = vmatmul.mubr.bf16.gmra.mrb[0].mxu0 %v3027
  %v3955 = vpop.f32.mrb[0].mxu0
  %v3956 = vadd.f32 %v2780, %v3955
  %v3957 = vpop.f32.mrb[0].mxu0
  %v3958 = vadd.f32 %v2784, %v3957
  %v3959 = vpop.f32.mrb[0].mxu0
  %v3960 = vadd.f32 %v2780, %v3959
  %v3961 = vpop.f32.mrb[0].mxu0
  %v3962 = vadd.f32 %v2784, %v3961
  %3963 = vmatprep.mubr.bf16.mxu0 0
  %3964 = vmatmul.mubr.bf16.gmra.mrb[0].mxu0 %v3030
  %v3965 = vpop.f32.mrb[0].mxu0
  %v3966 = vadd.f32 %v2780, %v3965
  %v3967 = vpop.f32.mrb[0].mxu0
  %v3968 = vadd.f32 %v2784, %v3967
  %v3969 = vpop.f32.mrb[0].mxu0
  %v3970 = vadd.f32 %v2780, %v3969
  %v3971 = vpop.f32.mrb[0].mxu0
  %v3972 = vadd.f32 %v2784, %v3971
  %3973 = vmatprep.mubr.bf16.mxu0 0
  %3974 = vmatmul.mubr.bf16.gmra.mrb[0].mxu0 %v3033
  %v3975 = vpop.f32.mrb[0].mxu0
  %v3976 = vadd.f32 %v2780, %v3975
  %v3977 = vpop.f32.mrb[0].mxu0
  %v3978 = vadd.f32 %v2784, %v3977
  %v3979 = vpop.f32.mrb[0].mxu0
  %v3980 = vadd.f32 %v2780, %v3979
  %v3981 = vpop.f32.mrb[0].mxu0
  %v3982 = vadd.f32 %v2784, %v3981
  %3983 = vmatprep.mubr.bf16.mxu0 0
  %3984 = vmatmul.mubr.bf16.gmra.mrb[0].mxu0 %v3036
  %v3985 = vpop.f32.mrb[0].mxu0
  %v3986 = vadd.f32 %v2780, %v3985
  %v3987 = vpop.f32.mrb[0].mxu0
  %v3988 = vadd.f32 %v2784, %v3987
  %v3989 = vpop.f32.mrb[0].mxu0
  %v3990 = vadd.f32 %v2780, %v3989
  %v3991 = vpop.f32.mrb[0].mxu0
  %v3992 = vadd.f32 %v2784, %v3991
  %3993 = vmatprep.mubr.bf16.mxu0 0
  %3994 = vmatmul.mubr.bf16.gmra.mrb[0].mxu0 %v3039
  %v3995 = vpop.f32.mrb[0].mxu0
  %v3996 = vadd.f32 %v2780, %v3995
  %v3997 = vpop.f32.mrb[0].mxu0
  %v3998 = vadd.f32 %v2784, %v3997
  %v3999 = vpop.f32.mrb[0].mxu0
  %v4000 = vadd.f32 %v2780, %v3999
  %v4001 = vpop.f32.mrb[0].mxu0
  %v4002 = vadd.f32 %v2784, %v4001
  %4003 = vmatprep.mubr.bf16.mxu0 0
  %4004 = vmatmul.mubr.bf16.gmra.mrb[0].mxu0 %v3042
  %v4005 = vpop.f32.mrb[0].mxu0
  %v4006 = vadd.f32 %v2780, %v4005
  %v4007 = vpop.f32.mrb[0].mxu0
  %v4008 = vadd.f32 %v2784, %v4007
  %v4009 = vpop.f32.mrb[0].mxu0
  %v4010 = vadd.f32 %v2780, %v4009
  %v4011 = vpop.f32.mrb[0].mxu0
  %v4012 = vadd.f32 %v2784, %v4011
  %4013 = vmatprep.mubr.bf16.mxu0 0
  %4014 = vmatmul.mubr.bf16.gmra.mrb[0].mxu0 %v3045
  %v4015 = vpop.f32.mrb[0].mxu0
  %v4016 = vadd.f32 %v2780, %v4015
  %v4017 = vpop.f32.mrb[0].mxu0
  %v4018 = vadd.f32 %v2784, %v4017
  %v4019 = vpop.f32.mrb[0].mxu0
  %v4020 = vadd.f32 %v2780, %v4019
  %v4021 = vpop.f32.mrb[0].mxu0
  %v4022 = vadd.f32 %v2784, %v4021
  %4023 = vmatprep.mubr.bf16.mxu0 0
  %4024 = vmatmul.mubr.bf16.gmra.mrb[0].mxu0 %v3048
  %v4025 = vpop.f32.mrb[0].mxu0
  %v4026 = vadd.f32 %v2780, %v4025
  %v4027 = vpop.f32.mrb[0].mxu0
  %v4028 = vadd.f32 %v2784, %v4027
  %v4029 = vpop.f32.mrb[0].mxu0
  %v4030 = vadd.f32 %v2780, %v4029
  %v4031 = vpop.f32.mrb[0].mxu0
  %v4032 = vadd.f32 %v2784, %v4031
  %4033 = vmatprep.mubr.bf16.mxu0 0
  %4034 = vmatmul.mubr.bf16.gmra.mrb[0].mxu0 %v3051
  %v4035 = vpop.f32.mrb[0].mxu0
  %v4036 = vadd.f32 %v2780, %v4035
  %v4037 = vpop.f32.mrb[0].mxu0
  %v4038 = vadd.f32 %v2784, %v4037
  %v4039 = vpop.f32.mrb[0].mxu0
  %v4040 = vadd.f32 %v2780, %v4039
  %v4041 = vpop.f32.mrb[0].mxu0
  %v4042 = vadd.f32 %v2784, %v4041
  %4043 = vmatprep.mubr.bf16.mxu0 0
  %4044 = vmatmul.mubr.bf16.gmra.mrb[0].mxu0 %v3054
  %v4045 = vpop.f32.mrb[0].mxu0
  %v4046 = vadd.f32 %v2780, %v4045
  %v4047 = vpop.f32.mrb[0].mxu0
  %v4048 = vadd.f32 %v2784, %v4047
  %v4049 = vpop.f32.mrb[0].mxu0
  %v4050 = vadd.f32 %v2780, %v4049
  %v4051 = vpop.f32.mrb[0].mxu0
  %v4052 = vadd.f32 %v2784, %v4051
  %4053 = vmatprep.mubr.bf16.mxu0 0
  %4054 = vmatmul.mubr.bf16.gmra.mrb[0].mxu0 %v3057
  %v4055 = vpop.f32.mrb[0].mxu0
  %v4056 = vadd.f32 %v2780, %v4055
  %v4057 = vpop.f32.mrb[0].mxu0
  %v4058 = vadd.f32 %v2784, %v4057
  %v4059 = vpop.f32.mrb[0].mxu0
  %v4060 = vadd.f32 %v2780, %v4059
  %v4061 = vpop.f32.mrb[0].mxu0
  %v4062 = vadd.f32 %v2784, %v4061
  %4063 = vmatprep.mubr.bf16.mxu0 0
  %4064 = vmatmul.mubr.bf16.gmra.mrb[0].mxu0 %v3060
  %v4065 = vpop.f32.mrb[0].mxu0
  %v4066 = vadd.f32 %v2780, %v4065
  %v4067 = vpop.f32.mrb[0].mxu0
  %v4068 = vadd.f32 %v2784, %v4067
  %v4069 = vpop.f32.mrb[0].mxu0
  %v4070 = vadd.f32 %v2780, %v4069
  %v4071 = vpop.f32.mrb[0].mxu0
  %v4072 = vadd.f32 %v2784, %v4071
  %4073 = vmatprep.mubr.bf16.mxu0 0
  %4074 = vmatmul.mubr.bf16.gmra.mrb[0].mxu0 %v3063
  %v4075 = vpop.f32.mrb[0].mxu0
  %v4076 = vadd.f32 %v2780, %v4075
  %v4077 = vpop.f32.mrb[0].mxu0
  %v4078 = vadd.f32 %v2784, %v4077
  %v4079 = vpop.f32.mrb[0].mxu0
  %v4080 = vadd.f32 %v2780, %v4079
  %v4081 = vpop.f32.mrb[0].mxu0
  %v4082 = vadd.f32 %v2784, %v4081
  %4083 = vmatprep.mubr.bf16.mxu0 0
  %4084 = vmatmul.mubr.bf16.gmra.mrb[0].mxu0 %v3066
  %v4085 = vpop.f32.mrb[0].mxu0
  %v4086 = vadd.f32 %v2780, %v4085
  %v4087 = vpop.f32.mrb[0].mxu0
  %v4088 = vadd.f32 %v2784, %v4087
  %v4089 = vpop.f32.mrb[0].mxu0
  %v4090 = vadd.f32 %v2780, %v4089
  %v4091 = vpop.f32.mrb[0].mxu0
  %v4092 = vadd.f32 %v2784, %v4091
  %4093 = vmatprep.mubr.bf16.mxu0 0
  %4094 = vmatmul.mubr.bf16.gmra.mrb[0].mxu0 %v3069
  %v4095 = vpop.f32.mrb[0].mxu0
  %v4096 = vadd.f32 %v2780, %v4095
  %v4097 = vpop.f32.mrb[0].mxu0
  %v4098 = vadd.f32 %v2784, %v4097
  %v4099 = vpop.f32.mrb[0].mxu0
  %v4100 = vadd.f32 %v2780, %v4099
  %v4101 = vpop.f32.mrb[0].mxu0
  %v4102 = vadd.f32 %v2784, %v4101
  %4103 = vmatprep.mubr.bf16.mxu0 0
  %4104 = vmatmul.mubr.bf16.gmra.mrb[0].mxu0 %v3072
  %v4105 = vpop.f32.mrb[0].mxu0
  %v4106 = vadd.f32 %v2780, %v4105
  %v4107 = vpop.f32.mrb[0].mxu0
  %v4108 = vadd.f32 %v2784, %v4107
  %v4109 = vpop.f32.mrb[0].mxu0
  %v4110 = vadd.f32 %v2780, %v4109
  %v4111 = vpop.f32.mrb[0].mxu0
  %v4112 = vadd.f32 %v2784, %v4111
  %4113 = vmatprep.mubr.bf16.mxu0 0
  %4114 = vmatmul.mubr.bf16.gmra.mrb[0].mxu0 %v3075
  %v4115 = vpop.f32.mrb[0].mxu0
  %v4116 = vadd.f32 %v2780, %v4115
  %v4117 = vpop.f32.mrb[0].mxu0
  %v4118 = vadd.f32 %v2784, %v4117
  %v4119 = vpop.f32.mrb[0].mxu0
  %v4120 = vadd.f32 %v2780, %v4119
  %v4121 = vpop.f32.mrb[0].mxu0
  %v4122 = vadd.f32 %v2784, %v4121
  %4123 = vmatprep.mubr.bf16.mxu0 0
  %4124 = vmatmul.mubr.bf16.gmra.mrb[0].mxu0 %v3078
  %v4125 = vpop.f32.mrb[0].mxu0
  %v4126 = vadd.f32 %v2780, %v4125
  %v4127 = vpop.f32.mrb[0].mxu0
  %v4128 = vadd.f32 %v2784, %v4127
  %v4129 = vpop.f32.mrb[0].mxu0
  %v4130 = vadd.f32 %v2780, %v4129
  %v4131 = vpop.f32.mrb[0].mxu0
  %v4132 = vadd.f32 %v2784, %v4131
  %4133 = vmatprep.mubr.bf16.mxu0 0
  %4134 = vmatmul.mubr.bf16.gmra.mrb[0].mxu0 %v3081
  %v4135 = vpop.f32.mrb[0].mxu0
  %v4136 = vadd.f32 %v2780, %v4135
  %v4137 = vpop.f32.mrb[0].mxu0
  %v4138 = vadd.f32 %v2784, %v4137
  %v4139 = vpop.f32.mrb[0].mxu0
  %v4140 = vadd.f32 %v2780, %v4139
  %v4141 = vpop.f32.mrb[0].mxu0
  %v4142 = vadd.f32 %v2784, %v4141
  %4143 = vmatprep.mubr.bf16.mxu0 0
  %4144 = vmatmul.mubr.bf16.gmra.mrb[0].mxu0 %v3084
  %v4145 = vpop.f32.mrb[0].mxu0
  %v4146 = vadd.f32 %v2780, %v4145
  %v4147 = vpop.f32.mrb[0].mxu0
  %v4148 = vadd.f32 %v2784, %v4147
  %v4149 = vpop.f32.mrb[0].mxu0
  %v4150 = vadd.f32 %v2780, %v4149
  %v4151 = vpop.f32.mrb[0].mxu0
  %v4152 = vadd.f32 %v2784, %v4151
  %4153 = vmatprep.mubr.bf16.mxu0 0
  %4154 = vmatmul.mubr.bf16.gmra.mrb[0].mxu0 %v3087
  %v4155 = vpop.f32.mrb[0].mxu0
  %v4156 = vadd.f32 %v2780, %v4155
  %v4157 = vpop.f32.mrb[0].mxu0
  %v4158 = vadd.f32 %v2784, %v4157
  %v4159 = vpop.f32.mrb[0].mxu0
  %v4160 = vadd.f32 %v2780, %v4159
  %v4161 = vpop.f32.mrb[0].mxu0
  %v4162 = vadd.f32 %v2784, %v4161
  %4163 = vmatprep.mubr.bf16.mxu0 0
  %4164 = vmatmul.mubr.bf16.gmra.mrb[0].mxu0 %v3090
  %v4165 = vpop.f32.mrb[0].mxu0
  %v4166 = vadd.f32 %v2780, %v4165
  %v4167 = vpop.f32.mrb[0].mxu0
  %v4168 = vadd.f32 %v2784, %v4167
  %v4169 = vpop.f32.mrb[0].mxu0
  %v4170 = vadd.f32 %v2780, %v4169
  %v4171 = vpop.f32.mrb[0].mxu0
  %v4172 = vadd.f32 %v2784, %v4171
  %4173 = vmatprep.mubr.bf16.mxu0 0
  %4174 = vmatmul.mubr.bf16.gmra.mrb[0].mxu0 %v3093
  %v4175 = vpop.f32.mrb[0].mxu0
  %v4176 = vadd.f32 %v2780, %v4175
  %v4177 = vpop.f32.mrb[0].mxu0
  %v4178 = vadd.f32 %v2784, %v4177
  %v4179 = vpop.f32.mrb[0].mxu0
  %v4180 = vadd.f32 %v2780, %v4179
  %v4181 = vpop.f32.mrb[0].mxu0
  %v4182 = vadd.f32 %v2784, %v4181
  %4183 = vmatprep.mubr.bf16.mxu0 0
  %4184 = vmatmul.mubr.bf16.gmra.mrb[0].mxu0 %v3096
  %v4185 = vpop.f32.mrb[0].mxu0
  %v4186 = vadd.f32 %v2780, %v4185
  %v4187 = vpop.f32.mrb[0].mxu0
  %v4188 = vadd.f32 %v2784, %v4187
  %v4189 = vpop.f32.mrb[0].mxu0
  %v4190 = vadd.f32 %v2780, %v4189
  %v4191 = vpop.f32.mrb[0].mxu0
  %v4192 = vadd.f32 %v2784, %v4191
  %4193 = vmatprep.mubr.bf16.mxu0 0
  %4194 = vmatmul.mubr.bf16.gmra.mrb[0].mxu0 %v3099
  %v4195 = vpop.f32.mrb[0].mxu0
  %v4196 = vadd.f32 %v2780, %v4195
  %v4197 = vpop.f32.mrb[0].mxu0
  %v4198 = vadd.f32 %v2784, %v4197
  %v4199 = vpop.f32.mrb[0].mxu0
  %v4200 = vadd.f32 %v2780, %v4199
  %v4201 = vpop.f32.mrb[0].mxu0
  %v4202 = vadd.f32 %v2784, %v4201
  %4203 = vmatprep.mubr.bf16.mxu0 0
  %4204 = vmatmul.mubr.bf16.gmra.mrb[0].mxu0 %v3102
  %v4205 = vpop.f32.mrb[0].mxu0
  %v4206 = vadd.f32 %v2780, %v4205
  %v4207 = vpop.f32.mrb[0].mxu0
  %v4208 = vadd.f32 %v2784, %v4207
  %v4209 = vpop.f32.mrb[0].mxu0
  %v4210 = vadd.f32 %v2780, %v4209
  %v4211 = vpop.f32.mrb[0].mxu0
  %v4212 = vadd.f32 %v2784, %v4211
  %4213 = vmatprep.mubr.bf16.mxu0 0
  %4214 = vmatmul.mubr.bf16.gmra.mrb[0].mxu0 %v3105
  %v4215 = vpop.f32.mrb[0].mxu0
  %v4216 = vadd.f32 %v2780, %v4215
  %v4217 = vpop.f32.mrb[0].mxu0
  %v4218 = vadd.f32 %v2784, %v4217
  %v4219 = vpop.f32.mrb[0].mxu0
  %v4220 = vadd.f32 %v2780, %v4219
  %v4221 = vpop.f32.mrb[0].mxu0
  %v4222 = vadd.f32 %v2784, %v4221
  %4223 = vmatprep.mubr.bf16.mxu0 0
  %4224 = vmatmul.mubr.bf16.gmra.mrb[0].mxu0 %v3108
  %v4225 = vpop.f32.mrb[0].mxu0
  %v4226 = vadd.f32 %v2780, %v4225
  %v4227 = vpop.f32.mrb[0].mxu0
  %v4228 = vadd.f32 %v2784, %v4227
  %v4229 = vpop.f32.mrb[0].mxu0
  %v4230 = vadd.f32 %v2780, %v4229
  %v4231 = vpop.f32.mrb[0].mxu0
  %v4232 = vadd.f32 %v2784, %v4231
  %4233 = vmatprep.mubr.bf16.mxu0 0
  %4234 = vmatmul.mubr.bf16.gmra.mrb[0].mxu0 %v3111
  %v4235 = vpop.f32.mrb[0].mxu0
  %v4236 = vadd.f32 %v2780, %v4235
  %v4237 = vpop.f32.mrb[0].mxu0
  %v4238 = vadd.f32 %v2784, %v4237
  %v4239 = vpop.f32.mrb[0].mxu0
  %v4240 = vadd.f32 %v2780, %v4239
  %v4241 = vpop.f32.mrb[0].mxu0
  %v4242 = vadd.f32 %v2784, %v4241
  %4243 = vmatprep.mubr.bf16.mxu0 0
  %4244 = vmatmul.mubr.bf16.gmra.mrb[0].mxu0 %v3114
  %v4245 = vpop.f32.mrb[0].mxu0
  %v4246 = vadd.f32 %v2780, %v4245
  %v4247 = vpop.f32.mrb[0].mxu0
  %v4248 = vadd.f32 %v2784, %v4247
  %v4249 = vpop.f32.mrb[0].mxu0
  %v4250 = vadd.f32 %v2780, %v4249
  %v4251 = vpop.f32.mrb[0].mxu0
  %v4252 = vadd.f32 %v2784, %v4251
  %4253 = vmatprep.mubr.bf16.mxu0 0
  %4254 = vmatmul.mubr.bf16.gmra.mrb[0].mxu0 %v3117
  %v4255 = vpop.f32.mrb[0].mxu0
  %v4256 = vadd.f32 %v2780, %v4255
  %v4257 = vpop.f32.mrb[0].mxu0
  %v4258 = vadd.f32 %v2784, %v4257
  %v4259 = vpop.f32.mrb[0].mxu0
  %v4260 = vadd.f32 %v2780, %v4259
  %v4261 = vpop.f32.mrb[0].mxu0
  %v4262 = vadd.f32 %v2784, %v4261
  %4263 = vmatprep.mubr.bf16.mxu0 0
  %4264 = vmatmul.mubr.bf16.gmra.mrb[0].mxu0 %v3120
  %v4265 = vpop.f32.mrb[0].mxu0
  %v4266 = vadd.f32 %v2780, %v4265
  %v4267 = vpop.f32.mrb[0].mxu0
  %v4268 = vadd.f32 %v2784, %v4267
  %v4269 = vpop.f32.mrb[0].mxu0
  %v4270 = vadd.f32 %v2780, %v4269
  %v4271 = vpop.f32.mrb[0].mxu0
  %v4272 = vadd.f32 %v2784, %v4271
  %4273 = vmatprep.mubr.bf16.mxu0 0
  %4274 = vmatmul.mubr.bf16.gmra.mrb[0].mxu0 %v3123
  %v4275 = vpop.f32.mrb[0].mxu0
  %v4276 = vadd.f32 %v2780, %v4275
  %v4277 = vpop.f32.mrb[0].mxu0
  %v4278 = vadd.f32 %v2784, %v4277
  %v4279 = vpop.f32.mrb[0].mxu0
  %v4280 = vadd.f32 %v2780, %v4279
  %v4281 = vpop.f32.mrb[0].mxu0
  %v4282 = vadd.f32 %v2784, %v4281
  %4283 = vmatprep.mubr.bf16.mxu0 0
  %4284 = vmatmul.mubr.bf16.gmra.mrb[0].mxu0 %v3126
  %v4285 = vpop.f32.mrb[0].mxu0
  %v4286 = vadd.f32 %v2780, %v4285
  %v4287 = vpop.f32.mrb[0].mxu0
  %v4288 = vadd.f32 %v2784, %v4287
  %v4289 = vpop.f32.mrb[0].mxu0
  %v4290 = vadd.f32 %v2780, %v4289
  %v4291 = vpop.f32.mrb[0].mxu0
  %v4292 = vadd.f32 %v2784, %v4291
  %4293 = vmatprep.mubr.bf16.mxu0 0
  %4294 = vmatmul.mubr.bf16.gmra.mrb[0].mxu0 %v3129
  %v4295 = vpop.f32.mrb[0].mxu0
  %v4296 = vadd.f32 %v2780, %v4295
  %v4297 = vpop.f32.mrb[0].mxu0
  %v4298 = vadd.f32 %v2784, %v4297
  %v4299 = vpop.f32.mrb[0].mxu0
  %v4300 = vadd.f32 %v2780, %v4299
  %v4301 = vpop.f32.mrb[0].mxu0
  %v4302 = vadd.f32 %v2784, %v4301
  %4303 = vmatprep.mubr.bf16.mxu0 0
  %4304 = vmatmul.mubr.bf16.gmra.mrb[0].mxu0 %v3132
  %v4305 = vpop.f32.mrb[0].mxu0
  %v4306 = vadd.f32 %v2780, %v4305
  %v4307 = vpop.f32.mrb[0].mxu0
  %v4308 = vadd.f32 %v2784, %v4307
  %v4309 = vpop.f32.mrb[0].mxu0
  %v4310 = vadd.f32 %v2780, %v4309
  %v4311 = vpop.f32.mrb[0].mxu0
  %v4312 = vadd.f32 %v2784, %v4311
  %4313 = vmatprep.mubr.bf16.mxu0 0
  %4314 = vmatmul.mubr.bf16.gmra.mrb[0].mxu0 %v3135
  %v4315 = vpop.f32.mrb[0].mxu0
  %v4316 = vadd.f32 %v2780, %v4315
  %v4317 = vpop.f32.mrb[0].mxu0
  %v4318 = vadd.f32 %v2784, %v4317
  %v4319 = vpop.f32.mrb[0].mxu0
  %v4320 = vadd.f32 %v2780, %v4319
  %v4321 = vpop.f32.mrb[0].mxu0
  %v4322 = vadd.f32 %v2784, %v4321
  %4323 = vmatprep.mubr.bf16.mxu0 0
  %4324 = vmatmul.mubr.bf16.gmra.mrb[0].mxu0 %v3138
  %v4325 = vpop.f32.mrb[0].mxu0
  %v4326 = vadd.f32 %v2780, %v4325
  %v4327 = vpop.f32.mrb[0].mxu0
  %v4328 = vadd.f32 %v2784, %v4327
  %v4329 = vpop.f32.mrb[0].mxu0
  %v4330 = vadd.f32 %v2780, %v4329
  %v4331 = vpop.f32.mrb[0].mxu0
  %v4332 = vadd.f32 %v2784, %v4331
  %4333 = vmatprep.mubr.bf16.mxu0 0
  %4334 = vmatmul.mubr.bf16.gmra.mrb[0].mxu0 %v3141
  %v4335 = vpop.f32.mrb[0].mxu0
  %v4336 = vadd.f32 %v2780, %v4335
  %v4337 = vpop.f32.mrb[0].mxu0
  %v4338 = vadd.f32 %v2784, %v4337
  %v4339 = vpop.f32.mrb[0].mxu0
  %v4340 = vadd.f32 %v2780, %v4339
  %v4341 = vpop.f32.mrb[0].mxu0
  %v4342 = vadd.f32 %v2784, %v4341
  %4343 = vmatprep.mubr.bf16.mxu0 0
  %4344 = vmatmul.mubr.bf16.gmra.mrb[0].mxu0 %v3144
  %v4345 = vpop.f32.mrb[0].mxu0
  %v4346 = vadd.f32 %v2780, %v4345
  %v4347 = vpop.f32.mrb[0].mxu0
  %v4348 = vadd.f32 %v2784, %v4347
  %v4349 = vpop.f32.mrb[0].mxu0
  %v4350 = vadd.f32 %v2780, %v4349
  %v4351 = vpop.f32.mrb[0].mxu0
  %v4352 = vadd.f32 %v2784, %v4351
  %4353 = vmatprep.mubr.bf16.mxu0 0
  %4354 = vmatmul.mubr.bf16.gmra.mrb[0].mxu0 %v3147
  %v4355 = vpop.f32.mrb[0].mxu0
  %v4356 = vadd.f32 %v2780, %v4355
  %v4357 = vpop.f32.mrb[0].mxu0
  %v4358 = vadd.f32 %v2784, %v4357
  %v4359 = vpop.f32.mrb[0].mxu0
  %v4360 = vadd.f32 %v2780, %v4359
  %v4361 = vpop.f32.mrb[0].mxu0
  %v4362 = vadd.f32 %v2784, %v4361
  %4363 = vmatprep.mubr.bf16.mxu0 0
  %4364 = vmatmul.mubr.bf16.gmra.mrb[0].mxu0 %v3150
  %v4365 = vpop.f32.mrb[0].mxu0
  %v4366 = vadd.f32 %v2780, %v4365
  %v4367 = vpop.f32.mrb[0].mxu0
  %v4368 = vadd.f32 %v2784, %v4367
  %v4369 = vpop.f32.mrb[0].mxu0
  %v4370 = vadd.f32 %v2780, %v4369
  %v4371 = vpop.f32.mrb[0].mxu0
  %v4372 = vadd.f32 %v2784, %v4371
  %4373 = vmatprep.mubr.bf16.mxu0 0
  %4374 = vmatmul.mubr.bf16.gmra.mrb[0].mxu0 %v3153
  %v4375 = vpop.f32.mrb[0].mxu0
  %v4376 = vadd.f32 %v2780, %v4375
  %v4377 = vpop.f32.mrb[0].mxu0
  %v4378 = vadd.f32 %v2784, %v4377
  %v4379 = vpop.f32.mrb[0].mxu0
  %v4380 = vadd.f32 %v2780, %v4379
  %v4381 = vpop.f32.mrb[0].mxu0
  %v4382 = vadd.f32 %v2784, %v4381
  %4383 = vmatprep.mubr.bf16.mxu0 0
  %4384 = vmatmul.mubr.bf16.gmra.mrb[0].mxu0 %v3156
  %v4385 = vpop.f32.mrb[0].mxu0
  %v4386 = vadd.f32 %v2780, %v4385
  %v4387 = vpop.f32.mrb[0].mxu0
  %v4388 = vadd.f32 %v2784, %v4387
  %v4389 = vpop.f32.mrb[0].mxu0
  %v4390 = vadd.f32 %v2780, %v4389
  %v4391 = vpop.f32.mrb[0].mxu0
  %v4392 = vadd.f32 %v2784, %v4391
  %4393 = vmatprep.mubr.bf16.mxu0 0
  %4394 = vmatmul.mubr.bf16.gmra.mrb[0].mxu0 %v3159
  %v4395 = vpop.f32.mrb[0].mxu0
  %v4396 = vadd.f32 %v2780, %v4395
  %v4397 = vpop.f32.mrb[0].mxu0
  %v4398 = vadd.f32 %v2784, %v4397
  %v4399 = vpop.f32.mrb[0].mxu0
  %v4400 = vadd.f32 %v2780, %v4399
  %v4401 = vpop.f32.mrb[0].mxu0
  %v4402 = vadd.f32 %v2784, %v4401
  %4403 = vmatprep.mubr.bf16.mxu0 0
  %4404 = vmatmul.mubr.bf16.gmra.mrb[0].mxu0 %v3162
  %v4405 = vpop.f32.mrb[0].mxu0
  %v4406 = vadd.f32 %v2780, %v4405
  %v4407 = vpop.f32.mrb[0].mxu0
  %v4408 = vadd.f32 %v2784, %v4407
  %v4409 = vpop.f32.mrb[0].mxu0
  %v4410 = vadd.f32 %v2780, %v4409
  %v4411 = vpop.f32.mrb[0].mxu0
  %v4412 = vadd.f32 %v2784, %v4411
  %4413 = vmatprep.mubr.bf16.mxu0 0
  %4414 = vmatmul.mubr.bf16.gmra.mrb[0].mxu0 %v3165
  %v4415 = vpop.f32.mrb[0].mxu0
  %v4416 = vadd.f32 %v2780, %v4415
  %v4417 = vpop.f32.mrb[0].mxu0
  %v4418 = vadd.f32 %v2784, %v4417
  %v4419 = vpop.f32.mrb[0].mxu0
  %v4420 = vadd.f32 %v2780, %v4419
  %v4421 = vpop.f32.mrb[0].mxu0
  %v4422 = vadd.f32 %v2784, %v4421
  %4423 = vmatprep.mubr.bf16.mxu0 0
  %4424 = vmatmul.mubr.bf16.gmra.mrb[0].mxu0 %v3168
  %v4425 = vpop.f32.mrb[0].mxu0
  %v4426 = vadd.f32 %v2780, %v4425
  %v4427 = vpop.f32.mrb[0].mxu0
  %v4428 = vadd.f32 %v2784, %v4427
  %v4429 = vpop.f32.mrb[0].mxu0
  %v4430 = vadd.f32 %v2780, %v4429
  %v4431 = vpop.f32.mrb[0].mxu0
  %v4432 = vadd.f32 %v2784, %v4431
  %4433 = vmatprep.mubr.bf16.mxu0 0
  %4434 = vmatmul.mubr.bf16.gmra.mrb[0].mxu0 %v3171
  %v4435 = vpop.f32.mrb[0].mxu0
  %v4436 = vadd.f32 %v2780, %v4435
  %v4437 = vpop.f32.mrb[0].mxu0
  %v4438 = vadd.f32 %v2784, %v4437
  %v4439 = vpop.f32.mrb[0].mxu0
  %v4440 = vadd.f32 %v2780, %v4439
  %v4441 = vpop.f32.mrb[0].mxu0
  %v4442 = vadd.f32 %v2784, %v4441
  %4443 = vmatprep.mubr.bf16.mxu0 0
  %4444 = vmatmul.mubr.bf16.gmra.mrb[0].mxu0 %v3174
  %v4445 = vpop.f32.mrb[0].mxu0
  %v4446 = vadd.f32 %v2780, %v4445
  %v4447 = vpop.f32.mrb[0].mxu0
  %v4448 = vadd.f32 %v2784, %v4447
  %v4449 = vpop.f32.mrb[0].mxu0
  %v4450 = vadd.f32 %v2780, %v4449
  %v4451 = vpop.f32.mrb[0].mxu0
  %v4452 = vadd.f32 %v2784, %v4451
  %4453 = vmatprep.mubr.bf16.mxu0 0
  %4454 = vmatmul.mubr.bf16.gmra.mrb[0].mxu0 %v3177
  %v4455 = vpop.f32.mrb[0].mxu0
  %v4456 = vadd.f32 %v2780, %v4455
  %v4457 = vpop.f32.mrb[0].mxu0
  %v4458 = vadd.f32 %v2784, %v4457
  %v4459 = vpop.f32.mrb[0].mxu0
  %v4460 = vadd.f32 %v2780, %v4459
  %v4461 = vpop.f32.mrb[0].mxu0
  %v4462 = vadd.f32 %v2784, %v4461
  %4463 = vmatprep.mubr.bf16.mxu0 0
  %4464 = vmatmul.mubr.bf16.gmra.mrb[0].mxu0 %v3180
  %v4465 = vpop.f32.mrb[0].mxu0
  %v4466 = vadd.f32 %v2780, %v4465
  %v4467 = vpop.f32.mrb[0].mxu0
  %v4468 = vadd.f32 %v2784, %v4467
  %v4469 = vpop.f32.mrb[0].mxu0
  %v4470 = vadd.f32 %v2780, %v4469
  %v4471 = vpop.f32.mrb[0].mxu0
  %v4472 = vadd.f32 %v2784, %v4471
  %4473 = vmatprep.mubr.bf16.mxu0 0
  %4474 = vmatmul.mubr.bf16.gmra.mrb[0].mxu0 %v3183
  %v4475 = vpop.f32.mrb[0].mxu0
  %v4476 = vadd.f32 %v2780, %v4475
  %v4477 = vpop.f32.mrb[0].mxu0
  %v4478 = vadd.f32 %v2784, %v4477
  %v4479 = vpop.f32.mrb[0].mxu0
  %v4480 = vadd.f32 %v2780, %v4479
  %v4481 = vpop.f32.mrb[0].mxu0
  %v4482 = vadd.f32 %v2784, %v4481
  %4483 = vmatprep.mubr.bf16.mxu0 0
  %4484 = vmatmul.mubr.bf16.gmra.mrb[0].mxu0 %v3186
  %v4485 = vpop.f32.mrb[0].mxu0
  %v4486 = vadd.f32 %v2780, %v4485
  %v4487 = vpop.f32.mrb[0].mxu0
  %v4488 = vadd.f32 %v2784, %v4487
  %v4489 = vpop.f32.mrb[0].mxu0
  %v4490 = vadd.f32 %v2780, %v4489
  %v4491 = vpop.f32.mrb[0].mxu0
  %v4492 = vadd.f32 %v2784, %v4491
  %4493 = vmatprep.mubr.bf16.mxu0 0
  %4494 = vmatmul.mubr.bf16.gmra.mrb[0].mxu0 %v3189
  %v4495 = vpop.f32.mrb[0].mxu0
  %v4496 = vadd.f32 %v2780, %v4495
  %v4497 = vpop.f32.mrb[0].mxu0
  %v4498 = vadd.f32 %v2784, %v4497
  %v4499 = vpop.f32.mrb[0].mxu0
  %v4500 = vadd.f32 %v2780, %v4499
  %v4501 = vpop.f32.mrb[0].mxu0
  %v4502 = vadd.f32 %v2784, %v4501
  %4503 = vdwg.mxu0
  %v4504 = vmax.f32 %v3226, 0.0
  %v4505 = vmax.f32 %v3228, 0.0
  %v4506 = vmax.f32 %v3230, 0.0
  %v4507 = vmax.f32 %v3232, 0.0
  %v4508 = vmax.f32 %v3236, 0.0
  %v4509 = vmax.f32 %v3238, 0.0
  %v4510 = vmax.f32 %v3240, 0.0
  %v4511 = vmax.f32 %v3242, 0.0
  %v4512 = vmax.f32 %v3246, 0.0
  %v4513 = vmax.f32 %v3248, 0.0
  %v4514 = vmax.f32 %v3250, 0.0
  %v4515 = vmax.f32 %v3252, 0.0
  %v4516 = vmax.f32 %v3256, 0.0
  %v4517 = vmax.f32 %v3258, 0.0
  %v4518 = vmax.f32 %v3260, 0.0
  %v4519 = vmax.f32 %v3262, 0.0
  %v4520 = vmax.f32 %v3266, 0.0
  %v4521 = vmax.f32 %v3268, 0.0
  %v4522 = vmax.f32 %v3270, 0.0
  %v4523 = vmax.f32 %v3272, 0.0
  %v4524 = vmax.f32 %v3276, 0.0
  %v4525 = vmax.f32 %v3278, 0.0
  %v4526 = vmax.f32 %v3280, 0.0
  %v4527 = vmax.f32 %v3282, 0.0
  %v4528 = vmax.f32 %v3286, 0.0
  %v4529 = vmax.f32 %v3288, 0.0
  %v4530 = vmax.f32 %v3290, 0.0
  %v4531 = vmax.f32 %v3292, 0.0
  %v4532 = vmax.f32 %v3296, 0.0
  %v4533 = vmax.f32 %v3298, 0.0
  %v4534 = vmax.f32 %v3300, 0.0
  %v4535 = vmax.f32 %v3302, 0.0
  %v4536 = vmax.f32 %v3306, 0.0
  %v4537 = vmax.f32 %v3308, 0.0
  %v4538 = vmax.f32 %v3310, 0.0
  %v4539 = vmax.f32 %v3312, 0.0
  %v4540 = vmax.f32 %v3316, 0.0
  %v4541 = vmax.f32 %v3318, 0.0
  %v4542 = vmax.f32 %v3320, 0.0
  %v4543 = vmax.f32 %v3322, 0.0
  %v4544 = vmax.f32 %v3326, 0.0
  %v4545 = vmax.f32 %v3328, 0.0
  %v4546 = vmax.f32 %v3330, 0.0
  %v4547 = vmax.f32 %v3332, 0.0
  %v4548 = vmax.f32 %v3336, 0.0
  %v4549 = vmax.f32 %v3338, 0.0
  %v4550 = vmax.f32 %v3340, 0.0
  %v4551 = vmax.f32 %v3342, 0.0
  %v4552 = vmax.f32 %v3346, 0.0
  %v4553 = vmax.f32 %v3348, 0.0
  %v4554 = vmax.f32 %v3350, 0.0
  %v4555 = vmax.f32 %v3352, 0.0
  %v4556 = vmax.f32 %v3356, 0.0
  %v4557 = vmax.f32 %v3358, 0.0
  %v4558 = vmax.f32 %v3360, 0.0
  %v4559 = vmax.f32 %v3362, 0.0
  %v4560 = vmax.f32 %v3366, 0.0
  %v4561 = vmax.f32 %v3368, 0.0
  %v4562 = vmax.f32 %v3370, 0.0
  %v4563 = vmax.f32 %v3372, 0.0
  %v4564 = vmax.f32 %v3376, 0.0
  %v4565 = vmax.f32 %v3378, 0.0
  %v4566 = vmax.f32 %v3380, 0.0
  %v4567 = vmax.f32 %v3382, 0.0
  %v4568 = vmax.f32 %v3386, 0.0
  %v4569 = vmax.f32 %v3388, 0.0
  %v4570 = vmax.f32 %v3390, 0.0
  %v4571 = vmax.f32 %v3392, 0.0
  %v4572 = vmax.f32 %v3396, 0.0
  %v4573 = vmax.f32 %v3398, 0.0
  %v4574 = vmax.f32 %v3400, 0.0
  %v4575 = vmax.f32 %v3402, 0.0
  %v4576 = vmax.f32 %v3406, 0.0
  %v4577 = vmax.f32 %v3408, 0.0
  %v4578 = vmax.f32 %v3410, 0.0
  %v4579 = vmax.f32 %v3412, 0.0
  %v4580 = vmax.f32 %v3416, 0.0
  %v4581 = vmax.f32 %v3418, 0.0
  %v4582 = vmax.f32 %v3420, 0.0
  %v4583 = vmax.f32 %v3422, 0.0
  %v4584 = vmax.f32 %v3426, 0.0
  %v4585 = vmax.f32 %v3428, 0.0
  %v4586 = vmax.f32 %v3430, 0.0
  %v4587 = vmax.f32 %v3432, 0.0
  %v4588 = vmax.f32 %v3436, 0.0
  %v4589 = vmax.f32 %v3438, 0.0
  %v4590 = vmax.f32 %v3440, 0.0
  %v4591 = vmax.f32 %v3442, 0.0
  %v4592 = vmax.f32 %v3446, 0.0
  %v4593 = vmax.f32 %v3448, 0.0
  %v4594 = vmax.f32 %v3450, 0.0
  %v4595 = vmax.f32 %v3452, 0.0
  %v4596 = vmax.f32 %v3456, 0.0
  %v4597 = vmax.f32 %v3458, 0.0
  %v4598 = vmax.f32 %v3460, 0.0
  %v4599 = vmax.f32 %v3462, 0.0
  %v4600 = vmax.f32 %v3466, 0.0
  %v4601 = vmax.f32 %v3468, 0.0
  %v4602 = vmax.f32 %v3470, 0.0
  %v4603 = vmax.f32 %v3472, 0.0
  %v4604 = vmax.f32 %v3476, 0.0
  %v4605 = vmax.f32 %v3478, 0.0
  %v4606 = vmax.f32 %v3480, 0.0
  %v4607 = vmax.f32 %v3482, 0.0
  %v4608 = vmax.f32 %v3486, 0.0
  %v4609 = vmax.f32 %v3488, 0.0
  %v4610 = vmax.f32 %v3490, 0.0
  %v4611 = vmax.f32 %v3492, 0.0
  %v4612 = vmax.f32 %v3496, 0.0
  %v4613 = vmax.f32 %v3498, 0.0
  %v4614 = vmax.f32 %v3500, 0.0
  %v4615 = vmax.f32 %v3502, 0.0
  %v4616 = vmax.f32 %v3506, 0.0
  %v4617 = vmax.f32 %v3508, 0.0
  %v4618 = vmax.f32 %v3510, 0.0
  %v4619 = vmax.f32 %v3512, 0.0
  %v4620 = vmax.f32 %v3516, 0.0
  %v4621 = vmax.f32 %v3518, 0.0
  %v4622 = vmax.f32 %v3520, 0.0
  %v4623 = vmax.f32 %v3522, 0.0
  %v4624 = vmax.f32 %v3526, 0.0
  %v4625 = vmax.f32 %v3528, 0.0
  %v4626 = vmax.f32 %v3530, 0.0
  %v4627 = vmax.f32 %v3532, 0.0
  %v4628 = vmax.f32 %v3536, 0.0
  %v4629 = vmax.f32 %v3538, 0.0
  %v4630 = vmax.f32 %v3540, 0.0
  %v4631 = vmax.f32 %v3542, 0.0
  %v4632 = vmax.f32 %v3546, 0.0
  %v4633 = vmax.f32 %v3548, 0.0
  %v4634 = vmax.f32 %v3550, 0.0
  %v4635 = vmax.f32 %v3552, 0.0
  %v4636 = vmax.f32 %v3556, 0.0
  %v4637 = vmax.f32 %v3558, 0.0
  %v4638 = vmax.f32 %v3560, 0.0
  %v4639 = vmax.f32 %v3562, 0.0
  %v4640 = vmax.f32 %v3566, 0.0
  %v4641 = vmax.f32 %v3568, 0.0
  %v4642 = vmax.f32 %v3570, 0.0
  %v4643 = vmax.f32 %v3572, 0.0
  %v4644 = vmax.f32 %v3576, 0.0
  %v4645 = vmax.f32 %v3578, 0.0
  %v4646 = vmax.f32 %v3580, 0.0
  %v4647 = vmax.f32 %v3582, 0.0
  %v4648 = vmax.f32 %v3586, 0.0
  %v4649 = vmax.f32 %v3588, 0.0
  %v4650 = vmax.f32 %v3590, 0.0
  %v4651 = vmax.f32 %v3592, 0.0
  %v4652 = vmax.f32 %v3596, 0.0
  %v4653 = vmax.f32 %v3598, 0.0
  %v4654 = vmax.f32 %v3600, 0.0
  %v4655 = vmax.f32 %v3602, 0.0
  %v4656 = vmax.f32 %v3606, 0.0
  %v4657 = vmax.f32 %v3608, 0.0
  %v4658 = vmax.f32 %v3610, 0.0
  %v4659 = vmax.f32 %v3612, 0.0
  %v4660 = vmax.f32 %v3616, 0.0
  %v4661 = vmax.f32 %v3618, 0.0
  %v4662 = vmax.f32 %v3620, 0.0
  %v4663 = vmax.f32 %v3622, 0.0
  %v4664 = vmax.f32 %v3626, 0.0
  %v4665 = vmax.f32 %v3628, 0.0
  %v4666 = vmax.f32 %v3630, 0.0
  %v4667 = vmax.f32 %v3632, 0.0
  %v4668 = vmax.f32 %v3636, 0.0
  %v4669 = vmax.f32 %v3638, 0.0
  %v4670 = vmax.f32 %v3640, 0.0
  %v4671 = vmax.f32 %v3642, 0.0
  %v4672 = vmax.f32 %v3646, 0.0
  %v4673 = vmax.f32 %v3648, 0.0
  %v4674 = vmax.f32 %v3650, 0.0
  %v4675 = vmax.f32 %v3652, 0.0
  %v4676 = vmax.f32 %v3656, 0.0
  %v4677 = vmax.f32 %v3658, 0.0
  %v4678 = vmax.f32 %v3660, 0.0
  %v4679 = vmax.f32 %v3662, 0.0
  %v4680 = vmax.f32 %v3666, 0.0
  %v4681 = vmax.f32 %v3668, 0.0
  %v4682 = vmax.f32 %v3670, 0.0
  %v4683 = vmax.f32 %v3672, 0.0
  %v4684 = vmax.f32 %v3676, 0.0
  %v4685 = vmax.f32 %v3678, 0.0
  %v4686 = vmax.f32 %v3680, 0.0
  %v4687 = vmax.f32 %v3682, 0.0
  %v4688 = vmax.f32 %v3686, 0.0
  %v4689 = vmax.f32 %v3688, 0.0
  %v4690 = vmax.f32 %v3690, 0.0
  %v4691 = vmax.f32 %v3692, 0.0
  %v4692 = vmax.f32 %v3696, 0.0
  %v4693 = vmax.f32 %v3698, 0.0
  %v4694 = vmax.f32 %v3700, 0.0
  %v4695 = vmax.f32 %v3702, 0.0
  %v4696 = vmax.f32 %v3706, 0.0
  %v4697 = vmax.f32 %v3708, 0.0
  %v4698 = vmax.f32 %v3710, 0.0
  %v4699 = vmax.f32 %v3712, 0.0
  %v4700 = vmax.f32 %v3716, 0.0
  %v4701 = vmax.f32 %v3718, 0.0
  %v4702 = vmax.f32 %v3720, 0.0
  %v4703 = vmax.f32 %v3722, 0.0
  %v4704 = vmax.f32 %v3726, 0.0
  %v4705 = vmax.f32 %v3728, 0.0
  %v4706 = vmax.f32 %v3730, 0.0
  %v4707 = vmax.f32 %v3732, 0.0
  %v4708 = vmax.f32 %v3736, 0.0
  %v4709 = vmax.f32 %v3738, 0.0
  %v4710 = vmax.f32 %v3740, 0.0
  %v4711 = vmax.f32 %v3742, 0.0
  %v4712 = vmax.f32 %v3746, 0.0
  %v4713 = vmax.f32 %v3748, 0.0
  %v4714 = vmax.f32 %v3750, 0.0
  %v4715 = vmax.f32 %v3752, 0.0
  %v4716 = vmax.f32 %v3756, 0.0
  %v4717 = vmax.f32 %v3758, 0.0
  %v4718 = vmax.f32 %v3760, 0.0
  %v4719 = vmax.f32 %v3762, 0.0
  %v4720 = vmax.f32 %v3766, 0.0
  %v4721 = vmax.f32 %v3768, 0.0
  %v4722 = vmax.f32 %v3770, 0.0
  %v4723 = vmax.f32 %v3772, 0.0
  %v4724 = vmax.f32 %v3776, 0.0
  %v4725 = vmax.f32 %v3778, 0.0
  %v4726 = vmax.f32 %v3780, 0.0
  %v4727 = vmax.f32 %v3782, 0.0
  %v4728 = vmax.f32 %v3786, 0.0
  %v4729 = vmax.f32 %v3788, 0.0
  %v4730 = vmax.f32 %v3790, 0.0
  %v4731 = vmax.f32 %v3792, 0.0
  %v4732 = vmax.f32 %v3796, 0.0
  %v4733 = vmax.f32 %v3798, 0.0
  %v4734 = vmax.f32 %v3800, 0.0
  %v4735 = vmax.f32 %v3802, 0.0
  %v4736 = vmax.f32 %v3806, 0.0
  %v4737 = vmax.f32 %v3808, 0.0
  %v4738 = vmax.f32 %v3810, 0.0
  %v4739 = vmax.f32 %v3812, 0.0
  %v4740 = vmax.f32 %v3816, 0.0
  %v4741 = vmax.f32 %v3818, 0.0
  %v4742 = vmax.f32 %v3820, 0.0
  %v4743 = vmax.f32 %v3822, 0.0
  %v4744 = vmax.f32 %v3826, 0.0
  %v4745 = vmax.f32 %v3828, 0.0
  %v4746 = vmax.f32 %v3830, 0.0
  %v4747 = vmax.f32 %v3832, 0.0
  %v4748 = vmax.f32 %v3836, 0.0
  %v4749 = vmax.f32 %v3838, 0.0
  %v4750 = vmax.f32 %v3840, 0.0
  %v4751 = vmax.f32 %v3842, 0.0
  %v4752 = vmax.f32 %v3846, 0.0
  %v4753 = vmax.f32 %v3848, 0.0
  %v4754 = vmax.f32 %v3850, 0.0
  %v4755 = vmax.f32 %v3852, 0.0
  %v4756 = vmax.f32 %v3856, 0.0
  %v4757 = vmax.f32 %v3858, 0.0
  %v4758 = vmax.f32 %v3860, 0.0
  %v4759 = vmax.f32 %v3862, 0.0
  %v4760 = vmax.f32 %v3866, 0.0
  %v4761 = vmax.f32 %v3868, 0.0
  %v4762 = vmax.f32 %v3870, 0.0
  %v4763 = vmax.f32 %v3872, 0.0
  %v4764 = vmax.f32 %v3876, 0.0
  %v4765 = vmax.f32 %v3878, 0.0
  %v4766 = vmax.f32 %v3880, 0.0
  %v4767 = vmax.f32 %v3882, 0.0
  %v4768 = vmax.f32 %v3886, 0.0
  %v4769 = vmax.f32 %v3888, 0.0
  %v4770 = vmax.f32 %v3890, 0.0
  %v4771 = vmax.f32 %v3892, 0.0
  %v4772 = vmax.f32 %v3896, 0.0
  %v4773 = vmax.f32 %v3898, 0.0
  %v4774 = vmax.f32 %v3900, 0.0
  %v4775 = vmax.f32 %v3902, 0.0
  %v4776 = vmax.f32 %v3906, 0.0
  %v4777 = vmax.f32 %v3908, 0.0
  %v4778 = vmax.f32 %v3910, 0.0
  %v4779 = vmax.f32 %v3912, 0.0
  %v4780 = vmax.f32 %v3916, 0.0
  %v4781 = vmax.f32 %v3918, 0.0
  %v4782 = vmax.f32 %v3920, 0.0
  %v4783 = vmax.f32 %v3922, 0.0
  %v4784 = vmax.f32 %v3926, 0.0
  %v4785 = vmax.f32 %v3928, 0.0
  %v4786 = vmax.f32 %v3930, 0.0
  %v4787 = vmax.f32 %v3932, 0.0
  %v4788 = vmax.f32 %v3936, 0.0
  %v4789 = vmax.f32 %v3938, 0.0
  %v4790 = vmax.f32 %v3940, 0.0
  %v4791 = vmax.f32 %v3942, 0.0
  %v4792 = vmax.f32 %v3946, 0.0
  %v4793 = vmax.f32 %v3948, 0.0
  %v4794 = vmax.f32 %v3950, 0.0
  %v4795 = vmax.f32 %v3952, 0.0
  %v4796 = vmax.f32 %v3956, 0.0
  %v4797 = vmax.f32 %v3958, 0.0
  %v4798 = vmax.f32 %v3960, 0.0
  %v4799 = vmax.f32 %v3962, 0.0
  %v4800 = vmax.f32 %v3966, 0.0
  %v4801 = vmax.f32 %v3968, 0.0
  %v4802 = vmax.f32 %v3970, 0.0
  %v4803 = vmax.f32 %v3972, 0.0
  %v4804 = vmax.f32 %v3976, 0.0
  %v4805 = vmax.f32 %v3978, 0.0
  %v4806 = vmax.f32 %v3980, 0.0
  %v4807 = vmax.f32 %v3982, 0.0
  %v4808 = vmax.f32 %v3986, 0.0
  %v4809 = vmax.f32 %v3988, 0.0
  %v4810 = vmax.f32 %v3990, 0.0
  %v4811 = vmax.f32 %v3992, 0.0
  %v4812 = vmax.f32 %v3996, 0.0
  %v4813 = vmax.f32 %v3998, 0.0
  %v4814 = vmax.f32 %v4000, 0.0
  %v4815 = vmax.f32 %v4002, 0.0
  %v4816 = vmax.f32 %v4006, 0.0
  %v4817 = vmax.f32 %v4008, 0.0
  %v4818 = vmax.f32 %v4010, 0.0
  %v4819 = vmax.f32 %v4012, 0.0
  %v4820 = vmax.f32 %v4016, 0.0
  %v4821 = vmax.f32 %v4018, 0.0
  %v4822 = vmax.f32 %v4020, 0.0
  %v4823 = vmax.f32 %v4022, 0.0
  %v4824 = vmax.f32 %v4026, 0.0
  %v4825 = vmax.f32 %v4028, 0.0
  %v4826 = vmax.f32 %v4030, 0.0
  %v4827 = vmax.f32 %v4032, 0.0
  %v4828 = vmax.f32 %v4036, 0.0
  %v4829 = vmax.f32 %v4038, 0.0
  %v4830 = vmax.f32 %v4040, 0.0
  %v4831 = vmax.f32 %v4042, 0.0
  %v4832 = vmax.f32 %v4046, 0.0
  %v4833 = vmax.f32 %v4048, 0.0
  %v4834 = vmax.f32 %v4050, 0.0
  %v4835 = vmax.f32 %v4052, 0.0
  %v4836 = vmax.f32 %v4056, 0.0
  %v4837 = vmax.f32 %v4058, 0.0
  %v4838 = vmax.f32 %v4060, 0.0
  %v4839 = vmax.f32 %v4062, 0.0
  %v4840 = vmax.f32 %v4066, 0.0
  %v4841 = vmax.f32 %v4068, 0.0
  %v4842 = vmax.f32 %v4070, 0.0
  %v4843 = vmax.f32 %v4072, 0.0
  %v4844 = vmax.f32 %v4076, 0.0
  %v4845 = vmax.f32 %v4078, 0.0
  %v4846 = vmax.f32 %v4080, 0.0
  %v4847 = vmax.f32 %v4082, 0.0
  %v4848 = vmax.f32 %v4086, 0.0
  %v4849 = vmax.f32 %v4088, 0.0
  %v4850 = vmax.f32 %v4090, 0.0
  %v4851 = vmax.f32 %v4092, 0.0
  %v4852 = vmax.f32 %v4096, 0.0
  %v4853 = vmax.f32 %v4098, 0.0
  %v4854 = vmax.f32 %v4100, 0.0
  %v4855 = vmax.f32 %v4102, 0.0
  %v4856 = vmax.f32 %v4106, 0.0
  %v4857 = vmax.f32 %v4108, 0.0
  %v4858 = vmax.f32 %v4110, 0.0
  %v4859 = vmax.f32 %v4112, 0.0
  %v4860 = vmax.f32 %v4116, 0.0
  %v4861 = vmax.f32 %v4118, 0.0
  %v4862 = vmax.f32 %v4120, 0.0
  %v4863 = vmax.f32 %v4122, 0.0
  %v4864 = vmax.f32 %v4126, 0.0
  %v4865 = vmax.f32 %v4128, 0.0
  %v4866 = vmax.f32 %v4130, 0.0
  %v4867 = vmax.f32 %v4132, 0.0
  %v4868 = vmax.f32 %v4136, 0.0
  %v4869 = vmax.f32 %v4138, 0.0
  %v4870 = vmax.f32 %v4140, 0.0
  %v4871 = vmax.f32 %v4142, 0.0
  %v4872 = vmax.f32 %v4146, 0.0
  %v4873 = vmax.f32 %v4148, 0.0
  %v4874 = vmax.f32 %v4150, 0.0
  %v4875 = vmax.f32 %v4152, 0.0
  %v4876 = vmax.f32 %v4156, 0.0
  %v4877 = vmax.f32 %v4158, 0.0
  %v4878 = vmax.f32 %v4160, 0.0
  %v4879 = vmax.f32 %v4162, 0.0
  %v4880 = vmax.f32 %v4166, 0.0
  %v4881 = vmax.f32 %v4168, 0.0
  %v4882 = vmax.f32 %v4170, 0.0
  %v4883 = vmax.f32 %v4172, 0.0
  %v4884 = vmax.f32 %v4176, 0.0
  %v4885 = vmax.f32 %v4178, 0.0
  %v4886 = vmax.f32 %v4180, 0.0
  %v4887 = vmax.f32 %v4182, 0.0
  %v4888 = vmax.f32 %v4186, 0.0
  %v4889 = vmax.f32 %v4188, 0.0
  %v4890 = vmax.f32 %v4190, 0.0
  %v4891 = vmax.f32 %v4192, 0.0
  %v4892 = vmax.f32 %v4196, 0.0
  %v4893 = vmax.f32 %v4198, 0.0
  %v4894 = vmax.f32 %v4200, 0.0
  %v4895 = vmax.f32 %v4202, 0.0
  %v4896 = vmax.f32 %v4206, 0.0
  %v4897 = vmax.f32 %v4208, 0.0
  %v4898 = vmax.f32 %v4210, 0.0
  %v4899 = vmax.f32 %v4212, 0.0
  %v4900 = vmax.f32 %v4216, 0.0
  %v4901 = vmax.f32 %v4218, 0.0
  %v4902 = vmax.f32 %v4220, 0.0
  %v4903 = vmax.f32 %v4222, 0.0
  %v4904 = vmax.f32 %v4226, 0.0
  %v4905 = vmax.f32 %v4228, 0.0
  %v4906 = vmax.f32 %v4230, 0.0
  %v4907 = vmax.f32 %v4232, 0.0
  %v4908 = vmax.f32 %v4236, 0.0
  %v4909 = vmax.f32 %v4238, 0.0
  %v4910 = vmax.f32 %v4240, 0.0
  %v4911 = vmax.f32 %v4242, 0.0
  %v4912 = vmax.f32 %v4246, 0.0
  %v4913 = vmax.f32 %v4248, 0.0
  %v4914 = vmax.f32 %v4250, 0.0
  %v4915 = vmax.f32 %v4252, 0.0
  %v4916 = vmax.f32 %v4256, 0.0
  %v4917 = vmax.f32 %v4258, 0.0
  %v4918 = vmax.f32 %v4260, 0.0
  %v4919 = vmax.f32 %v4262, 0.0
  %v4920 = vmax.f32 %v4266, 0.0
  %v4921 = vmax.f32 %v4268, 0.0
  %v4922 = vmax.f32 %v4270, 0.0
  %v4923 = vmax.f32 %v4272, 0.0
  %v4924 = vmax.f32 %v4276, 0.0
  %v4925 = vmax.f32 %v4278, 0.0
  %v4926 = vmax.f32 %v4280, 0.0
  %v4927 = vmax.f32 %v4282, 0.0
  %v4928 = vmax.f32 %v4286, 0.0
  %v4929 = vmax.f32 %v4288, 0.0
  %v4930 = vmax.f32 %v4290, 0.0
  %v4931 = vmax.f32 %v4292, 0.0
  %v4932 = vmax.f32 %v4296, 0.0
  %v4933 = vmax.f32 %v4298, 0.0
  %v4934 = vmax.f32 %v4300, 0.0
  %v4935 = vmax.f32 %v4302, 0.0
  %v4936 = vmax.f32 %v4306, 0.0
  %v4937 = vmax.f32 %v4308, 0.0
  %v4938 = vmax.f32 %v4310, 0.0
  %v4939 = vmax.f32 %v4312, 0.0
  %v4940 = vmax.f32 %v4316, 0.0
  %v4941 = vmax.f32 %v4318, 0.0
  %v4942 = vmax.f32 %v4320, 0.0
  %v4943 = vmax.f32 %v4322, 0.0
  %v4944 = vmax.f32 %v4326, 0.0
  %v4945 = vmax.f32 %v4328, 0.0
  %v4946 = vmax.f32 %v4330, 0.0
  %v4947 = vmax.f32 %v4332, 0.0
  %v4948 = vmax.f32 %v4336, 0.0
  %v4949 = vmax.f32 %v4338, 0.0
  %v4950 = vmax.f32 %v4340, 0.0
  %v4951 = vmax.f32 %v4342, 0.0
  %v4952 = vmax.f32 %v4346, 0.0
  %v4953 = vmax.f32 %v4348, 0.0
  %v4954 = vmax.f32 %v4350, 0.0
  %v4955 = vmax.f32 %v4352, 0.0
  %v4956 = vmax.f32 %v4356, 0.0
  %v4957 = vmax.f32 %v4358, 0.0
  %v4958 = vmax.f32 %v4360, 0.0
  %v4959 = vmax.f32 %v4362, 0.0
  %v4960 = vmax.f32 %v4366, 0.0
  %v4961 = vmax.f32 %v4368, 0.0
  %v4962 = vmax.f32 %v4370, 0.0
  %v4963 = vmax.f32 %v4372, 0.0
  %v4964 = vmax.f32 %v4376, 0.0
  %v4965 = vmax.f32 %v4378, 0.0
  %v4966 = vmax.f32 %v4380, 0.0
  %v4967 = vmax.f32 %v4382, 0.0
  %v4968 = vmax.f32 %v4386, 0.0
  %v4969 = vmax.f32 %v4388, 0.0
  %v4970 = vmax.f32 %v4390, 0.0
  %v4971 = vmax.f32 %v4392, 0.0
  %v4972 = vmax.f32 %v4396, 0.0
  %v4973 = vmax.f32 %v4398, 0.0
  %v4974 = vmax.f32 %v4400, 0.0
  %v4975 = vmax.f32 %v4402, 0.0
  %v4976 = vmax.f32 %v4406, 0.0
  %v4977 = vmax.f32 %v4408, 0.0
  %v4978 = vmax.f32 %v4410, 0.0
  %v4979 = vmax.f32 %v4412, 0.0
  %v4980 = vmax.f32 %v4416, 0.0
  %v4981 = vmax.f32 %v4418, 0.0
  %v4982 = vmax.f32 %v4420, 0.0
  %v4983 = vmax.f32 %v4422, 0.0
  %v4984 = vmax.f32 %v4426, 0.0
  %v4985 = vmax.f32 %v4428, 0.0
  %v4986 = vmax.f32 %v4430, 0.0
  %v4987 = vmax.f32 %v4432, 0.0
  %v4988 = vmax.f32 %v4436, 0.0
  %v4989 = vmax.f32 %v4438, 0.0
  %v4990 = vmax.f32 %v4440, 0.0
  %v4991 = vmax.f32 %v4442, 0.0
  %v4992 = vmax.f32 %v4446, 0.0
  %v4993 = vmax.f32 %v4448, 0.0
  %v4994 = vmax.f32 %v4450, 0.0
  %v4995 = vmax.f32 %v4452, 0.0
  %v4996 = vmax.f32 %v4456, 0.0
  %v4997 = vmax.f32 %v4458, 0.0
  %v4998 = vmax.f32 %v4460, 0.0
  %v4999 = vmax.f32 %v4462, 0.0
  %v5000 = vmax.f32 %v4466, 0.0
  %v5001 = vmax.f32 %v4468, 0.0
  %v5002 = vmax.f32 %v4470, 0.0
  %v5003 = vmax.f32 %v4472, 0.0
  %v5004 = vmax.f32 %v4476, 0.0
  %v5005 = vmax.f32 %v4478, 0.0
  %v5006 = vmax.f32 %v4480, 0.0
  %v5007 = vmax.f32 %v4482, 0.0
  %v5008 = vmax.f32 %v4486, 0.0
  %v5009 = vmax.f32 %v4488, 0.0
  %v5010 = vmax.f32 %v4490, 0.0
  %v5011 = vmax.f32 %v4492, 0.0
  %v5012 = vmax.f32 %v4496, 0.0
  %v5013 = vmax.f32 %v4498, 0.0
  %v5014 = vmax.f32 %v4500, 0.0
  %v5015 = vmax.f32 %v4502, 0.0
  %v5016 = vld [vmem:[%s3] sm:$0xff]
  %v5017 = vld [vmem:[%s3 + $0x8] sm:$0xff]
  %v5018 = vld [vmem:[%s3 + $0x10] sm:$0xff]
  %v5019 = vld [vmem:[%s3 + $0x18] sm:$0xff]
  %v5020 = vld [vmem:[%s3 + $0x20] sm:$0xff]
  %v5021 = vld [vmem:[%s3 + $0x28] sm:$0xff]
  %v5022 = vld [vmem:[%s3 + $0x30] sm:$0xff]
  %v5023 = vld [vmem:[%s3 + $0x38] sm:$0xff]
  %v5024 = vpack.c.bf16 %v4506, %v4504
  %v5025 = vpack.c.bf16 %v4507, %v4505
  %v5026 = vpack.c.bf16 %v4510, %v4508
  %v5027 = vpack.c.bf16 %v4511, %v4509
  %v5028 = vpack.c.bf16 %v4514, %v4512
  %v5029 = vpack.c.bf16 %v4515, %v4513
  %v5030 = vpack.c.bf16 %v4518, %v4516
  %v5031 = vpack.c.bf16 %v4519, %v4517
  %v5032 = vpack.c.bf16 %v4522, %v4520
  %v5033 = vpack.c.bf16 %v4523, %v4521
  %v5034 = vpack.c.bf16 %v4526, %v4524
  %v5035 = vpack.c.bf16 %v4527, %v4525
  %v5036 = vpack.c.bf16 %v4530, %v4528
  %v5037 = vpack.c.bf16 %v4531, %v4529
  %v5038 = vpack.c.bf16 %v4534, %v4532
  %v5039 = vpack.c.bf16 %v4535, %v4533
  %v5040 = vpack.c.bf16 %v4538, %v4536
  %v5041 = vpack.c.bf16 %v4539, %v4537
  %v5042 = vpack.c.bf16 %v4542, %v4540
  %v5043 = vpack.c.bf16 %v4543, %v4541
  %v5044 = vpack.c.bf16 %v4546, %v4544
  %v5045 = vpack.c.bf16 %v4547, %v4545
  %v5046 = vpack.c.bf16 %v4550, %v4548
  %v5047 = vpack.c.bf16 %v4551, %v4549
  %v5048 = vpack.c.bf16 %v4554, %v4552
  %v5049 = vpack.c.bf16 %v4555, %v4553
  %v5050 = vpack.c.bf16 %v4558, %v4556
  %v5051 = vpack.c.bf16 %v4559, %v4557
  %v5052 = vpack.c.bf16 %v4562, %v4560
  %v5053 = vpack.c.bf16 %v4563, %v4561
  %v5054 = vpack.c.bf16 %v4566, %v4564
  %v5055 = vpack.c.bf16 %v4567, %v4565
  %v5056 = vpack.c.bf16 %v4570, %v4568
  %v5057 = vpack.c.bf16 %v4571, %v4569
  %v5058 = vpack.c.bf16 %v4574, %v4572
  %v5059 = vpack.c.bf16 %v4575, %v4573
  %v5060 = vpack.c.bf16 %v4578, %v4576
  %v5061 = vpack.c.bf16 %v4579, %v4577
  %v5062 = vpack.c.bf16 %v4582, %v4580
  %v5063 = vpack.c.bf16 %v4583, %v4581
  %v5064 = vpack.c.bf16 %v4586, %v4584
  %v5065 = vpack.c.bf16 %v4587, %v4585
  %v5066 = vpack.c.bf16 %v4590, %v4588
  %v5067 = vpack.c.bf16 %v4591, %v4589
  %v5068 = vpack.c.bf16 %v4594, %v4592
  %v5069 = vpack.c.bf16 %v4595, %v4593
  %v5070 = vpack.c.bf16 %v4598, %v4596
  %v5071 = vpack.c.bf16 %v4599, %v4597
  %v5072 = vpack.c.bf16 %v4602, %v4600
  %v5073 = vpack.c.bf16 %v4603, %v4601
  %v5074 = vpack.c.bf16 %v4606, %v4604
  %v5075 = vpack.c.bf16 %v4607, %v4605
  %v5076 = vpack.c.bf16 %v4610, %v4608
  %v5077 = vpack.c.bf16 %v4611, %v4609
  %v5078 = vpack.c.bf16 %v4614, %v4612
  %v5079 = vpack.c.bf16 %v4615, %v4613
  %v5080 = vpack.c.bf16 %v4618, %v4616
  %v5081 = vpack.c.bf16 %v4619, %v4617
  %v5082 = vpack.c.bf16 %v4622, %v4620
  %v5083 = vpack.c.bf16 %v4623, %v4621
  %v5084 = vpack.c.bf16 %v4626, %v4624
  %v5085 = vpack.c.bf16 %v4627, %v4625
  %v5086 = vpack.c.bf16 %v4630, %v4628
  %v5087 = vpack.c.bf16 %v4631, %v4629
  %v5088 = vpack.c.bf16 %v4634, %v4632
  %v5089 = vpack.c.bf16 %v4635, %v4633
  %v5090 = vpack.c.bf16 %v4638, %v4636
  %v5091 = vpack.c.bf16 %v4639, %v4637
  %v5092 = vpack.c.bf16 %v4642, %v4640
  %v5093 = vpack.c.bf16 %v4643, %v4641
  %v5094 = vpack.c.bf16 %v4646, %v4644
  %v5095 = vpack.c.bf16 %v4647, %v4645
  %v5096 = vpack.c.bf16 %v4650, %v4648
  %v5097 = vpack.c.bf16 %v4651, %v4649
  %v5098 = vpack.c.bf16 %v4654, %v4652
  %v5099 = vpack.c.bf16 %v4655, %v4653
  %v5100 = vpack.c.bf16 %v4658, %v4656
  %v5101 = vpack.c.bf16 %v4659, %v4657
  %v5102 = vpack.c.bf16 %v4662, %v4660
  %v5103 = vpack.c.bf16 %v4663, %v4661
  %v5104 = vpack.c.bf16 %v4666, %v4664
  %v5105 = vpack.c.bf16 %v4667, %v4665
  %v5106 = vpack.c.bf16 %v4670, %v4668
  %v5107 = vpack.c.bf16 %v4671, %v4669
  %v5108 = vpack.c.bf16 %v4674, %v4672
  %v5109 = vpack.c.bf16 %v4675, %v4673
  %v5110 = vpack.c.bf16 %v4678, %v4676
  %v5111 = vpack.c.bf16 %v4679, %v4677
  %v5112 = vpack.c.bf16 %v4682, %v4680
  %v5113 = vpack.c.bf16 %v4683, %v4681
  %v5114 = vpack.c.bf16 %v4686, %v4684
  %v5115 = vpack.c.bf16 %v4687, %v4685
  %v5116 = vpack.c.bf16 %v4690, %v4688
  %v5117 = vpack.c.bf16 %v4691, %v4689
  %v5118 = vpack.c.bf16 %v4694, %v4692
  %v5119 = vpack.c.bf16 %v4695, %v4693
  %v5120 = vpack.c.bf16 %v4698, %v4696
  %v5121 = vpack.c.bf16 %v4699, %v4697
  %v5122 = vpack.c.bf16 %v4702, %v4700
  %v5123 = vpack.c.bf16 %v4703, %v4701
  %v5124 = vpack.c.bf16 %v4706, %v4704
  %v5125 = vpack.c.bf16 %v4707, %v4705
  %v5126 = vpack.c.bf16 %v4710, %v4708
  %v5127 = vpack.c.bf16 %v4711, %v4709
  %v5128 = vpack.c.bf16 %v4714, %v4712
  %v5129 = vpack.c.bf16 %v4715, %v4713
  %v5130 = vpack.c.bf16 %v4718, %v4716
  %v5131 = vpack.c.bf16 %v4719, %v4717
  %v5132 = vpack.c.bf16 %v4722, %v4720
  %v5133 = vpack.c.bf16 %v4723, %v4721
  %v5134 = vpack.c.bf16 %v4726, %v4724
  %v5135 = vpack.c.bf16 %v4727, %v4725
  %v5136 = vpack.c.bf16 %v4730, %v4728
  %v5137 = vpack.c.bf16 %v4731, %v4729
  %v5138 = vpack.c.bf16 %v4734, %v4732
  %v5139 = vpack.c.bf16 %v4735, %v4733
  %v5140 = vpack.c.bf16 %v4738, %v4736
  %v5141 = vpack.c.bf16 %v4739, %v4737
  %v5142 = vpack.c.bf16 %v4742, %v4740
  %v5143 = vpack.c.bf16 %v4743, %v4741
  %v5144 = vpack.c.bf16 %v4746, %v4744
  %v5145 = vpack.c.bf16 %v4747, %v4745
  %v5146 = vpack.c.bf16 %v4750, %v4748
  %v5147 = vpack.c.bf16 %v4751, %v4749
  %v5148 = vpack.c.bf16 %v4754, %v4752
  %v5149 = vpack.c.bf16 %v4755, %v4753
  %v5150 = vpack.c.bf16 %v4758, %v4756
  %v5151 = vpack.c.bf16 %v4759, %v4757
  %v5152 = vpack.c.bf16 %v4762, %v4760
  %v5153 = vpack.c.bf16 %v4763, %v4761
  %v5154 = vpack.c.bf16 %v4766, %v4764
  %v5155 = vpack.c.bf16 %v4767, %v4765
  %v5156 = vpack.c.bf16 %v4770, %v4768
  %v5157 = vpack.c.bf16 %v4771, %v4769
  %v5158 = vpack.c.bf16 %v4774, %v4772
  %v5159 = vpack.c.bf16 %v4775, %v4773
  %v5160 = vpack.c.bf16 %v4778, %v4776
  %v5161 = vpack.c.bf16 %v4779, %v4777
  %v5162 = vpack.c.bf16 %v4782, %v4780
  %v5163 = vpack.c.bf16 %v4783, %v4781
  %v5164 = vpack.c.bf16 %v4786, %v4784
  %v5165 = vpack.c.bf16 %v4787, %v4785
  %v5166 = vpack.c.bf16 %v4790, %v4788
  %v5167 = vpack.c.bf16 %v4791, %v4789
  %v5168 = vpack.c.bf16 %v4794, %v4792
  %v5169 = vpack.c.bf16 %v4795, %v4793
  %v5170 = vpack.c.bf16 %v4798, %v4796
  %v5171 = vpack.c.bf16 %v4799, %v4797
  %v5172 = vpack.c.bf16 %v4802, %v4800
  %v5173 = vpack.c.bf16 %v4803, %v4801
  %v5174 = vpack.c.bf16 %v4806, %v4804
  %v5175 = vpack.c.bf16 %v4807, %v4805
  %v5176 = vpack.c.bf16 %v4810, %v4808
  %v5177 = vpack.c.bf16 %v4811, %v4809
  %v5178 = vpack.c.bf16 %v4814, %v4812
  %v5179 = vpack.c.bf16 %v4815, %v4813
  %v5180 = vpack.c.bf16 %v4818, %v4816
  %v5181 = vpack.c.bf16 %v4819, %v4817
  %v5182 = vpack.c.bf16 %v4822, %v4820
  %v5183 = vpack.c.bf16 %v4823, %v4821
  %v5184 = vpack.c.bf16 %v4826, %v4824
  %v5185 = vpack.c.bf16 %v4827, %v4825
  %v5186 = vpack.c.bf16 %v4830, %v4828
  %v5187 = vpack.c.bf16 %v4831, %v4829
  %v5188 = vpack.c.bf16 %v4834, %v4832
  %v5189 = vpack.c.bf16 %v4835, %v4833
  %v5190 = vpack.c.bf16 %v4838, %v4836
  %v5191 = vpack.c.bf16 %v4839, %v4837
  %v5192 = vpack.c.bf16 %v4842, %v4840
  %v5193 = vpack.c.bf16 %v4843, %v4841
  %v5194 = vpack.c.bf16 %v4846, %v4844
  %v5195 = vpack.c.bf16 %v4847, %v4845
  %v5196 = vpack.c.bf16 %v4850, %v4848
  %v5197 = vpack.c.bf16 %v4851, %v4849
  %v5198 = vpack.c.bf16 %v4854, %v4852
  %v5199 = vpack.c.bf16 %v4855, %v4853
  %v5200 = vpack.c.bf16 %v4858, %v4856
  %v5201 = vpack.c.bf16 %v4859, %v4857
  %v5202 = vpack.c.bf16 %v4862, %v4860
  %v5203 = vpack.c.bf16 %v4863, %v4861
  %v5204 = vpack.c.bf16 %v4866, %v4864
  %v5205 = vpack.c.bf16 %v4867, %v4865
  %v5206 = vpack.c.bf16 %v4870, %v4868
  %v5207 = vpack.c.bf16 %v4871, %v4869
  %v5208 = vpack.c.bf16 %v4874, %v4872
  %v5209 = vpack.c.bf16 %v4875, %v4873
  %v5210 = vpack.c.bf16 %v4878, %v4876
  %v5211 = vpack.c.bf16 %v4879, %v4877
  %v5212 = vpack.c.bf16 %v4882, %v4880
  %v5213 = vpack.c.bf16 %v4883, %v4881
  %v5214 = vpack.c.bf16 %v4886, %v4884
  %v5215 = vpack.c.bf16 %v4887, %v4885
  %v5216 = vpack.c.bf16 %v4890, %v4888
  %v5217 = vpack.c.bf16 %v4891, %v4889
  %v5218 = vpack.c.bf16 %v4894, %v4892
  %v5219 = vpack.c.bf16 %v4895, %v4893
  %v5220 = vpack.c.bf16 %v4898, %v4896
  %v5221 = vpack.c.bf16 %v4899, %v4897
  %v5222 = vpack.c.bf16 %v4902, %v4900
  %v5223 = vpack.c.bf16 %v4903, %v4901
  %v5224 = vpack.c.bf16 %v4906, %v4904
  %v5225 = vpack.c.bf16 %v4907, %v4905
  %v5226 = vpack.c.bf16 %v4910, %v4908
  %v5227 = vpack.c.bf16 %v4911, %v4909
  %v5228 = vpack.c.bf16 %v4914, %v4912
  %v5229 = vpack.c.bf16 %v4915, %v4913
  %v5230 = vpack.c.bf16 %v4918, %v4916
  %v5231 = vpack.c.bf16 %v4919, %v4917
  %v5232 = vpack.c.bf16 %v4922, %v4920
  %v5233 = vpack.c.bf16 %v4923, %v4921
  %v5234 = vpack.c.bf16 %v4926, %v4924
  %v5235 = vpack.c.bf16 %v4927, %v4925
  %v5236 = vpack.c.bf16 %v4930, %v4928
  %v5237 = vpack.c.bf16 %v4931, %v4929
  %v5238 = vpack.c.bf16 %v4934, %v4932
  %v5239 = vpack.c.bf16 %v4935, %v4933
  %v5240 = vpack.c.bf16 %v4938, %v4936
  %v5241 = vpack.c.bf16 %v4939, %v4937
  %v5242 = vpack.c.bf16 %v4942, %v4940
  %v5243 = vpack.c.bf16 %v4943, %v4941
  %v5244 = vpack.c.bf16 %v4946, %v4944
  %v5245 = vpack.c.bf16 %v4947, %v4945
  %v5246 = vpack.c.bf16 %v4950, %v4948
  %v5247 = vpack.c.bf16 %v4951, %v4949
  %v5248 = vpack.c.bf16 %v4954, %v4952
  %v5249 = vpack.c.bf16 %v4955, %v4953
  %v5250 = vpack.c.bf16 %v4958, %v4956
  %v5251 = vpack.c.bf16 %v4959, %v4957
  %v5252 = vpack.c.bf16 %v4962, %v4960
  %v5253 = vpack.c.bf16 %v4963, %v4961
  %v5254 = vpack.c.bf16 %v4966, %v4964
  %v5255 = vpack.c.bf16 %v4967, %v4965
  %v5256 = vpack.c.bf16 %v4970, %v4968
  %v5257 = vpack.c.bf16 %v4971, %v4969
  %v5258 = vpack.c.bf16 %v4974, %v4972
  %v5259 = vpack.c.bf16 %v4975, %v4973
  %v5260 = vpack.c.bf16 %v4978, %v4976
  %v5261 = vpack.c.bf16 %v4979, %v4977
  %v5262 = vpack.c.bf16 %v4982, %v4980
  %v5263 = vpack.c.bf16 %v4983, %v4981
  %v5264 = vpack.c.bf16 %v4986, %v4984
  %v5265 = vpack.c.bf16 %v4987, %v4985
  %v5266 = vpack.c.bf16 %v4990, %v4988
  %v5267 = vpack.c.bf16 %v4991, %v4989
  %v5268 = vpack.c.bf16 %v4994, %v4992
  %v5269 = vpack.c.bf16 %v4995, %v4993
  %v5270 = vpack.c.bf16 %v4998, %v4996
  %v5271 = vpack.c.bf16 %v4999, %v4997
  %v5272 = vpack.c.bf16 %v5002, %v5000
  %v5273 = vpack.c.bf16 %v5003, %v5001
  %v5274 = vpack.c.bf16 %v5006, %v5004
  %v5275 = vpack.c.bf16 %v5007, %v5005
  %v5276 = vpack.c.bf16 %v5010, %v5008
  %v5277 = vpack.c.bf16 %v5011, %v5009
  %v5278 = vpack.c.bf16 %v5014, %v5012
  %v5279 = vpack.c.bf16 %v5015, %v5013
  %v5288 = vunpack.c.l.b16 %v5016
  %v5289 = vunpack.c.h.b16 %v5016
  %v5290 = vunpack.c.l.b16 %v5017
  %v5291 = vunpack.c.h.b16 %v5017
  %v5292 = vunpack.c.l.b16 %v5018
  %v5293 = vunpack.c.h.b16 %v5018
  %v5294 = vunpack.c.l.b16 %v5019
  %v5295 = vunpack.c.h.b16 %v5019
  %v5296 = vunpack.c.l.b16 %v5020
  %v5297 = vunpack.c.h.b16 %v5020
  %v5298 = vunpack.c.l.b16 %v5021
  %v5299 = vunpack.c.h.b16 %v5021
  %v5300 = vunpack.c.l.b16 %v5022
  %v5301 = vunpack.c.h.b16 %v5022
  %v5302 = vunpack.c.l.b16 %v5023
  %v5303 = vunpack.c.h.b16 %v5023
  %v5304 = vpack.c.b16 %v5288, %v5288
  %v5305 = vpack.c.b16 %v5289, %v5289
  %v5306 = vpack.c.b16 %v5290, %v5290
  %v5307 = vpack.c.b16 %v5291, %v5291
  %v5308 = vpack.c.b16 %v5292, %v5292
  %v5309 = vpack.c.b16 %v5293, %v5293
  %v5310 = vpack.c.b16 %v5294, %v5294
  %v5311 = vpack.c.b16 %v5295, %v5295
  %v5312 = vpack.c.b16 %v5296, %v5296
  %v5313 = vpack.c.b16 %v5297, %v5297
  %v5314 = vpack.c.b16 %v5298, %v5298
  %v5315 = vpack.c.b16 %v5299, %v5299
  %v5316 = vpack.c.b16 %v5300, %v5300
  %v5317 = vpack.c.b16 %v5301, %v5301
  %v5318 = vpack.c.b16 %v5302, %v5302
  %v5319 = vpack.c.b16 %v5303, %v5303
  %5336 = vmatprep.subr.bf16.mxu0 %v5025
  %5337 = vmatpush1.bf16.msra.mxu0 %v5024
  %5338 = vmatprep.subr.bf16.mxu0 %v5027
  %5339 = vmatpush1.bf16.msra.mxu0 %v5026
  %5340 = vmatprep.subr.bf16.mxu0 %v5029
  %5341 = vmatpush1.bf16.msra.mxu0 %v5028
  %5342 = vmatprep.subr.bf16.mxu0 %v5031
  %5343 = vmatpush1.bf16.msra.mxu0 %v5030
  %5344 = vmatprep.subr.bf16.mxu0 %v5033
  %5345 = vmatpush1.bf16.msra.mxu0 %v5032
  %5346 = vmatprep.subr.bf16.mxu0 %v5035
  %5347 = vmatpush1.bf16.msra.mxu0 %v5034
  %5348 = vmatprep.subr.bf16.mxu0 %v5037
  %5349 = vmatpush1.bf16.msra.mxu0 %v5036
  %5350 = vmatprep.subr.bf16.mxu0 %v5039
  %5351 = vmatpush1.bf16.msra.mxu0 %v5038
  %5352 = vmatprep.subr.bf16.mxu0 %v5041
  %5353 = vmatpush1.bf16.msra.mxu0 %v5040
  %5354 = vmatprep.subr.bf16.mxu0 %v5043
  %5355 = vmatpush1.bf16.msra.mxu0 %v5042
  %5356 = vmatprep.subr.bf16.mxu0 %v5045
  %5357 = vmatpush1.bf16.msra.mxu0 %v5044
  %5358 = vmatprep.subr.bf16.mxu0 %v5047
  %5359 = vmatpush1.bf16.msra.mxu0 %v5046
  %5360 = vmatprep.subr.bf16.mxu0 %v5049
  %5361 = vmatpush1.bf16.msra.mxu0 %v5048
  %5362 = vmatprep.subr.bf16.mxu0 %v5051
  %5363 = vmatpush1.bf16.msra.mxu0 %v5050
  %5364 = vmatprep.subr.bf16.mxu0 %v5053
  %5365 = vmatpush1.bf16.msra.mxu0 %v5052
  %5366 = vmatprep.subr.bf16.mxu0 %v5055
  %5367 = vmatpush1.bf16.msra.mxu0 %v5054
  %5368 = vmatprep.mubr.bf16.mxu0 %v5305
  %5369 = vmatmul.mubr.bf16.gmra.mrb[0].mxu0 %v5304
  %v5370 = vpop.f32.mrb[0].mxu0
  %v5371 = vadd.f32 0.0, %v5370
  %v5372 = vpop.f32.mrb[0].mxu0
  %v5373 = vadd.f32 0.0, %v5372
  %v5374 = vpop.f32.mrb[0].mxu0
  %v5375 = vpop.f32.mrb[0].mxu0
  %5376 = vdwg.mxu0
  %5377 = vmatprep.subr.bf16.mxu0 %v5057
  %5378 = vmatpush1.bf16.msra.mxu0 %v5056
  %5379 = vmatprep.subr.bf16.mxu0 %v5059
  %5380 = vmatpush1.bf16.msra.mxu0 %v5058
  %5381 = vmatprep.subr.bf16.mxu0 %v5061
  %5382 = vmatpush1.bf16.msra.mxu0 %v5060
  %5383 = vmatprep.subr.bf16.mxu0 %v5063
  %5384 = vmatpush1.bf16.msra.mxu0 %v5062
  %5385 = vmatprep.subr.bf16.mxu0 %v5065
  %5386 = vmatpush1.bf16.msra.mxu0 %v5064
  %5387 = vmatprep.subr.bf16.mxu0 %v5067
  %5388 = vmatpush1.bf16.msra.mxu0 %v5066
  %5389 = vmatprep.subr.bf16.mxu0 %v5069
  %5390 = vmatpush1.bf16.msra.mxu0 %v5068
  %5391 = vmatprep.subr.bf16.mxu0 %v5071
  %5392 = vmatpush1.bf16.msra.mxu0 %v5070
  %5393 = vmatprep.subr.bf16.mxu0 %v5073
  %5394 = vmatpush1.bf16.msra.mxu0 %v5072
  %5395 = vmatprep.subr.bf16.mxu0 %v5075
  %5396 = vmatpush1.bf16.msra.mxu0 %v5074
  %5397 = vmatprep.subr.bf16.mxu0 %v5077
  %5398 = vmatpush1.bf16.msra.mxu0 %v5076
  %5399 = vmatprep.subr.bf16.mxu0 %v5079
  %5400 = vmatpush1.bf16.msra.mxu0 %v5078
  %5401 = vmatprep.subr.bf16.mxu0 %v5081
  %5402 = vmatpush1.bf16.msra.mxu0 %v5080
  %5403 = vmatprep.subr.bf16.mxu0 %v5083
  %5404 = vmatpush1.bf16.msra.mxu0 %v5082
  %5405 = vmatprep.subr.bf16.mxu0 %v5085
  %5406 = vmatpush1.bf16.msra.mxu0 %v5084
  %5407 = vmatprep.subr.bf16.mxu0 %v5087
  %5408 = vmatpush1.bf16.msra.mxu0 %v5086
  %5409 = vmatprep.mubr.bf16.mxu0 %v5307
  %5410 = vmatmul.mubr.bf16.gmra.mrb[0].mxu0 %v5306
  %v5411 = vpop.f32.mrb[0].mxu0
  %v5412 = vadd.f32 %v5371, %v5411
  %v5413 = vpop.f32.mrb[0].mxu0
  %v5414 = vadd.f32 %v5373, %v5413
  %v5415 = vpop.f32.mrb[0].mxu0
  %v5416 = vpop.f32.mrb[0].mxu0
  %5417 = vdwg.mxu0
  %5418 = vmatprep.subr.bf16.mxu0 %v5089
  %5419 = vmatpush1.bf16.msra.mxu0 %v5088
  %5420 = vmatprep.subr.bf16.mxu0 %v5091
  %5421 = vmatpush1.bf16.msra.mxu0 %v5090
  %5422 = vmatprep.subr.bf16.mxu0 %v5093
  %5423 = vmatpush1.bf16.msra.mxu0 %v5092
  %5424 = vmatprep.subr.bf16.mxu0 %v5095
  %5425 = vmatpush1.bf16.msra.mxu0 %v5094
  %5426 = vmatprep.subr.bf16.mxu0 %v5097
  %5427 = vmatpush1.bf16.msra.mxu0 %v5096
  %5428 = vmatprep.subr.bf16.mxu0 %v5099
  %5429 = vmatpush1.bf16.msra.mxu0 %v5098
  %5430 = vmatprep.subr.bf16.mxu0 %v5101
  %5431 = vmatpush1.bf16.msra.mxu0 %v5100
  %5432 = vmatprep.subr.bf16.mxu0 %v5103
  %5433 = vmatpush1.bf16.msra.mxu0 %v5102
  %5434 = vmatprep.subr.bf16.mxu0 %v5105
  %5435 = vmatpush1.bf16.msra.mxu0 %v5104
  %5436 = vmatprep.subr.bf16.mxu0 %v5107
  %5437 = vmatpush1.bf16.msra.mxu0 %v5106
  %5438 = vmatprep.subr.bf16.mxu0 %v5109
  %5439 = vmatpush1.bf16.msra.mxu0 %v5108
  %5440 = vmatprep.subr.bf16.mxu0 %v5111
  %5441 = vmatpush1.bf16.msra.mxu0 %v5110
  %5442 = vmatprep.subr.bf16.mxu0 %v5113
  %5443 = vmatpush1.bf16.msra.mxu0 %v5112
  %5444 = vmatprep.subr.bf16.mxu0 %v5115
  %5445 = vmatpush1.bf16.msra.mxu0 %v5114
  %5446 = vmatprep.subr.bf16.mxu0 %v5117
  %5447 = vmatpush1.bf16.msra.mxu0 %v5116
  %5448 = vmatprep.subr.bf16.mxu0 %v5119
  %5449 = vmatpush1.bf16.msra.mxu0 %v5118
  %5450 = vmatprep.mubr.bf16.mxu0 %v5309
  %5451 = vmatmul.mubr.bf16.gmra.mrb[0].mxu0 %v5308
  %v5452 = vpop.f32.mrb[0].mxu0
  %v5453 = vadd.f32 %v5412, %v5452
  %v5454 = vpop.f32.mrb[0].mxu0
  %v5455 = vadd.f32 %v5414, %v5454
  %v5456 = vpop.f32.mrb[0].mxu0
  %v5457 = vpop.f32.mrb[0].mxu0
  %5458 = vdwg.mxu0
  %5459 = vmatprep.subr.bf16.mxu0 %v5121
  %5460 = vmatpush1.bf16.msra.mxu0 %v5120
  %5461 = vmatprep.subr.bf16.mxu0 %v5123
  %5462 = vmatpush1.bf16.msra.mxu0 %v5122
  %5463 = vmatprep.subr.bf16.mxu0 %v5125
  %5464 = vmatpush1.bf16.msra.mxu0 %v5124
  %5465 = vmatprep.subr.bf16.mxu0 %v5127
  %5466 = vmatpush1.bf16.msra.mxu0 %v5126
  %5467 = vmatprep.subr.bf16.mxu0 %v5129
  %5468 = vmatpush1.bf16.msra.mxu0 %v5128
  %5469 = vmatprep.subr.bf16.mxu0 %v5131
  %5470 = vmatpush1.bf16.msra.mxu0 %v5130
  %5471 = vmatprep.subr.bf16.mxu0 %v5133
  %5472 = vmatpush1.bf16.msra.mxu0 %v5132
  %5473 = vmatprep.subr.bf16.mxu0 %v5135
  %5474 = vmatpush1.bf16.msra.mxu0 %v5134
  %5475 = vmatprep.subr.bf16.mxu0 %v5137
  %5476 = vmatpush1.bf16.msra.mxu0 %v5136
  %5477 = vmatprep.subr.bf16.mxu0 %v5139
  %5478 = vmatpush1.bf16.msra.mxu0 %v5138
  %5479 = vmatprep.subr.bf16.mxu0 %v5141
  %5480 = vmatpush1.bf16.msra.mxu0 %v5140
  %5481 = vmatprep.subr.bf16.mxu0 %v5143
  %5482 = vmatpush1.bf16.msra.mxu0 %v5142
  %5483 = vmatprep.subr.bf16.mxu0 %v5145
  %5484 = vmatpush1.bf16.msra.mxu0 %v5144
  %5485 = vmatprep.subr.bf16.mxu0 %v5147
  %5486 = vmatpush1.bf16.msra.mxu0 %v5146
  %5487 = vmatprep.subr.bf16.mxu0 %v5149
  %5488 = vmatpush1.bf16.msra.mxu0 %v5148
  %5489 = vmatprep.subr.bf16.mxu0 %v5151
  %5490 = vmatpush1.bf16.msra.mxu0 %v5150
  %5491 = vmatprep.mubr.bf16.mxu0 %v5311
  %5492 = vmatmul.mubr.bf16.gmra.mrb[0].mxu0 %v5310
  %v5493 = vpop.f32.mrb[0].mxu0
  %v5494 = vadd.f32 %v5453, %v5493
  %v5495 = vpop.f32.mrb[0].mxu0
  %v5496 = vadd.f32 %v5455, %v5495
  %v5497 = vpop.f32.mrb[0].mxu0
  %v5498 = vpop.f32.mrb[0].mxu0
  %5499 = vdwg.mxu0
  %5500 = vmatprep.subr.bf16.mxu0 %v5153
  %5501 = vmatpush1.bf16.msra.mxu0 %v5152
  %5502 = vmatprep.subr.bf16.mxu0 %v5155
  %5503 = vmatpush1.bf16.msra.mxu0 %v5154
  %5504 = vmatprep.subr.bf16.mxu0 %v5157
  %5505 = vmatpush1.bf16.msra.mxu0 %v5156
  %5506 = vmatprep.subr.bf16.mxu0 %v5159
  %5507 = vmatpush1.bf16.msra.mxu0 %v5158
  %5508 = vmatprep.subr.bf16.mxu0 %v5161
  %5509 = vmatpush1.bf16.msra.mxu0 %v5160
  %5510 = vmatprep.subr.bf16.mxu0 %v5163
  %5511 = vmatpush1.bf16.msra.mxu0 %v5162
  %5512 = vmatprep.subr.bf16.mxu0 %v5165
  %5513 = vmatpush1.bf16.msra.mxu0 %v5164
  %5514 = vmatprep.subr.bf16.mxu0 %v5167
  %5515 = vmatpush1.bf16.msra.mxu0 %v5166
  %5516 = vmatprep.subr.bf16.mxu0 %v5169
  %5517 = vmatpush1.bf16.msra.mxu0 %v5168
  %5518 = vmatprep.subr.bf16.mxu0 %v5171
  %5519 = vmatpush1.bf16.msra.mxu0 %v5170
  %5520 = vmatprep.subr.bf16.mxu0 %v5173
  %5521 = vmatpush1.bf16.msra.mxu0 %v5172
  %5522 = vmatprep.subr.bf16.mxu0 %v5175
  %5523 = vmatpush1.bf16.msra.mxu0 %v5174
  %5524 = vmatprep.subr.bf16.mxu0 %v5177
  %5525 = vmatpush1.bf16.msra.mxu0 %v5176
  %5526 = vmatprep.subr.bf16.mxu0 %v5179
  %5527 = vmatpush1.bf16.msra.mxu0 %v5178
  %5528 = vmatprep.subr.bf16.mxu0 %v5181
  %5529 = vmatpush1.bf16.msra.mxu0 %v5180
  %5530 = vmatprep.subr.bf16.mxu0 %v5183
  %5531 = vmatpush1.bf16.msra.mxu0 %v5182
  %5532 = vmatprep.mubr.bf16.mxu0 %v5313
  %5533 = vmatmul.mubr.bf16.gmra.mrb[0].mxu0 %v5312
  %v5534 = vpop.f32.mrb[0].mxu0
  %v5535 = vadd.f32 %v5494, %v5534
  %v5536 = vpop.f32.mrb[0].mxu0
  %v5537 = vadd.f32 %v5496, %v5536
  %v5538 = vpop.f32.mrb[0].mxu0
  %v5539 = vpop.f32.mrb[0].mxu0
  %5540 = vdwg.mxu0
  %5541 = vmatprep.subr.bf16.mxu0 %v5185
  %5542 = vmatpush1.bf16.msra.mxu0 %v5184
  %5543 = vmatprep.subr.bf16.mxu0 %v5187
  %5544 = vmatpush1.bf16.msra.mxu0 %v5186
  %5545 = vmatprep.subr.bf16.mxu0 %v5189
  %5546 = vmatpush1.bf16.msra.mxu0 %v5188
  %5547 = vmatprep.subr.bf16.mxu0 %v5191
  %5548 = vmatpush1.bf16.msra.mxu0 %v5190
  %5549 = vmatprep.subr.bf16.mxu0 %v5193
  %5550 = vmatpush1.bf16.msra.mxu0 %v5192
  %5551 = vmatprep.subr.bf16.mxu0 %v5195
  %5552 = vmatpush1.bf16.msra.mxu0 %v5194
  %5553 = vmatprep.subr.bf16.mxu0 %v5197
  %5554 = vmatpush1.bf16.msra.mxu0 %v5196
  %5555 = vmatprep.subr.bf16.mxu0 %v5199
  %5556 = vmatpush1.bf16.msra.mxu0 %v5198
  %5557 = vmatprep.subr.bf16.mxu0 %v5201
  %5558 = vmatpush1.bf16.msra.mxu0 %v5200
  %5559 = vmatprep.subr.bf16.mxu0 %v5203
  %5560 = vmatpush1.bf16.msra.mxu0 %v5202
  %5561 = vmatprep.subr.bf16.mxu0 %v5205
  %5562 = vmatpush1.bf16.msra.mxu0 %v5204
  %5563 = vmatprep.subr.bf16.mxu0 %v5207
  %5564 = vmatpush1.bf16.msra.mxu0 %v5206
  %5565 = vmatprep.subr.bf16.mxu0 %v5209
  %5566 = vmatpush1.bf16.msra.mxu0 %v5208
  %5567 = vmatprep.subr.bf16.mxu0 %v5211
  %5568 = vmatpush1.bf16.msra.mxu0 %v5210
  %5569 = vmatprep.subr.bf16.mxu0 %v5213
  %5570 = vmatpush1.bf16.msra.mxu0 %v5212
  %5571 = vmatprep.subr.bf16.mxu0 %v5215
  %5572 = vmatpush1.bf16.msra.mxu0 %v5214
  %5573 = vmatprep.mubr.bf16.mxu0 %v5315
  %5574 = vmatmul.mubr.bf16.gmra.mrb[0].mxu0 %v5314
  %v5575 = vpop.f32.mrb[0].mxu0
  %v5576 = vadd.f32 %v5535, %v5575
  %v5577 = vpop.f32.mrb[0].mxu0
  %v5578 = vadd.f32 %v5537, %v5577
  %v5579 = vpop.f32.mrb[0].mxu0
  %v5580 = vpop.f32.mrb[0].mxu0
  %5581 = vdwg.mxu0
  %5582 = vmatprep.subr.bf16.mxu0 %v5217
  %5583 = vmatpush1.bf16.msra.mxu0 %v5216
  %5584 = vmatprep.subr.bf16.mxu0 %v5219
  %5585 = vmatpush1.bf16.msra.mxu0 %v5218
  %5586 = vmatprep.subr.bf16.mxu0 %v5221
  %5587 = vmatpush1.bf16.msra.mxu0 %v5220
  %5588 = vmatprep.subr.bf16.mxu0 %v5223
  %5589 = vmatpush1.bf16.msra.mxu0 %v5222
  %5590 = vmatprep.subr.bf16.mxu0 %v5225
  %5591 = vmatpush1.bf16.msra.mxu0 %v5224
  %5592 = vmatprep.subr.bf16.mxu0 %v5227
  %5593 = vmatpush1.bf16.msra.mxu0 %v5226
  %5594 = vmatprep.subr.bf16.mxu0 %v5229
  %5595 = vmatpush1.bf16.msra.mxu0 %v5228
  %5596 = vmatprep.subr.bf16.mxu0 %v5231
  %5597 = vmatpush1.bf16.msra.mxu0 %v5230
  %5598 = vmatprep.subr.bf16.mxu0 %v5233
  %5599 = vmatpush1.bf16.msra.mxu0 %v5232
  %5600 = vmatprep.subr.bf16.mxu0 %v5235
  %5601 = vmatpush1.bf16.msra.mxu0 %v5234
  %5602 = vmatprep.subr.bf16.mxu0 %v5237
  %5603 = vmatpush1.bf16.msra.mxu0 %v5236
  %5604 = vmatprep.subr.bf16.mxu0 %v5239
  %5605 = vmatpush1.bf16.msra.mxu0 %v5238
  %5606 = vmatprep.subr.bf16.mxu0 %v5241
  %5607 = vmatpush1.bf16.msra.mxu0 %v5240
  %5608 = vmatprep.subr.bf16.mxu0 %v5243
  %5609 = vmatpush1.bf16.msra.mxu0 %v5242
  %5610 = vmatprep.subr.bf16.mxu0 %v5245
  %5611 = vmatpush1.bf16.msra.mxu0 %v5244
  %5612 = vmatprep.subr.bf16.mxu0 %v5247
  %5613 = vmatpush1.bf16.msra.mxu0 %v5246
  %5614 = vmatprep.mubr.bf16.mxu0 %v5317
  %5615 = vmatmul.mubr.bf16.gmra.mrb[0].mxu0 %v5316
  %v5616 = vpop.f32.mrb[0].mxu0
  %v5617 = vadd.f32 %v5576, %v5616
  %v5618 = vpop.f32.mrb[0].mxu0
  %v5619 = vadd.f32 %v5578, %v5618
  %v5620 = vpop.f32.mrb[0].mxu0
  %v5621 = vpop.f32.mrb[0].mxu0
  %5622 = vdwg.mxu0
  %5623 = vmatprep.subr.bf16.mxu0 %v5249
  %5624 = vmatpush1.bf16.msra.mxu0 %v5248
  %5625 = vmatprep.subr.bf16.mxu0 %v5251
  %5626 = vmatpush1.bf16.msra.mxu0 %v5250
  %5627 = vmatprep.subr.bf16.mxu0 %v5253
  %5628 = vmatpush1.bf16.msra.mxu0 %v5252
  %5629 = vmatprep.subr.bf16.mxu0 %v5255
  %5630 = vmatpush1.bf16.msra.mxu0 %v5254
  %5631 = vmatprep.subr.bf16.mxu0 %v5257
  %5632 = vmatpush1.bf16.msra.mxu0 %v5256
  %5633 = vmatprep.subr.bf16.mxu0 %v5259
  %5634 = vmatpush1.bf16.msra.mxu0 %v5258
  %5635 = vmatprep.subr.bf16.mxu0 %v5261
  %5636 = vmatpush1.bf16.msra.mxu0 %v5260
  %5637 = vmatprep.subr.bf16.mxu0 %v5263
  %5638 = vmatpush1.bf16.msra.mxu0 %v5262
  %5639 = vmatprep.subr.bf16.mxu0 %v5265
  %5640 = vmatpush1.bf16.msra.mxu0 %v5264
  %5641 = vmatprep.subr.bf16.mxu0 %v5267
  %5642 = vmatpush1.bf16.msra.mxu0 %v5266
  %5643 = vmatprep.subr.bf16.mxu0 %v5269
  %5644 = vmatpush1.bf16.msra.mxu0 %v5268
  %5645 = vmatprep.subr.bf16.mxu0 %v5271
  %5646 = vmatpush1.bf16.msra.mxu0 %v5270
  %5647 = vmatprep.subr.bf16.mxu0 %v5273
  %5648 = vmatpush1.bf16.msra.mxu0 %v5272
  %5649 = vmatprep.subr.bf16.mxu0 %v5275
  %5650 = vmatpush1.bf16.msra.mxu0 %v5274
  %5651 = vmatprep.subr.bf16.mxu0 %v5277
  %5652 = vmatpush1.bf16.msra.mxu0 %v5276
  %5653 = vmatprep.subr.bf16.mxu0 %v5279
  %5654 = vmatpush1.bf16.msra.mxu0 %v5278
  %5655 = vmatprep.mubr.bf16.mxu0 %v5319
  %5656 = vmatmul.mubr.bf16.gmra.mrb[0].mxu0 %v5318
  %v5657 = vpop.f32.mrb[0].mxu0
  %v5658 = vadd.f32 %v5617, %v5657
  %v5659 = vpop.f32.mrb[0].mxu0
  %v5660 = vadd.f32 %v5619, %v5659
  %v5661 = vpop.f32.mrb[0].mxu0
  %v5662 = vpop.f32.mrb[0].mxu0
  %5663 = vdwg.mxu0
  %v5664 = vpack.c.bf16 %v5658, %v5658
  %v5665 = vpack.c.bf16 %v5660, %v5660
  %v5666 = vld [vmem:[%s4] sm:$0xf]
  %v5667 = vld [vmem:[%s4 + $0x4] sm:$0xf]
  %v5668 = vld [vmem:[%s4 + $0x8] sm:$0xf]
  %v5669 = vld [vmem:[%s4 + $0xc] sm:$0xf]
  %v5670 = vld [vmem:[%s4 + $0x10] sm:$0xf]
  %v5671 = vld [vmem:[%s4 + $0x14] sm:$0xf]
  %v5672 = vld [vmem:[%s4 + $0x18] sm:$0xf]
  %v5673 = vld [vmem:[%s4 + $0x1c] sm:$0xf]
  %v5674 = vld [vmem:[%s4 + $0x20] sm:$0xf]
  %v5675 = vld [vmem:[%s4 + $0x24] sm:$0xf]
  %v5676 = vld [vmem:[%s4 + $0x28] sm:$0xf]
  %v5677 = vld [vmem:[%s4 + $0x2c] sm:$0xf]
  %v5678 = vld [vmem:[%s4 + $0x30] sm:$0xf]
  %v5679 = vld [vmem:[%s4 + $0x34] sm:$0xf]
  %v5680 = vld [vmem:[%s4 + $0x38] sm:$0xf]
  %v5681 = vld [vmem:[%s4 + $0x3c] sm:$0xf]
  %v5682 = vld [vmem:[%s4 + $0x40] sm:$0xf]
  %v5683 = vld [vmem:[%s4 + $0x44] sm:$0xf]
  %v5684 = vld [vmem:[%s4 + $0x48] sm:$0xf]
  %v5685 = vld [vmem:[%s4 + $0x4c] sm:$0xf]
  %v5706 = vunpack.c.l.b16 %v5666
  %v5707 = vunpack.c.l.b16 %v5667
  %v5708 = vunpack.c.l.b16 %v5668
  %v5709 = vunpack.c.l.b16 %v5669
  %v5710 = vunpack.c.l.b16 %v5670
  %v5711 = vunpack.c.l.b16 %v5671
  %v5712 = vunpack.c.l.b16 %v5672
  %v5713 = vunpack.c.l.b16 %v5673
  %v5714 = vunpack.c.l.b16 %v5674
  %v5715 = vunpack.c.l.b16 %v5675
  %v5716 = vunpack.c.l.b16 %v5676
  %v5717 = vunpack.c.l.b16 %v5677
  %v5718 = vunpack.c.l.b16 %v5678
  %v5719 = vunpack.c.l.b16 %v5679
  %v5720 = vunpack.c.l.b16 %v5680
  %v5721 = vunpack.c.l.b16 %v5681
  %v5722 = vunpack.c.l.b16 %v5682
  %v5723 = vunpack.c.l.b16 %v5683
  %v5724 = vunpack.c.l.b16 %v5684
  %v5725 = vunpack.c.l.b16 %v5685
  %v5726 = vpack.c.b16 %v5707, %v5706
  %v5727 = vpack.c.b16 %v5709, %v5708
  %v5728 = vpack.c.b16 %v5711, %v5710
  %v5729 = vpack.c.b16 %v5713, %v5712
  %v5730 = vpack.c.b16 %v5715, %v5714
  %v5731 = vpack.c.b16 %v5717, %v5716
  %v5732 = vpack.c.b16 %v5719, %v5718
  %v5733 = vpack.c.b16 %v5721, %v5720
  %v5734 = vpack.c.b16 %v5723, %v5722
  %v5735 = vpack.c.b16 %v5725, %v5724
  %v5747 = vsel %vm945, %v5665, 0
  %5749 = vmatprep.subr.bf16.mxu0 0
  %5750 = vmatpush1.bf16.msra.mxu0 %v5726
  %5751 = vmatprep.subr.bf16.mxu0 0
  %5752 = vmatpush1.bf16.msra.mxu0 %v5727
  %5753 = vmatprep.subr.bf16.mxu0 0
  %5754 = vmatpush1.bf16.msra.mxu0 %v5728
  %5755 = vmatprep.subr.bf16.mxu0 0
  %5756 = vmatpush1.bf16.msra.mxu0 %v5729
  %5757 = vmatprep.subr.bf16.mxu0 0
  %5758 = vmatpush1.bf16.msra.mxu0 %v5730
  %5759 = vmatprep.subr.bf16.mxu0 0
  %5760 = vmatpush1.bf16.msra.mxu0 %v5731
  %5761 = vmatprep.subr.bf16.mxu0 0
  %5762 = vmatpush1.bf16.msra.mxu0 %v5732
  %5763 = vmatprep.subr.bf16.mxu0 0
  %5764 = vmatpush1.bf16.msra.mxu0 %v5733
  %5765 = vmatprep.subr.bf16.mxu0 0
  %5766 = vmatpush1.bf16.msra.mxu0 %v5734
  %5767 = vmatprep.subr.bf16.mxu0 0
  %5768 = vmatpush1.bf16.msra.mxu0 %v5735
  %5769 = vmatprep.subr.bf16.mxu0 0
  %5770 = vmatpush1.bf16.msra.mxu0 0
  %5771 = vmatprep.subr.bf16.mxu0 0
  %5772 = vmatpush1.bf16.msra.mxu0 0
  %5773 = vmatprep.subr.bf16.mxu0 0
  %5774 = vmatpush1.bf16.msra.mxu0 0
  %5775 = vmatprep.subr.bf16.mxu0 0
  %5776 = vmatpush1.bf16.msra.mxu0 0
  %5777 = vmatprep.subr.bf16.mxu0 0
  %5778 = vmatpush1.bf16.msra.mxu0 0
  %5779 = vmatprep.subr.bf16.mxu0 0
  %5780 = vmatpush1.bf16.msra.mxu0 0
  %5781 = vmatprep.mubr.bf16.mxu0 %v5747
  %5782 = vmatmul.mubr.bf16.gmra.mrb[0].mxu0 %v5664
  %v5783 = vpop.f32.mrb[0].mxu0
  %v5784 = vadd.f32 0.0, %v5783
  %v5785 = vpop.f32.mrb[0].mxu0
  %v5786 = vpop.f32.mrb[0].mxu0
  %v5787 = vpop.f32.mrb[0].mxu0
  %5788 = vdwg.mxu0
  %v5789 = vpack.c.bf16 %v5784, %v5784
  %v5790 = vld [vmem:[%s5] sm:$0xff]
  %v5791 = vld [vmem:[%s5 + $0x8] sm:$0xf]
  %v5792 = vld [vmem:[%s5 + $0x1c] sm:$0xff]
  %v5793 = vld [vmem:[%s5 + $0x24] sm:$0xf]
  %v5794 = vld [vmem:[%s5 + $0x38] sm:$0xff]
  %v5795 = vld [vmem:[%s5 + $0x40] sm:$0xf]
  %v5796 = vld [vmem:[%s5 + $0x54] sm:$0xff]
  %v5797 = vld [vmem:[%s5 + $0x5c] sm:$0xf]
  %v5798 = vld [vmem:[%s5 + $0x70] sm:$0xff]
  %v5799 = vld [vmem:[%s5 + $0x78] sm:$0xf]
  %v5800 = vld [vmem:[%s5 + $0x8c] sm:$0xff]
  %v5801 = vld [vmem:[%s5 + $0x94] sm:$0xf]
  %v5802 = vld [vmem:[%s5 + $0xa8] sm:$0xff]
  %v5803 = vld [vmem:[%s5 + $0xb0] sm:$0xf]
  %v5804 = vld [vmem:[%s5 + $0xc4] sm:$0xff]
  %v5805 = vld [vmem:[%s5 + $0xcc] sm:$0xf]
  %v5806 = vld [vmem:[%s5 + $0xe0] sm:$0xff]
  %v5807 = vld [vmem:[%s5 + $0xe8] sm:$0xf]
  %v5808 = vld [vmem:[%s5 + $0xfc] sm:$0xff]
  %v5809 = vld [vmem:[%s5 + $0x104] sm:$0xf]
  %v5810 = vld [vmem:[%s5 + $0x118] sm:$0xff]
  %v5811 = vld [vmem:[%s5 + $0x120] sm:$0xf]
  %v5812 = vld [vmem:[%s5 + $0x134] sm:$0xff]
  %v5813 = vld [vmem:[%s5 + $0x13c] sm:$0xf]
  %v5814 = vld [vmem:[%s5 + $0x150] sm:$0xff]
  %v5815 = vld [vmem:[%s5 + $0x158] sm:$0xf]
  %v5816 = vld [vmem:[%s5 + $0x16c] sm:$0xff]
  %v5817 = vld [vmem:[%s5 + $0x174] sm:$0xf]
  %v5818 = vld [vmem:[%s5 + $0x188] sm:$0xff]
  %v5819 = vld [vmem:[%s5 + $0x190] sm:$0xf]
  %v5820 = vld [vmem:[%s5 + $0x1a4] sm:$0xff]
  %v5821 = vld [vmem:[%s5 + $0x1ac] sm:$0xf]
  %s5822 = scalar_lea.vmem %s7, 1
  %v5823 = vld [vmem:[%s5822] ss:$8 sm:$0x7]
  %v5825 = vlaneseq
  %v5826 = vshrl.u32 %v5825, 7
  %v5827 = vsub.s32 0, %v5826
  %v5828 = vrot.slane %v5823, %v5827
  %v5829 = vlaneseq
  %v5830 = vshrl.u32 %v5829, 7
  %v5831 = vsub.s32 1, %v5830
  %v5832 = vrot.slane %v5823, %v5831
  %v5833 = vlaneseq
  %v5834 = vshrl.u32 %v5833, 7
  %v5835 = vsub.s32 2, %v5834
  %v5836 = vrot.slane %v5823, %v5835
  %v5872 = vunpack.c.l.b16 %v5790
  %v5873 = vunpack.c.h.b16 %v5790
  %v5874 = vunpack.c.l.b16 %v5791
  %v5875 = vunpack.c.l.b16 %v5792
  %v5876 = vunpack.c.h.b16 %v5792
  %v5877 = vunpack.c.l.b16 %v5793
  %v5878 = vunpack.c.l.b16 %v5794
  %v5879 = vunpack.c.h.b16 %v5794
  %v5880 = vunpack.c.l.b16 %v5795
  %v5881 = vunpack.c.l.b16 %v5796
  %v5882 = vunpack.c.h.b16 %v5796
  %v5883 = vunpack.c.l.b16 %v5797
  %v5884 = vunpack.c.l.b16 %v5798
  %v5885 = vunpack.c.h.b16 %v5798
  %v5886 = vunpack.c.l.b16 %v5799
  %v5887 = vunpack.c.l.b16 %v5800
  %v5888 = vunpack.c.h.b16 %v5800
  %v5889 = vunpack.c.l.b16 %v5801
  %v5890 = vunpack.c.l.b16 %v5802
  %v5891 = vunpack.c.h.b16 %v5802
  %v5892 = vunpack.c.l.b16 %v5803
  %v5893 = vunpack.c.l.b16 %v5804
  %v5894 = vunpack.c.h.b16 %v5804
  %v5895 = vunpack.c.l.b16 %v5805
  %v5896 = vunpack.c.l.b16 %v5806
  %v5897 = vunpack.c.h.b16 %v5806
  %v5898 = vunpack.c.l.b16 %v5807
  %v5899 = vunpack.c.l.b16 %v5808
  %v5900 = vunpack.c.h.b16 %v5808
  %v5901 = vunpack.c.l.b16 %v5809
  %v5902 = vunpack.c.l.b16 %v5810
  %v5903 = vunpack.c.h.b16 %v5810
  %v5904 = vunpack.c.l.b16 %v5811
  %v5905 = vunpack.c.l.b16 %v5812
  %v5906 = vunpack.c.h.b16 %v5812
  %v5907 = vunpack.c.l.b16 %v5813
  %v5908 = vunpack.c.l.b16 %v5814
  %v5909 = vunpack.c.h.b16 %v5814
  %v5910 = vunpack.c.l.b16 %v5815
  %v5911 = vunpack.c.l.b16 %v5816
  %v5912 = vunpack.c.h.b16 %v5816
  %v5913 = vunpack.c.l.b16 %v5817
  %v5914 = vunpack.c.l.b16 %v5818
  %v5915 = vunpack.c.h.b16 %v5818
  %v5916 = vunpack.c.l.b16 %v5819
  %v5917 = vunpack.c.l.b16 %v5820
  %v5918 = vunpack.c.h.b16 %v5820
  %v5919 = vunpack.c.l.b16 %v5821
  %v5920 = vpack.c.b16 %v5875, %v5872
  %v5921 = vpack.c.b16 %v5876, %v5873
  %v5922 = vpack.c.b16 %v5877, %v5874
  %v5923 = vpack.c.b16 %v5881, %v5878
  %v5924 = vpack.c.b16 %v5882, %v5879
  %v5925 = vpack.c.b16 %v5883, %v5880
  %v5926 = vpack.c.b16 %v5887, %v5884
  %v5927 = vpack.c.b16 %v5888, %v5885
  %v5928 = vpack.c.b16 %v5889, %v5886
  %v5929 = vpack.c.b16 %v5893, %v5890
  %v5930 = vpack.c.b16 %v5894, %v5891
  %v5931 = vpack.c.b16 %v5895, %v5892
  %v5932 = vpack.c.b16 %v5899, %v5896
  %v5933 = vpack.c.b16 %v5900, %v5897
  %v5934 = vpack.c.b16 %v5901, %v5898
  %v5935 = vpack.c.b16 %v5905, %v5902
  %v5936 = vpack.c.b16 %v5906, %v5903
  %v5937 = vpack.c.b16 %v5907, %v5904
  %v5938 = vpack.c.b16 %v5911, %v5908
  %v5939 = vpack.c.b16 %v5912, %v5909
  %v5940 = vpack.c.b16 %v5913, %v5910
  %v5941 = vpack.c.b16 %v5917, %v5914
  %v5942 = vpack.c.b16 %v5918, %v5915
  %v5943 = vpack.c.b16 %v5919, %v5916
  %5968 = vmatprep.subr.bf16.mxu0 %v5921
  %5969 = vmatpush1.bf16.msra.mxu0 %v5920
  %5970 = vmatprep.subr.bf16.mxu0 %v5924
  %5971 = vmatpush1.bf16.msra.mxu0 %v5923
  %5972 = vmatprep.subr.bf16.mxu0 %v5927
  %5973 = vmatpush1.bf16.msra.mxu0 %v5926
  %5974 = vmatprep.subr.bf16.mxu0 %v5930
  %5975 = vmatpush1.bf16.msra.mxu0 %v5929
  %5976 = vmatprep.subr.bf16.mxu0 %v5933
  %5977 = vmatpush1.bf16.msra.mxu0 %v5932
  %5978 = vmatprep.subr.bf16.mxu0 %v5936
  %5979 = vmatpush1.bf16.msra.mxu0 %v5935
  %5980 = vmatprep.subr.bf16.mxu0 %v5939
  %5981 = vmatpush1.bf16.msra.mxu0 %v5938
  %5982 = vmatprep.subr.bf16.mxu0 %v5942
  %5983 = vmatpush1.bf16.msra.mxu0 %v5941
  %5984 = vmatprep.subr.bf16.mxu0 0
  %5985 = vmatpush1.bf16.msra.mxu0 0
  %5986 = vmatprep.subr.bf16.mxu0 0
  %5987 = vmatpush1.bf16.msra.mxu0 0
  %5988 = vmatprep.subr.bf16.mxu0 0
  %5989 = vmatpush1.bf16.msra.mxu0 0
  %5990 = vmatprep.subr.bf16.mxu0 0
  %5991 = vmatpush1.bf16.msra.mxu0 0
  %5992 = vmatprep.subr.bf16.mxu0 0
  %5993 = vmatpush1.bf16.msra.mxu0 0
  %5994 = vmatprep.subr.bf16.mxu0 0
  %5995 = vmatpush1.bf16.msra.mxu0 0
  %5996 = vmatprep.subr.bf16.mxu0 0
  %5997 = vmatpush1.bf16.msra.mxu0 0
  %5998 = vmatprep.subr.bf16.mxu0 0
  %5999 = vmatpush1.bf16.msra.mxu0 0
  %6000 = vmatprep.mubr.bf16.mxu0 0
  %6001 = vmatmul.mubr.bf16.gmra.mrb[0].mxu0 %v5789
  %v6002 = vpop.f32.mrb[0].mxu0
  %v6003 = vadd.f32 %v5828, %v6002
  %v6004 = vpop.f32.mrb[0].mxu0
  %v6005 = vadd.f32 %v5832, %v6004
  %v6006 = vpop.f32.mrb[0].mxu0
  %v6007 = vpop.f32.mrb[0].mxu0
  %6008 = vdwg.mxu0
  %6009 = vmatprep.subr.bf16.mxu0 0
  %6010 = vmatpush1.bf16.msra.mxu0 %v5922
  %6011 = vmatprep.subr.bf16.mxu0 0
  %6012 = vmatpush1.bf16.msra.mxu0 %v5925
  %6013 = vmatprep.subr.bf16.mxu0 0
  %6014 = vmatpush1.bf16.msra.mxu0 %v5928
  %6015 = vmatprep.subr.bf16.mxu0 0
  %6016 = vmatpush1.bf16.msra.mxu0 %v5931
  %6017 = vmatprep.subr.bf16.mxu0 0
  %6018 = vmatpush1.bf16.msra.mxu0 %v5934
  %6019 = vmatprep.subr.bf16.mxu0 0
  %6020 = vmatpush1.bf16.msra.mxu0 %v5937
  %6021 = vmatprep.subr.bf16.mxu0 0
  %6022 = vmatpush1.bf16.msra.mxu0 %v5940
  %6023 = vmatprep.subr.bf16.mxu0 0
  %6024 = vmatpush1.bf16.msra.mxu0 %v5943
  %6025 = vmatprep.subr.bf16.mxu0 0
  %6026 = vmatpush1.bf16.msra.mxu0 0
  %6027 = vmatprep.subr.bf16.mxu0 0
  %6028 = vmatpush1.bf16.msra.mxu0 0
  %6029 = vmatprep.subr.bf16.mxu0 0
  %6030 = vmatpush1.bf16.msra.mxu0 0
  %6031 = vmatprep.subr.bf16.mxu0 0
  %6032 = vmatpush1.bf16.msra.mxu0 0
  %6033 = vmatprep.subr.bf16.mxu0 0
  %6034 = vmatpush1.bf16.msra.mxu0 0
  %6035 = vmatprep.subr.bf16.mxu0 0
  %6036 = vmatpush1.bf16.msra.mxu0 0
  %6037 = vmatprep.subr.bf16.mxu0 0
  %6038 = vmatpush1.bf16.msra.mxu0 0
  %6039 = vmatprep.subr.bf16.mxu0 0
  %6040 = vmatpush1.bf16.msra.mxu0 0
  %6041 = vmatprep.mubr.bf16.mxu0 0
  %6042 = vmatmul.mubr.bf16.gmra.mrb[0].mxu0 %v5789
  %v6043 = vpop.f32.mrb[0].mxu0
  %v6044 = vadd.f32 %v5836, %v6043
  %v6045 = vpop.f32.mrb[0].mxu0
  %v6046 = vpop.f32.mrb[0].mxu0
  %v6047 = vpop.f32.mrb[0].mxu0
  %6048 = vdwg.mxu0
  %v6049 = vld [vmem:[%s8] sm:$0xff]
  %v6050 = vld [vmem:[%s8 + $0x8] sm:$0xff]
  %v6051 = vld [vmem:[%s8 + $0x10] sm:$0xff]
  %v6052 = vld [vmem:[%s8 + $0x18] sm:$0xff]
  %v6053 = vmul.f32 %v6003, %v6049
  %v6054 = vmul.f32 %v6003, %v6050
  %v6055 = vmul.f32 %v6003, %v6051
  %v6056 = vmul.f32 %v6003, %v6052
  %v6057 = vpack.c.bf16 %v6054, %v6053
  %v6058 = vpack.c.bf16 %v6056, %v6055
  %v6059 = vpack.c.bf16 %v6005, %v6005
  %6060 = vmatprep.subr.bf16.mxu0 0
  %6061 = vmatpush1.bf16.xpose.msra.mxu0 %v6059
  %6062 = vmatprep.subr.bf16.mxu0 0
  %6063 = vmatpush1.bf16.xpose.msra.mxu0 0
  %6064 = vmatprep.subr.bf16.mxu0 0
  %6065 = vmatpush1.bf16.xpose.msra.mxu0 0
  %6066 = vmatprep.subr.bf16.mxu0 0
  %6067 = vmatpush1.bf16.xpose.msra.mxu0 0
  %6068 = vmatprep.subr.bf16.mxu0 0
  %6069 = vmatpush1.bf16.xpose.msra.mxu0 0
  %6070 = vmatprep.subr.bf16.mxu0 0
  %6071 = vmatpush1.bf16.xpose.msra.mxu0 0
  %6072 = vmatprep.subr.bf16.mxu0 0
  %6073 = vmatpush1.bf16.xpose.msra.mxu0 0
  %6074 = vmatprep.subr.bf16.mxu0 0
  %6075 = vmatpush1.bf16.xpose.msra.mxu0 0
  %6076 = vmatprep.subr.bf16.mxu0 0
  %6077 = vmatpush1.bf16.xpose.msra.mxu0 0
  %6078 = vmatprep.subr.bf16.mxu0 0
  %6079 = vmatpush1.bf16.xpose.msra.mxu0 0
  %6080 = vmatprep.subr.bf16.mxu0 0
  %6081 = vmatpush1.bf16.xpose.msra.mxu0 0
  %6082 = vmatprep.subr.bf16.mxu0 0
  %6083 = vmatpush1.bf16.xpose.msra.mxu0 0
  %6084 = vmatprep.subr.bf16.mxu0 0
  %6085 = vmatpush1.bf16.xpose.msra.mxu0 0
  %6086 = vmatprep.subr.bf16.mxu0 0
  %6087 = vmatpush1.bf16.xpose.msra.mxu0 0
  %6088 = vmatprep.subr.bf16.mxu0 0
  %6089 = vmatpush1.bf16.xpose.msra.mxu0 0
  %6090 = vmatprep.subr.bf16.mxu0 0
  %6091 = vmatpush1.bf16.xpose.msra.mxu0 0
  %6092 = vmatprep.mubr.bf16.mxu0 0
  %6093 = vmatmul.mubr.bf16.gmra.mrb[0].mxu0 %v6057
  %v6094 = vpop.f32.mrb[0].mxu0
  %v6095 = vadd.f32 0.0, %v6094
  %v6096 = vpop.f32.mrb[0].mxu0
  %v6097 = vpop.f32.mrb[0].mxu0
  %v6098 = vadd.f32 0.0, %v6097
  %v6099 = vpop.f32.mrb[0].mxu0
  %6100 = vmatprep.mubr.bf16.mxu0 0
  %6101 = vmatmul.mubr.bf16.gmra.mrb[0].mxu0 %v6058
  %v6102 = vpop.f32.mrb[0].mxu0
  %v6103 = vadd.f32 0.0, %v6102
  %v6104 = vpop.f32.mrb[0].mxu0
  %v6105 = vpop.f32.mrb[0].mxu0
  %v6106 = vadd.f32 0.0, %v6105
  %v6107 = vpop.f32.mrb[0].mxu0
  %6108 = vdwg.mxu0
  %v6109 = vmul.f32 %v6095, 0.17677669
  %v6110 = vmul.f32 %v6098, 0.17677669
  %v6111 = vmul.f32 %v6103, 0.17677669
  %v6112 = vmul.f32 %v6106, 0.17677669
  %vm6113 = vcmask 64512
  %v6114 = vsel %vm6113, %v6109, -inf
  %6115 = vmax.xlane.f32.xlu0 %v6114
  %v6116 = vpop.xlane.xlu0 %6115
  %v6117 = vsel %vm6113, %v6110, -inf
  %6118 = vmax.xlane.f32.xlu0 %v6117
  %v6119 = vpop.xlane.xlu0 %6118
  %v6120 = vsel %vm6113, %v6111, -inf
  %6121 = vmax.xlane.f32.xlu0 %v6120
  %v6122 = vpop.xlane.xlu0 %6121
  %v6123 = vsel %vm6113, %v6112, -inf
  %6124 = vmax.xlane.f32.xlu0 %v6123
  %v6125 = vpop.xlane.xlu0 %6124
  %v6126 = vsub.f32 %v6109, %v6116
  %v6127 = vsub.f32 %v6110, %v6119
  %v6128 = vsub.f32 %v6111, %v6122
  %v6129 = vsub.f32 %v6112, %v6125
  %v6130 = vmul.f32 %v6126, 1.442695
  %v6131 = vpow.pop %v6130
  %v6132 = vmul.f32 %v6127, 1.442695
  %v6133 = vpow.pop %v6132
  %v6134 = vmul.f32 %v6128, 1.442695
  %v6135 = vpow.pop %v6134
  %v6136 = vmul.f32 %v6129, 1.442695
  %v6137 = vpow.pop %v6136
  %v6138 = vsel %vm6113, %v6131, 0.0
  %6139 = vadd.xlane.f32.xlu0 %v6138
  %v6140 = vpop.xlane.xlu0 %6139
  %v6141 = vsel %vm6113, %v6133, 0.0
  %6142 = vadd.xlane.f32.xlu0 %v6141
  %v6143 = vpop.xlane.xlu0 %6142
  %v6144 = vsel %vm6113, %v6135, 0.0
  %6145 = vadd.xlane.f32.xlu0 %v6144
  %v6146 = vpop.xlane.xlu0 %6145
  %v6147 = vsel %vm6113, %v6137, 0.0
  %6148 = vadd.xlane.f32.xlu0 %v6147
  %v6149 = vpop.xlane.xlu0 %6148
  %v6150 = vrcp.pop %v6140
  %v6151 = vrcp.pop %v6143
  %v6152 = vrcp.pop %v6146
  %v6153 = vrcp.pop %v6149
  %v6154 = vmul.f32 %v6131, %v6150
  %v6155 = vmul.f32 %v6133, %v6151
  %v6156 = vmul.f32 %v6135, %v6152
  %v6157 = vmul.f32 %v6137, %v6153
  %v6158 = vpack.c.bf16 %v6155, %v6154
  %v6159 = vpack.c.bf16 %v6157, %v6156
  %v6160 = vpack.c.bf16 %v6044, %v6044
  %v6162 = vsel %vm6113, %v6158, 0
  %v6165 = vsel %vm6113, %v6159, 0
  %vm6167 = vcmask 1043456
  %v6169 = vsel %vm6167, %v6160, 0
  %6171 = vmatprep.subr.bf16.mxu0 0
  %6172 = vmatpush1.bf16.msra.mxu0 %v6169
  %6173 = vmatprep.subr.bf16.mxu0 0
  %6174 = vmatpush1.bf16.msra.mxu0 0
  %6175 = vmatprep.subr.bf16.mxu0 0
  %6176 = vmatpush1.bf16.msra.mxu0 0
  %6177 = vmatprep.subr.bf16.mxu0 0
  %6178 = vmatpush1.bf16.msra.mxu0 0
  %6179 = vmatprep.subr.bf16.mxu0 0
  %6180 = vmatpush1.bf16.msra.mxu0 0
  %6181 = vmatprep.subr.bf16.mxu0 0
  %6182 = vmatpush1.bf16.msra.mxu0 0
  %6183 = vmatprep.subr.bf16.mxu0 0
  %6184 = vmatpush1.bf16.msra.mxu0 0
  %6185 = vmatprep.subr.bf16.mxu0 0
  %6186 = vmatpush1.bf16.msra.mxu0 0
  %6187 = vmatprep.subr.bf16.mxu0 0
  %6188 = vmatpush1.bf16.msra.mxu0 0
  %6189 = vmatprep.subr.bf16.mxu0 0
  %6190 = vmatpush1.bf16.msra.mxu0 0
  %6191 = vmatprep.subr.bf16.mxu0 0
  %6192 = vmatpush1.bf16.msra.mxu0 0
  %6193 = vmatprep.subr.bf16.mxu0 0
  %6194 = vmatpush1.bf16.msra.mxu0 0
  %6195 = vmatprep.subr.bf16.mxu0 0
  %6196 = vmatpush1.bf16.msra.mxu0 0
  %6197 = vmatprep.subr.bf16.mxu0 0
  %6198 = vmatpush1.bf16.msra.mxu0 0
  %6199 = vmatprep.subr.bf16.mxu0 0
  %6200 = vmatpush1.bf16.msra.mxu0 0
  %6201 = vmatprep.subr.bf16.mxu0 0
  %6202 = vmatpush1.bf16.msra.mxu0 0
  %6203 = vmatprep.mubr.bf16.mxu0 0
  %6204 = vmatmul.mubr.bf16.gmra.mrb[0].mxu0 %v6162
  %v6205 = vpop.f32.mrb[0].mxu0
  %v6206 = vadd.f32 0.0, %v6205
  %v6207 = vpop.f32.mrb[0].mxu0
  %v6208 = vpop.f32.mrb[0].mxu0
  %v6209 = vadd.f32 0.0, %v6208
  %v6210 = vpop.f32.mrb[0].mxu0
  %6211 = vmatprep.mubr.bf16.mxu0 0
  %6212 = vmatmul.mubr.bf16.gmra.mrb[0].mxu0 %v6165
  %v6213 = vpop.f32.mrb[0].mxu0
  %v6214 = vadd.f32 0.0, %v6213
  %v6215 = vpop.f32.mrb[0].mxu0
  %v6216 = vpop.f32.mrb[0].mxu0
  %v6217 = vadd.f32 0.0, %v6216
  %v6218 = vpop.f32.mrb[0].mxu0
  %6219 = vdwg.mxu0
  %v6220 = vmul.f32 %v6206, %v6049
  %v6221 = vmul.f32 %v6209, %v6050
  %v6222 = vmul.f32 %v6214, %v6051
  %v6223 = vmul.f32 %v6217, %v6052
  %v6224 = vadd.f32 %v6220, %v6221
  %v6225 = vadd.f32 %v6224, %v6222
  %v6226 = vadd.f32 %v6225, %v6223
  %v6227 = vpack.c.bf16 %v6226, %v6226
  %v6228 = vld [vmem:[%s5 + $0xc] sm:$0xf]
  %v6229 = vld [vmem:[%s5 + $0x28] sm:$0xf]
  %v6230 = vld [vmem:[%s5 + $0x44] sm:$0xf]
  %v6231 = vld [vmem:[%s5 + $0x60] sm:$0xf]
  %v6232 = vld [vmem:[%s5 + $0x7c] sm:$0xf]
  %v6233 = vld [vmem:[%s5 + $0x98] sm:$0xf]
  %v6234 = vld [vmem:[%s5 + $0xb4] sm:$0xf]
  %v6235 = vld [vmem:[%s5 + $0xd0] sm:$0xf]
  %v6236 = vld [vmem:[%s5 + $0xec] sm:$0xf]
  %v6237 = vld [vmem:[%s5 + $0x108] sm:$0xf]
  %v6238 = vld [vmem:[%s5 + $0x124] sm:$0xf]
  %v6239 = vld [vmem:[%s5 + $0x140] sm:$0xf]
  %v6240 = vld [vmem:[%s5 + $0x15c] sm:$0xf]
  %v6241 = vld [vmem:[%s5 + $0x178] sm:$0xf]
  %v6242 = vld [vmem:[%s5 + $0x194] sm:$0xf]
  %v6243 = vld [vmem:[%s5 + $0x1b0] sm:$0xf]
  %v6244 = vld [vmem:[%s7 + $0x2] ss:$0 sm:$0xff]
  %v6261 = vunpack.c.l.b16 %v6228
  %v6262 = vunpack.c.l.b16 %v6229
  %v6263 = vunpack.c.l.b16 %v6230
  %v6264 = vunpack.c.l.b16 %v6231
  %v6265 = vunpack.c.l.b16 %v6232
  %v6266 = vunpack.c.l.b16 %v6233
  %v6267 = vunpack.c.l.b16 %v6234
  %v6268 = vunpack.c.l.b16 %v6235
  %v6269 = vunpack.c.l.b16 %v6236
  %v6270 = vunpack.c.l.b16 %v6237
  %v6271 = vunpack.c.l.b16 %v6238
  %v6272 = vunpack.c.l.b16 %v6239
  %v6273 = vunpack.c.l.b16 %v6240
  %v6274 = vunpack.c.l.b16 %v6241
  %v6275 = vunpack.c.l.b16 %v6242
  %v6276 = vunpack.c.l.b16 %v6243
  %v6277 = vpack.c.b16 %v6262, %v6261
  %v6278 = vpack.c.b16 %v6264, %v6263
  %v6279 = vpack.c.b16 %v6266, %v6265
  %v6280 = vpack.c.b16 %v6268, %v6267
  %v6281 = vpack.c.b16 %v6270, %v6269
  %v6282 = vpack.c.b16 %v6272, %v6271
  %v6283 = vpack.c.b16 %v6274, %v6273
  %v6284 = vpack.c.b16 %v6276, %v6275
  %6293 = vmatprep.subr.bf16.mxu0 0
  %6294 = vmatpush1.bf16.msra.mxu0 %v6277
  %6295 = vmatprep.subr.bf16.mxu0 0
  %6296 = vmatpush1.bf16.msra.mxu0 %v6278
  %6297 = vmatprep.subr.bf16.mxu0 0
  %6298 = vmatpush1.bf16.msra.mxu0 %v6279
  %6299 = vmatprep.subr.bf16.mxu0 0
  %6300 = vmatpush1.bf16.msra.mxu0 %v6280
  %6301 = vmatprep.subr.bf16.mxu0 0
  %6302 = vmatpush1.bf16.msra.mxu0 %v6281
  %6303 = vmatprep.subr.bf16.mxu0 0
  %6304 = vmatpush1.bf16.msra.mxu0 %v6282
  %6305 = vmatprep.subr.bf16.mxu0 0
  %6306 = vmatpush1.bf16.msra.mxu0 %v6283
  %6307 = vmatprep.subr.bf16.mxu0 0
  %6308 = vmatpush1.bf16.msra.mxu0 %v6284
  %6309 = vmatprep.subr.bf16.mxu0 0
  %6310 = vmatpush1.bf16.msra.mxu0 0
  %6311 = vmatprep.subr.bf16.mxu0 0
  %6312 = vmatpush1.bf16.msra.mxu0 0
  %6313 = vmatprep.subr.bf16.mxu0 0
  %6314 = vmatpush1.bf16.msra.mxu0 0
  %6315 = vmatprep.subr.bf16.mxu0 0
  %6316 = vmatpush1.bf16.msra.mxu0 0
  %6317 = vmatprep.subr.bf16.mxu0 0
  %6318 = vmatpush1.bf16.msra.mxu0 0
  %6319 = vmatprep.subr.bf16.mxu0 0
  %6320 = vmatpush1.bf16.msra.mxu0 0
  %6321 = vmatprep.subr.bf16.mxu0 0
  %6322 = vmatpush1.bf16.msra.mxu0 0
  %6323 = vmatprep.subr.bf16.mxu0 0
  %6324 = vmatpush1.bf16.msra.mxu0 0
  %6325 = vmatprep.mubr.bf16.mxu0 0
  %6326 = vmatmul.mubr.bf16.gmra.mrb[0].mxu0 %v6227
  %v6327 = vpop.f32.mrb[0].mxu0
  %v6328 = vadd.f32 %v6244, %v6327
  %v6329 = vpop.f32.mrb[0].mxu0
  %v6330 = vpop.f32.mrb[0].mxu0
  %v6331 = vpop.f32.mrb[0].mxu0
  %6332 = vdwg.mxu0
  %v6333 = vadd.f32 %v5784, %v6328
  %v6334 = vld [vmem:[%s7 + $0x3] ss:$0 sm:$0xff]
  %v6335 = vld [vmem:[%s7 + $0x4] ss:$0 sm:$0xff]
  %6336 = vadd.xlane.f32.xlu0 %v6333
  %v6337 = vpop.xlane.xlu0 %6336
  %v6338 = vrcp.pop 128.0
  %v6339 = vmul.f32 %v6337, %v6338
  %v6340 = vsub.f32 %v6333, %v6339
  %v6341 = vmul.f32 %v6340, %v6340
  %6342 = vadd.xlane.f32.xlu0 %v6341
  %v6343 = vpop.xlane.xlu0 %6342
  %v6344 = vmul.f32 %v6343, %v6338
  %v6345 = vadd.f32 %v6344, 1e-05
  %v6346 = vrsqrt.pop %v6345
  %v6347 = vmul.f32 %v6340, %v6346
  %v6348 = vmul.f32 %v6347, %v6334
  %v6349 = vadd.f32 %v6348, %v6335
  %v6350 = vpack.c.bf16 %v6349, %v6349
  %v6351 = vld [vmem:[%s5 + $0x10] sm:$0xff]
  %v6352 = vld [vmem:[%s5 + $0x2c] sm:$0xff]
  %v6353 = vld [vmem:[%s5 + $0x48] sm:$0xff]
  %v6354 = vld [vmem:[%s5 + $0x64] sm:$0xff]
  %v6355 = vld [vmem:[%s5 + $0x80] sm:$0xff]
  %v6356 = vld [vmem:[%s5 + $0x9c] sm:$0xff]
  %v6357 = vld [vmem:[%s5 + $0xb8] sm:$0xff]
  %v6358 = vld [vmem:[%s5 + $0xd4] sm:$0xff]
  %v6359 = vld [vmem:[%s5 + $0xf0] sm:$0xff]
  %v6360 = vld [vmem:[%s5 + $0x10c] sm:$0xff]
  %v6361 = vld [vmem:[%s5 + $0x128] sm:$0xff]
  %v6362 = vld [vmem:[%s5 + $0x144] sm:$0xff]
  %v6363 = vld [vmem:[%s5 + $0x160] sm:$0xff]
  %v6364 = vld [vmem:[%s5 + $0x17c] sm:$0xff]
  %v6365 = vld [vmem:[%s5 + $0x198] sm:$0xff]
  %v6366 = vld [vmem:[%s5 + $0x1b4] sm:$0xff]
  %s6367 = scalar_lea.vmem %s7, 5
  %v6368 = vld [vmem:[%s6367] ss:$8 sm:$0x3]
  %v6370 = vlaneseq
  %v6371 = vshrl.u32 %v6370, 7
  %v6372 = vsub.s32 0, %v6371
  %v6373 = vrot.slane %v6368, %v6372
  %v6374 = vlaneseq
  %v6375 = vshrl.u32 %v6374, 7
  %v6376 = vsub.s32 1, %v6375
  %v6377 = vrot.slane %v6368, %v6376
  %v6396 = vunpack.c.l.b16 %v6351
  %v6397 = vunpack.c.h.b16 %v6351
  %v6398 = vunpack.c.l.b16 %v6352
  %v6399 = vunpack.c.h.b16 %v6352
  %v6400 = vunpack.c.l.b16 %v6353
  %v6401 = vunpack.c.h.b16 %v6353
  %v6402 = vunpack.c.l.b16 %v6354
  %v6403 = vunpack.c.h.b16 %v6354
  %v6404 = vunpack.c.l.b16 %v6355
  %v6405 = vunpack.c.h.b16 %v6355
  %v6406 = vunpack.c.l.b16 %v6356
  %v6407 = vunpack.c.h.b16 %v6356
  %v6408 = vunpack.c.l.b16 %v6357
  %v6409 = vunpack.c.h.b16 %v6357
  %v6410 = vunpack.c.l.b16 %v6358
  %v6411 = vunpack.c.h.b16 %v6358
  %v6412 = vunpack.c.l.b16 %v6359
  %v6413 = vunpack.c.h.b16 %v6359
  %v6414 = vunpack.c.l.b16 %v6360
  %v6415 = vunpack.c.h.b16 %v6360
  %v6416 = vunpack.c.l.b16 %v6361
  %v6417 = vunpack.c.h.b16 %v6361
  %v6418 = vunpack.c.l.b16 %v6362
  %v6419 = vunpack.c.h.b16 %v6362
  %v6420 = vunpack.c.l.b16 %v6363
  %v6421 = vunpack.c.h.b16 %v6363
  %v6422 = vunpack.c.l.b16 %v6364
  %v6423 = vunpack.c.h.b16 %v6364
  %v6424 = vunpack.c.l.b16 %v6365
  %v6425 = vunpack.c.h.b16 %v6365
  %v6426 = vunpack.c.l.b16 %v6366
  %v6427 = vunpack.c.h.b16 %v6366
  %v6428 = vpack.c.b16 %v6398, %v6396
  %v6429 = vpack.c.b16 %v6399, %v6397
  %v6430 = vpack.c.b16 %v6402, %v6400
  %v6431 = vpack.c.b16 %v6403, %v6401
  %v6432 = vpack.c.b16 %v6406, %v6404
  %v6433 = vpack.c.b16 %v6407, %v6405
  %v6434 = vpack.c.b16 %v6410, %v6408
  %v6435 = vpack.c.b16 %v6411, %v6409
  %v6436 = vpack.c.b16 %v6414, %v6412
  %v6437 = vpack.c.b16 %v6415, %v6413
  %v6438 = vpack.c.b16 %v6418, %v6416
  %v6439 = vpack.c.b16 %v6419, %v6417
  %v6440 = vpack.c.b16 %v6422, %v6420
  %v6441 = vpack.c.b16 %v6423, %v6421
  %v6442 = vpack.c.b16 %v6426, %v6424
  %v6443 = vpack.c.b16 %v6427, %v6425
  %6460 = vmatprep.subr.bf16.mxu0 %v6429
  %6461 = vmatpush1.bf16.msra.mxu0 %v6428
  %6462 = vmatprep.subr.bf16.mxu0 %v6431
  %6463 = vmatpush1.bf16.msra.mxu0 %v6430
  %6464 = vmatprep.subr.bf16.mxu0 %v6433
  %6465 = vmatpush1.bf16.msra.mxu0 %v6432
  %6466 = vmatprep.subr.bf16.mxu0 %v6435
  %6467 = vmatpush1.bf16.msra.mxu0 %v6434
  %6468 = vmatprep.subr.bf16.mxu0 %v6437
  %6469 = vmatpush1.bf16.msra.mxu0 %v6436
  %6470 = vmatprep.subr.bf16.mxu0 %v6439
  %6471 = vmatpush1.bf16.msra.mxu0 %v6438
  %6472 = vmatprep.subr.bf16.mxu0 %v6441
  %6473 = vmatpush1.bf16.msra.mxu0 %v6440
  %6474 = vmatprep.subr.bf16.mxu0 %v6443
  %6475 = vmatpush1.bf16.msra.mxu0 %v6442
  %6476 = vmatprep.subr.bf16.mxu0 0
  %6477 = vmatpush1.bf16.msra.mxu0 0
  %6478 = vmatprep.subr.bf16.mxu0 0
  %6479 = vmatpush1.bf16.msra.mxu0 0
  %6480 = vmatprep.subr.bf16.mxu0 0
  %6481 = vmatpush1.bf16.msra.mxu0 0
  %6482 = vmatprep.subr.bf16.mxu0 0
  %6483 = vmatpush1.bf16.msra.mxu0 0
  %6484 = vmatprep.subr.bf16.mxu0 0
  %6485 = vmatpush1.bf16.msra.mxu0 0
  %6486 = vmatprep.subr.bf16.mxu0 0
  %6487 = vmatpush1.bf16.msra.mxu0 0
  %6488 = vmatprep.subr.bf16.mxu0 0
  %6489 = vmatpush1.bf16.msra.mxu0 0
  %6490 = vmatprep.subr.bf16.mxu0 0
  %6491 = vmatpush1.bf16.msra.mxu0 0
  %6492 = vmatprep.mubr.bf16.mxu0 0
  %6493 = vmatmul.mubr.bf16.gmra.mrb[0].mxu0 %v6350
  %v6494 = vpop.f32.mrb[0].mxu0
  %v6495 = vadd.f32 %v6373, %v6494
  %v6496 = vpop.f32.mrb[0].mxu0
  %v6497 = vadd.f32 %v6377, %v6496
  %v6498 = vpop.f32.mrb[0].mxu0
  %v6499 = vpop.f32.mrb[0].mxu0
  %6500 = vdwg.mxu0
  %v6501 = vmax.f32 %v6495, 0.0
  %v6502 = vmax.f32 %v6497, 0.0
  %v6503 = vpack.c.bf16 %v6501, %v6501
  %v6504 = vpack.c.bf16 %v6502, %v6502
  %v6505 = vld [vmem:[%s6] sm:$0xf]
  %v6506 = vld [vmem:[%s6 + $0x4] sm:$0xf]
  %v6507 = vld [vmem:[%s6 + $0x8] sm:$0xf]
  %v6508 = vld [vmem:[%s6 + $0xc] sm:$0xf]
  %v6509 = vld [vmem:[%s6 + $0x10] sm:$0xf]
  %v6510 = vld [vmem:[%s6 + $0x14] sm:$0xf]
  %v6511 = vld [vmem:[%s6 + $0x18] sm:$0xf]
  %v6512 = vld [vmem:[%s6 + $0x1c] sm:$0xf]
  %v6513 = vld [vmem:[%s6 + $0x20] sm:$0xf]
  %v6514 = vld [vmem:[%s6 + $0x24] sm:$0xf]
  %v6515 = vld [vmem:[%s6 + $0x28] sm:$0xf]
  %v6516 = vld [vmem:[%s6 + $0x2c] sm:$0xf]
  %v6517 = vld [vmem:[%s6 + $0x30] sm:$0xf]
  %v6518 = vld [vmem:[%s6 + $0x34] sm:$0xf]
  %v6519 = vld [vmem:[%s6 + $0x38] sm:$0xf]
  %v6520 = vld [vmem:[%s6 + $0x3c] sm:$0xf]
  %v6521 = vld [vmem:[%s6 + $0x40] sm:$0xf]
  %v6522 = vld [vmem:[%s6 + $0x44] sm:$0xf]
  %v6523 = vld [vmem:[%s6 + $0x48] sm:$0xf]
  %v6524 = vld [vmem:[%s6 + $0x4c] sm:$0xf]
  %v6525 = vld [vmem:[%s6 + $0x50] sm:$0xf]
  %v6526 = vld [vmem:[%s6 + $0x54] sm:$0xf]
  %v6527 = vld [vmem:[%s6 + $0x58] sm:$0xf]
  %v6528 = vld [vmem:[%s6 + $0x5c] sm:$0xf]
  %v6529 = vld [vmem:[%s6 + $0x60] sm:$0xf]
  %v6530 = vld [vmem:[%s6 + $0x64] sm:$0xf]
  %v6531 = vld [vmem:[%s6 + $0x68] sm:$0xf]
  %v6532 = vld [vmem:[%s6 + $0x6c] sm:$0xf]
  %v6533 = vld [vmem:[%s6 + $0x70] sm:$0xf]
  %v6534 = vld [vmem:[%s6 + $0x74] sm:$0xf]
  %v6535 = vld [vmem:[%s6 + $0x78] sm:$0xf]
  %v6536 = vld [vmem:[%s6 + $0x7c] sm:$0xf]
  %v6537 = vld [vmem:[%s7 + $0x6] ss:$0 sm:$0xff]
  %v6570 = vunpack.c.l.b16 %v6505
  %v6571 = vunpack.c.l.b16 %v6506
  %v6572 = vunpack.c.l.b16 %v6507
  %v6573 = vunpack.c.l.b16 %v6508
  %v6574 = vunpack.c.l.b16 %v6509
  %v6575 = vunpack.c.l.b16 %v6510
  %v6576 = vunpack.c.l.b16 %v6511
  %v6577 = vunpack.c.l.b16 %v6512
  %v6578 = vunpack.c.l.b16 %v6513
  %v6579 = vunpack.c.l.b16 %v6514
  %v6580 = vunpack.c.l.b16 %v6515
  %v6581 = vunpack.c.l.b16 %v6516
  %v6582 = vunpack.c.l.b16 %v6517
  %v6583 = vunpack.c.l.b16 %v6518
  %v6584 = vunpack.c.l.b16 %v6519
  %v6585 = vunpack.c.l.b16 %v6520
  %v6586 = vunpack.c.l.b16 %v6521
  %v6587 = vunpack.c.l.b16 %v6522
  %v6588 = vunpack.c.l.b16 %v6523
  %v6589 = vunpack.c.l.b16 %v6524
  %v6590 = vunpack.c.l.b16 %v6525
  %v6591 = vunpack.c.l.b16 %v6526
  %v6592 = vunpack.c.l.b16 %v6527
  %v6593 = vunpack.c.l.b16 %v6528
  %v6594 = vunpack.c.l.b16 %v6529
  %v6595 = vunpack.c.l.b16 %v6530
  %v6596 = vunpack.c.l.b16 %v6531
  %v6597 = vunpack.c.l.b16 %v6532
  %v6598 = vunpack.c.l.b16 %v6533
  %v6599 = vunpack.c.l.b16 %v6534
  %v6600 = vunpack.c.l.b16 %v6535
  %v6601 = vunpack.c.l.b16 %v6536
  %v6602 = vpack.c.b16 %v6571, %v6570
  %v6603 = vpack.c.b16 %v6573, %v6572
  %v6604 = vpack.c.b16 %v6575, %v6574
  %v6605 = vpack.c.b16 %v6577, %v6576
  %v6606 = vpack.c.b16 %v6579, %v6578
  %v6607 = vpack.c.b16 %v6581, %v6580
  %v6608 = vpack.c.b16 %v6583, %v6582
  %v6609 = vpack.c.b16 %v6585, %v6584
  %v6610 = vpack.c.b16 %v6587, %v6586
  %v6611 = vpack.c.b16 %v6589, %v6588
  %v6612 = vpack.c.b16 %v6591, %v6590
  %v6613 = vpack.c.b16 %v6593, %v6592
  %v6614 = vpack.c.b16 %v6595, %v6594
  %v6615 = vpack.c.b16 %v6597, %v6596
  %v6616 = vpack.c.b16 %v6599, %v6598
  %v6617 = vpack.c.b16 %v6601, %v6600
  %6634 = vmatprep.subr.bf16.mxu0 0
  %6635 = vmatpush1.bf16.msra.mxu0 %v6602
  %6636 = vmatprep.subr.bf16.mxu0 0
  %6637 = vmatpush1.bf16.msra.mxu0 %v6603
  %6638 = vmatprep.subr.bf16.mxu0 0
  %6639 = vmatpush1.bf16.msra.mxu0 %v6604
  %6640 = vmatprep.subr.bf16.mxu0 0
  %6641 = vmatpush1.bf16.msra.mxu0 %v6605
  %6642 = vmatprep.subr.bf16.mxu0 0
  %6643 = vmatpush1.bf16.msra.mxu0 %v6606
  %6644 = vmatprep.subr.bf16.mxu0 0
  %6645 = vmatpush1.bf16.msra.mxu0 %v6607
  %6646 = vmatprep.subr.bf16.mxu0 0
  %6647 = vmatpush1.bf16.msra.mxu0 %v6608
  %6648 = vmatprep.subr.bf16.mxu0 0
  %6649 = vmatpush1.bf16.msra.mxu0 %v6609
  %6650 = vmatprep.subr.bf16.mxu0 0
  %6651 = vmatpush1.bf16.msra.mxu0 %v6610
  %6652 = vmatprep.subr.bf16.mxu0 0
  %6653 = vmatpush1.bf16.msra.mxu0 %v6611
  %6654 = vmatprep.subr.bf16.mxu0 0
  %6655 = vmatpush1.bf16.msra.mxu0 %v6612
  %6656 = vmatprep.subr.bf16.mxu0 0
  %6657 = vmatpush1.bf16.msra.mxu0 %v6613
  %6658 = vmatprep.subr.bf16.mxu0 0
  %6659 = vmatpush1.bf16.msra.mxu0 %v6614
  %6660 = vmatprep.subr.bf16.mxu0 0
  %6661 = vmatpush1.bf16.msra.mxu0 %v6615
  %6662 = vmatprep.subr.bf16.mxu0 0
  %6663 = vmatpush1.bf16.msra.mxu0 %v6616
  %6664 = vmatprep.subr.bf16.mxu0 0
  %6665 = vmatpush1.bf16.msra.mxu0 %v6617
  %6666 = vmatprep.mubr.bf16.mxu0 %v6504
  %6667 = vmatmul.mubr.bf16.gmra.mrb[0].mxu0 %v6503
  %v6668 = vpop.f32.mrb[0].mxu0
  %v6669 = vadd.f32 %v6537, %v6668
  %v6670 = vpop.f32.mrb[0].mxu0
  %v6671 = vpop.f32.mrb[0].mxu0
  %v6672 = vpop.f32.mrb[0].mxu0
  %6673 = vdwg.mxu0
  %v6674 = vadd.f32 %v6349, %v6669
  %v6675 = vld [vmem:[%s7 + $0x7] ss:$0 sm:$0xff]
  %v6676 = vld [vmem:[%s7 + $0x18] ss:$0 sm:$0xff]
  %6677 = vadd.xlane.f32.xlu0 %v6674
  %v6678 = vpop.xlane.xlu0 %6677
  %v6679 = vmul.f32 %v6678, %v6338
  %v6680 = vsub.f32 %v6674, %v6679
  %v6681 = vmul.f32 %v6680, %v6680
  %6682 = vadd.xlane.f32.xlu0 %v6681
  %v6683 = vpop.xlane.xlu0 %6682
  %v6684 = vmul.f32 %v6683, %v6338
  %v6685 = vadd.f32 %v6684, 1e-05
  %v6686 = vrsqrt.pop %v6685
  %v6687 = vmul.f32 %v6680, %v6686
  %v6688 = vmul.f32 %v6687, %v6675
  %v6689 = vadd.f32 %v6688, %v6676
  %v6690 = vpack.c.bf16 %v6689, %v6689
  %v6691 = vld [vmem:[%s5 + $0x18] sm:$0xf]
  %v6692 = vld [vmem:[%s5 + $0x34] sm:$0xf]
  %v6693 = vld [vmem:[%s5 + $0x50] sm:$0xf]
  %v6694 = vld [vmem:[%s5 + $0x6c] sm:$0xf]
  %v6695 = vld [vmem:[%s5 + $0x88] sm:$0xf]
  %v6696 = vld [vmem:[%s5 + $0xa4] sm:$0xf]
  %v6697 = vld [vmem:[%s5 + $0xc0] sm:$0xf]
  %v6698 = vld [vmem:[%s5 + $0xdc] sm:$0xf]
  %v6699 = vld [vmem:[%s5 + $0xf8] sm:$0xf]
  %v6700 = vld [vmem:[%s5 + $0x114] sm:$0xf]
  %v6701 = vld [vmem:[%s5 + $0x130] sm:$0xf]
  %v6702 = vld [vmem:[%s5 + $0x14c] sm:$0xf]
  %v6703 = vld [vmem:[%s5 + $0x168] sm:$0xf]
  %v6704 = vld [vmem:[%s5 + $0x184] sm:$0xf]
  %v6705 = vld [vmem:[%s5 + $0x1a0] sm:$0xf]
  %v6706 = vld [vmem:[%s5 + $0x1bc] sm:$0xf]
  %v6707 = vld [vmem:[%s7 + $0x19] ss:$0 sm:$0xff]
  %v6724 = vunpack.c.l.b16 %v6691
  %v6725 = vunpack.c.l.b16 %v6692
  %v6726 = vunpack.c.l.b16 %v6693
  %v6727 = vunpack.c.l.b16 %v6694
  %v6728 = vunpack.c.l.b16 %v6695
  %v6729 = vunpack.c.l.b16 %v6696
  %v6730 = vunpack.c.l.b16 %v6697
  %v6731 = vunpack.c.l.b16 %v6698
  %v6732 = vunpack.c.l.b16 %v6699
  %v6733 = vunpack.c.l.b16 %v6700
  %v6734 = vunpack.c.l.b16 %v6701
  %v6735 = vunpack.c.l.b16 %v6702
  %v6736 = vunpack.c.l.b16 %v6703
  %v6737 = vunpack.c.l.b16 %v6704
  %v6738 = vunpack.c.l.b16 %v6705
  %v6739 = vunpack.c.l.b16 %v6706
  %v6740 = vpack.c.b16 %v6725, %v6724
  %v6741 = vpack.c.b16 %v6727, %v6726
  %v6742 = vpack.c.b16 %v6729, %v6728
  %v6743 = vpack.c.b16 %v6731, %v6730
  %v6744 = vpack.c.b16 %v6733, %v6732
  %v6745 = vpack.c.b16 %v6735, %v6734
  %v6746 = vpack.c.b16 %v6737, %v6736
  %v6747 = vpack.c.b16 %v6739, %v6738
  %6756 = vmatprep.subr.bf16.mxu0 0
  %6757 = vmatpush1.bf16.msra.mxu0 %v6740
  %6758 = vmatprep.subr.bf16.mxu0 0
  %6759 = vmatpush1.bf16.msra.mxu0 %v6741
  %6760 = vmatprep.subr.bf16.mxu0 0
  %6761 = vmatpush1.bf16.msra.mxu0 %v6742
  %6762 = vmatprep.subr.bf16.mxu0 0
  %6763 = vmatpush1.bf16.msra.mxu0 %v6743
  %6764 = vmatprep.subr.bf16.mxu0 0
  %6765 = vmatpush1.bf16.msra.mxu0 %v6744
  %6766 = vmatprep.subr.bf16.mxu0 0
  %6767 = vmatpush1.bf16.msra.mxu0 %v6745
  %6768 = vmatprep.subr.bf16.mxu0 0
  %6769 = vmatpush1.bf16.msra.mxu0 %v6746
  %6770 = vmatprep.subr.bf16.mxu0 0
  %6771 = vmatpush1.bf16.msra.mxu0 %v6747
  %6772 = vmatprep.subr.bf16.mxu0 0
  %6773 = vmatpush1.bf16.msra.mxu0 0
  %6774 = vmatprep.subr.bf16.mxu0 0
  %6775 = vmatpush1.bf16.msra.mxu0 0
  %6776 = vmatprep.subr.bf16.mxu0 0
  %6777 = vmatpush1.bf16.msra.mxu0 0
  %6778 = vmatprep.subr.bf16.mxu0 0
  %6779 = vmatpush1.bf16.msra.mxu0 0
  %6780 = vmatprep.subr.bf16.mxu0 0
  %6781 = vmatpush1.bf16.msra.mxu0 0
  %6782 = vmatprep.subr.bf16.mxu0 0
  %6783 = vmatpush1.bf16.msra.mxu0 0
  %6784 = vmatprep.subr.bf16.mxu0 0
  %6785 = vmatpush1.bf16.msra.mxu0 0
  %6786 = vmatprep.subr.bf16.mxu0 0
  %6787 = vmatpush1.bf16.msra.mxu0 0
  %6788 = vmatprep.mubr.bf16.mxu0 0
  %6789 = vmatmul.mubr.bf16.gmra.mrb[0].mxu0 %v6690
  %v6790 = vpop.f32.mrb[0].mxu0
  %v6791 = vadd.f32 %v6707, %v6790
  %v6792 = vpop.f32.mrb[0].mxu0
  %v6793 = vpop.f32.mrb[0].mxu0
  %v6794 = vpop.f32.mrb[0].mxu0
  %6795 = vdwg.mxu0
  %6796 = vst [vmem:[%s9] sm:$0xff] %v6791
  // Predicated region
  $region38: #{testra_forward.1} parent=0 // pred_check
    _
  $region39: #{testra_forward.1} parent=0 // pred_check_branch
    %6798 = sbr.rel (0) target = $region41
  $region40: #{testra_forward.1} parent=0 // pred_region
    _
  $region41: #{testra_forward.1} parent=0 // pred_fallthru
    _
  // Predicated region
  $region42: #{testra_forward.1} parent=0 // pred_check
    _
  $region43: #{testra_forward.1} parent=0 // pred_check_branch
    %6800 = sbr.rel (0) target = $region45
  $region44: #{testra_forward.1} parent=0 // pred_region
    _
  $region45: #{testra_forward.1} parent=0 // pred_fallthru
    _

</llo_original>
